<compile_context>
chip_gen: v6e
topology: v6e:2x2x1
jax: 0.10.0
libtpu: 0.0.40
codegen_flags: <defaults>
</compile_context>

<pallas_src>
import functools
import math

import jax
import jax.numpy as jnp
from jax import lax
from jax.experimental import pallas as pl
from jax.experimental.pallas import tpu as pltpu

# ----------------------------- tiny BERT config -----------------------------
VOCAB = 64
TYPE_VOCAB = 2
MAX_POS = 16
HIDDEN = 32
N_LAYERS = 2
N_HEADS = 4
HEAD_DIM = HIDDEN // N_HEADS
INTERMEDIATE = 4 * HIDDEN
LN_EPS = 1e-12            # BERT LayerNorm eps
MASK_NEG = -1e9           # additive attention mask value for padded positions
_INV_SQRT_DH = 1.0 / math.sqrt(HEAD_DIM)
_INV_SQRT2 = 1.0 / math.sqrt(2.0)

# MXU operand dtype.  f32 at these toy sizes for exact numerics; set to jnp.bfloat16 for
# production HIDDEN/INTERMEDIATE on v6e/v7x (accumulation stays f32 via
# preferred_element_type; all elementwise math below is already f32, which is what v5e
# wants anyway since it has no bf16 VPU/EUP).
MXU_DTYPE = jnp.float32

# Fused embedding table layout: [word | position | type] rows, zero-padded so the
# in-kernel multi-hot is a single lane-dense (B*S, 128) operand for one MXU matmul.
EMB_ROWS = VOCAB + MAX_POS + TYPE_VOCAB          # 82
EMB_PAD = 128

# Packed small-vector slab: every bias / LayerNorm param occupies one 128-lane row.
VEC_WIDTH = 128
_ROW_EMB_G, _ROW_EMB_B, _ROW_POOL_B = 0, 1, 2
_LAYER_ROW0, _ROWS_PER_LAYER = 3, 8
_R_BQKV, _R_BO, _R_LN1G, _R_LN1B, _R_BI, _R_BF, _R_LN2G, _R_LN2B = range(8)


# ----------------------------- in-kernel helpers -----------------------------
def _layernorm(x, g, b):
    """f32 LayerNorm over the last axis (BERT eps)."""
    mean = jnp.mean(x, axis=-1, keepdims=True)
    var = jnp.mean((x - mean) ** 2, axis=-1, keepdims=True)
    return (x - mean) * lax.rsqrt(var + LN_EPS) * g + b


def _gelu(x):
    """Exact (erf) GELU, matching HF 'gelu' (tanh-approx would change numerics)."""
    return 0.5 * x * (1.0 + lax.erf(x * _INV_SQRT2))


def _mm(a, b):
    """MXU matmul with f32 accumulation; operands cast to MXU_DTYPE."""
    return jnp.dot(a.astype(MXU_DTYPE), b.astype(MXU_DTYPE),
                   preferred_element_type=jnp.float32)


# ----------------------------- the single fused kernel -----------------------
def _fused_bert_pooler_kernel(
    ids_ref,       # (B*S, 3) int32: [word_id, VOCAB+pos, VOCAB+MAX_POS+type]
    mask_ref,      # (B, S) f32 additive mask (0 keep / MASK_NEG pad)
    emb_ref,       # (EMB_PAD, HIDDEN) fused word|pos|type embedding table
    wqkv_ref,      # (L, HIDDEN, 3*HIDDEN)  (Q columns pre-scaled by 1/sqrt(head_dim))
    wo_ref,        # (L, HIDDEN, HIDDEN)
    wi_ref,        # (L, HIDDEN, INTERMEDIATE)
    wf_ref,        # (L, INTERMEDIATE, HIDDEN)
    pw_ref,        # (HIDDEN, HIDDEN) pooler dense weight
    vecs_ref,      # (VEC_ROWS, 128) packed biases / LN params (one row each)
    out_ref,       # (B, HIDDEN) pooled output
    *, batch, seq,
):
    n = batch * seq

    def vec(row, width=HIDDEN):
        return vecs_ref[row:row + 1, 0:width]          # static slice: (1, width)

    # ---- fused embedding lookup: word + pos + type as ONE multi-hot MXU matmul ----
    lane = lax.broadcasted_iota(jnp.int32, (n, EMB_PAD), 1)
    mh = (jnp.where(lane == ids_ref[:, 0:1], 1.0, 0.0)
          + jnp.where(lane == ids_ref[:, 1:2], 1.0, 0.0)
          + jnp.where(lane == ids_ref[:, 2:3], 1.0, 0.0))        # (n, 128) multi-hot
    x = _mm(mh, emb_ref[...])                                    # (n, HIDDEN)
    x = _layernorm(x, vec(_ROW_EMB_G), vec(_ROW_EMB_B))

    for l in range(N_LAYERS):                   # static unroll, weights stay in VMEM
        base = _LAYER_ROW0 + l * _ROWS_PER_LAYER

        # ---- fused QKV projection (one wide MXU pass; softmax scale already in Q weights) ----
        qkv = _mm(x, wqkv_ref[l]) + vec(base + _R_BQKV, 3 * HIDDEN)
        q = qkv[:, 0:HIDDEN]
        k = qkv[:, HIDDEN:2 * HIDDEN]
        v = qkv[:, 2 * HIDDEN:3 * HIDDEN]

        # ---- attention kept entirely in registers: no scratch, no masked column stores ----
        ctx_rows = []
        for b in range(batch):
            r0 = b * seq
            qb = q[r0:r0 + seq, :]
            kb = k[r0:r0 + seq, :]
            vb = v[r0:r0 + seq, :]
            # mask broadcast hoisted out of the head loop (JAX does not CSE broadcasts)
            mb = jnp.broadcast_to(mask_ref[b:b + 1, :], (seq, seq))
            heads = []
            for h in range(N_HEADS):
                c0 = h * HEAD_DIM
                # scores = qh @ kh^T without an explicit transpose (contract last dims)
                s = lax.dot_general(qb[:, c0:c0 + HEAD_DIM].astype(MXU_DTYPE),
                                    kb[:, c0:c0 + HEAD_DIM].astype(MXU_DTYPE),
                                    (((1,), (1,)), ((), ())),
                                    preferred_element_type=jnp.float32)
                s = s + mb
                s = s - jnp.max(s, axis=-1, keepdims=True)
                p = jnp.exp(s)
                # softmax divide -> EUP approx reciprocal (frees the VALU slot)
                p = p * pl.reciprocal(jnp.sum(p, axis=-1, keepdims=True), approx=True)
                heads.append(jnp.dot(p.astype(MXU_DTYPE),
                                     vb[:, c0:c0 + HEAD_DIM].astype(MXU_DTYPE),
                                     preferred_element_type=jnp.float32))
            ctx_rows.append(jnp.concatenate(heads, axis=1))      # (seq, HIDDEN) lane-dense
        ctx = jnp.concatenate(ctx_rows, axis=0)                  # (n, HIDDEN) register value

        # ---- attention output projection + residual + LN1 ----
        attn = _mm(ctx, wo_ref[l]) + vec(base + _R_BO)
        x = _layernorm(x + attn, vec(base + _R_LN1G), vec(base + _R_LN1B))

        # ---- feed-forward (erf GELU) + residual + LN2 ----
        inter = _gelu(_mm(x, wi_ref[l]) + vec(base + _R_BI, INTERMEDIATE))   # (n, 128) lane-dense
        ffn = _mm(inter, wf_ref[l]) + vec(base + _R_BF)
        x = _layernorm(x + ffn, vec(base + _R_LN2G), vec(base + _R_LN2B))

    # ---- pooler: first token of every sequence via a one-hot selection matmul (MXU) ----
    col = lax.broadcasted_iota(jnp.int32, (batch, n), 1)
    row = lax.broadcasted_iota(jnp.int32, (batch, n), 0)
    sel = jnp.where(col == row * seq, 1.0, 0.0)                  # (B, B*S), one 1 per row
    first = jnp.dot(sel.astype(MXU_DTYPE), x.astype(MXU_DTYPE),
                    preferred_element_type=jnp.float32)          # (B, HIDDEN)
    out_ref[...] = jnp.tanh(_mm(first, pw_ref[...]) + vec(_ROW_POOL_B)).astype(out_ref.dtype)


# ----------------------------- parameter init -------------------------------
def init_params(key):
    def nrm(key, shape):
        return 0.02 * jax.random.normal(key, shape, jnp.float32)

    keys = iter(jax.random.split(key, 8 + N_LAYERS * 8))
    params = {
        "word_emb": nrm(next(keys), (VOCAB, HIDDEN)),
        "pos_emb": nrm(next(keys), (MAX_POS, HIDDEN)),
        "type_emb": nrm(next(keys), (TYPE_VOCAB, HIDDEN)),
        "emb_ln_g": jnp.ones((HIDDEN,), jnp.float32),
        "emb_ln_b": jnp.zeros((HIDDEN,), jnp.float32),
        "pool_w": nrm(next(keys), (HIDDEN, HIDDEN)),
        "pool_b": jnp.zeros((HIDDEN,), jnp.float32),
        "layers": [],
    }
    for _ in range(N_LAYERS):
        layer = {
            "wq": nrm(next(keys), (HIDDEN, HIDDEN)), "bq": jnp.zeros((HIDDEN,), jnp.float32),
            "wk": nrm(next(keys), (HIDDEN, HIDDEN)), "bk": jnp.zeros((HIDDEN,), jnp.float32),
            "wv": nrm(next(keys), (HIDDEN, HIDDEN)), "bv": jnp.zeros((HIDDEN,), jnp.float32),
            "wo": nrm(next(keys), (HIDDEN, HIDDEN)), "bo": jnp.zeros((HIDDEN,), jnp.float32),
            "ln1_g": jnp.ones((HIDDEN,), jnp.float32), "ln1_b": jnp.zeros((HIDDEN,), jnp.float32),
            "wi": nrm(next(keys), (HIDDEN, INTERMEDIATE)), "bi": jnp.zeros((INTERMEDIATE,), jnp.float32),
            "wf": nrm(next(keys), (INTERMEDIATE, HIDDEN)), "bf": jnp.zeros((HIDDEN,), jnp.float32),
            "ln2_g": jnp.ones((HIDDEN,), jnp.float32), "ln2_b": jnp.zeros((HIDDEN,), jnp.float32),
        }
        params["layers"].append(layer)
    return params


def _pack_params(params):
    """Fuse Q/K/V (with softmax scale folded into Q), stack per-layer weights along a
    leading layer axis, fuse the three embedding tables, and pack every small vector
    (biases, LN params, pooler bias) into one lane-dense (rows, 128) f32 slab."""
    layers = params["layers"]

    emb_table = jnp.concatenate(
        [params["word_emb"], params["pos_emb"], params["type_emb"]], axis=0)
    emb_table = jnp.pad(emb_table, ((0, EMB_PAD - EMB_ROWS), (0, 0)))

    def pad_row(v):
        v = v.astype(jnp.float32)
        return jnp.pad(v, (0, VEC_WIDTH - v.shape[0]))

    rows = [pad_row(params["emb_ln_g"]), pad_row(params["emb_ln_b"]),
            pad_row(params["pool_b"])]
    wqkv, wo, wi, wf = [], [], [], []
    for L in layers:
        wqkv.append(jnp.concatenate([L["wq"] * _INV_SQRT_DH, L["wk"], L["wv"]], axis=1))
        wo.append(L["wo"]); wi.append(L["wi"]); wf.append(L["wf"])
        rows += [pad_row(jnp.concatenate([L["bq"] * _INV_SQRT_DH, L["bk"], L["bv"]])),
                 pad_row(L["bo"]), pad_row(L["ln1_g"]), pad_row(L["ln1_b"]),
                 pad_row(L["bi"]), pad_row(L["bf"]), pad_row(L["ln2_g"]), pad_row(L["ln2_b"])]
    rows += [jnp.zeros((VEC_WIDTH,), jnp.float32)] * ((-len(rows)) % 8)   # sublane-pad

    return dict(
        emb_table=emb_table,
        wqkv=jnp.stack(wqkv), wo=jnp.stack(wo), wi=jnp.stack(wi), wf=jnp.stack(wf),
        pw=params["pool_w"], vecs=jnp.stack(rows))


# ----------------------------- model forward --------------------------------
def model_with_pooler(params, input_ids, attention_mask, token_type_ids=None):
    if token_type_ids is None:
        token_type_ids = jnp.zeros_like(input_ids)
    B, S = input_ids.shape

    # Only id packing + additive-mask prep stay in plain JAX; the embedding gathers are
    # fused into the kernel as a single multi-hot MXU matmul.
    pos_ids = jnp.tile(jnp.arange(S, dtype=jnp.int32), B)
    ids = jnp.stack([input_ids.reshape(-1).astype(jnp.int32),
                     pos_ids + VOCAB,
                     token_type_ids.reshape(-1).astype(jnp.int32) + VOCAB + MAX_POS],
                    axis=1)                                              # (B*S, 3)
    add_mask = (1.0 - attention_mask.astype(jnp.float32)) * MASK_NEG     # (B, S)

    p = _pack_params(params)
    kernel = functools.partial(_fused_bert_pooler_kernel, batch=B, seq=S)
    vmem = pl.BlockSpec(memory_space=pltpu.MemorySpace.VMEM)   # whole array VMEM-resident

    # Single fused launch: no grid (nothing left to tile at these shapes), no scratch.
    # At real BERT sizes add a grid axis over layers ("arbitrary", streamed weights sized
    # for v7x's 64 MiB VMEM) and over batch ("parallel" for v7x's second TensorCore).
    pooled = pl.pallas_call(
        kernel,
        out_shape=jax.ShapeDtypeStruct((B, HIDDEN), jnp.float32),
        in_specs=[vmem] * 9,
        out_specs=vmem,
    )(ids, add_mask, p["emb_table"], p["wqkv"], p["wo"], p["wi"], p["wf"],
      p["pw"], p["vecs"])
    return pooled                                                         # [B, HIDDEN]


# ----------------------------- pure-JAX reference ----------------------------
def _reference_forward(params, input_ids, attention_mask, token_type_ids):
    B, S = input_ids.shape
    emb = (params["word_emb"][input_ids]
           + params["pos_emb"][jnp.arange(S)][None, :, :]
           + params["type_emb"][token_type_ids])

    def ln(x, g, b):
        m = x.mean(-1, keepdims=True)
        v = ((x - m) ** 2).mean(-1, keepdims=True)
        return (x - m) * jax.lax.rsqrt(v + LN_EPS) * g + b

    x = ln(emb, params["emb_ln_g"], params["emb_ln_b"])
    add_mask = (1.0 - attention_mask.astype(jnp.float32)) * MASK_NEG
    for L in params["layers"]:
        q = x @ L["wq"] + L["bq"]
        k = x @ L["wk"] + L["bk"]
        v = x @ L["wv"] + L["bv"]

        def split(t):
            return t.reshape(B, S, N_HEADS, HEAD_DIM).transpose(0, 2, 1, 3)

        qh, kh, vh = split(q), split(k), split(v)
        s = jnp.einsum("bhqd,bhkd->bhqk", qh, kh) / math.sqrt(HEAD_DIM)
        s = s + add_mask[:, None, None, :]
        p = jax.nn.softmax(s, axis=-1)
        ctx = jnp.einsum("bhqk,bhkd->bhqd", p, vh).transpose(0, 2, 1, 3).reshape(B, S, HIDDEN)
        x = ln(x + ctx @ L["wo"] + L["bo"], L["ln1_g"], L["ln1_b"])
        inter = x @ L["wi"] + L["bi"]
        inter = 0.5 * inter * (1.0 + jax.lax.erf(inter / math.sqrt(2.0)))
        x = ln(x + inter @ L["wf"] + L["bf"], L["ln2_g"], L["ln2_b"])
    return jnp.tanh(x[:, 0, :] @ params["pool_w"] + params["pool_b"])


# --------------------------------- main --------------------------------------
if __name__ == "__main__":
    B, S = 2, 8
    key = jax.random.PRNGKey(0)
    k_param, k_ids, k_type = jax.random.split(key, 3)

    params = init_params(k_param)
    input_ids = jax.random.randint(k_ids, (B, S), 0, VOCAB, dtype=jnp.int32)
    token_type_ids = jax.random.randint(k_type, (B, S), 0, TYPE_VOCAB, dtype=jnp.int32)
    # pad out the last two tokens of the second example to exercise the mask
    attention_mask = jnp.ones((B, S), jnp.int32).at[1, S - 2:].set(0)

    fwd = jax.jit(model_with_pooler)
    pooled = jax.block_until_ready(fwd(params, input_ids, attention_mask, token_type_ids))

    assert pooled.shape == (B, HIDDEN) and pooled.dtype == jnp.float32
    assert bool(jnp.all(jnp.isfinite(pooled)))

    ref = _reference_forward(params, input_ids, attention_mask, token_type_ids)
    assert bool(jnp.allclose(pooled, ref, atol=2e-2, rtol=2e-2))
    print("KERNEL_OK")
</pallas_src>

<mosaic_0001>
module attributes {stable_mosaic.version = 11 : i64} {
  func.func @_fused_bert_pooler_kernel(%arg0: memref<16x3xi32, #tpu.memory_space<vmem>>, %arg1: memref<2x8xf32, #tpu.memory_space<vmem>>, %arg2: memref<128x32xf32, #tpu.memory_space<vmem>>, %arg3: memref<2x32x96xf32, #tpu.memory_space<vmem>>, %arg4: memref<2x32x32xf32, #tpu.memory_space<vmem>>, %arg5: memref<2x32x128xf32, #tpu.memory_space<vmem>>, %arg6: memref<2x128x32xf32, #tpu.memory_space<vmem>>, %arg7: memref<32x32xf32, #tpu.memory_space<vmem>>, %arg8: memref<24x128xf32, #tpu.memory_space<vmem>>, %arg9: memref<2x32xf32, #tpu.memory_space<vmem>>) attributes {dimension_semantics = [], scalar_prefetch = 0 : i64, scratch_operands = 0 : i64, tpu.core_type = #tpu.core_type<tc>} {
    %0 = tpu.iota {dimensions = array<i32: 1>} : vector<16x128xi32>
    %c0 = arith.constant 0 : index
    %c0_0 = arith.constant 0 : index
    %1 = vector.load %arg0[%c0, %c0_0] : memref<16x3xi32, #tpu.memory_space<vmem>>, vector<16x1xi32>
    %2 = vector.broadcast %1 : vector<16x1xi32> to vector<16x128xi32>
    %3 = arith.cmpi eq, %0, %2 : vector<16x128xi32>
    %cst = arith.constant 1.000000e+00 : f32
    %cst_1 = arith.constant 0.000000e+00 : f32
    %4 = vector.broadcast %cst : f32 to vector<16x128xf32>
    %5 = vector.broadcast %cst_1 : f32 to vector<16x128xf32>
    %6 = arith.select %3, %4, %5 : vector<16x128xi1>, vector<16x128xf32>
    %c0_2 = arith.constant 0 : index
    %c1 = arith.constant 1 : index
    %7 = vector.load %arg0[%c0_2, %c1] : memref<16x3xi32, #tpu.memory_space<vmem>>, vector<16x1xi32>
    %8 = vector.broadcast %7 : vector<16x1xi32> to vector<16x128xi32>
    %9 = arith.cmpi eq, %0, %8 : vector<16x128xi32>
    %cst_3 = arith.constant 1.000000e+00 : f32
    %cst_4 = arith.constant 0.000000e+00 : f32
    %10 = vector.broadcast %cst_3 : f32 to vector<16x128xf32>
    %11 = vector.broadcast %cst_4 : f32 to vector<16x128xf32>
    %12 = arith.select %9, %10, %11 : vector<16x128xi1>, vector<16x128xf32>
    %13 = arith.addf %6, %12 : vector<16x128xf32>
    %c0_5 = arith.constant 0 : index
    %c2 = arith.constant 2 : index
    %14 = vector.load %arg0[%c0_5, %c2] : memref<16x3xi32, #tpu.memory_space<vmem>>, vector<16x1xi32>
    %15 = vector.broadcast %14 : vector<16x1xi32> to vector<16x128xi32>
    %16 = arith.cmpi eq, %0, %15 : vector<16x128xi32>
    %cst_6 = arith.constant 1.000000e+00 : f32
    %cst_7 = arith.constant 0.000000e+00 : f32
    %17 = vector.broadcast %cst_6 : f32 to vector<16x128xf32>
    %18 = vector.broadcast %cst_7 : f32 to vector<16x128xf32>
    %19 = arith.select %16, %17, %18 : vector<16x128xi1>, vector<16x128xf32>
    %20 = arith.addf %13, %19 : vector<16x128xf32>
    %c0_8 = arith.constant 0 : index
    %c0_9 = arith.constant 0 : index
    %21 = vector.load %arg2[%c0_8, %c0_9] : memref<128x32xf32, #tpu.memory_space<vmem>>, vector<128x32xf32>
    %cst_10 = arith.constant dense<0.000000e+00> : vector<16x32xf32>
    %22 = tpu.matmul %20, %21, %cst_10 {dimension_numbers = #tpu.dot_dimension_numbers<[1], [0], [0], [1], [0, 0, 1, 1], [], []>} : vector<16x128xf32>, vector<128x32xf32>, vector<16x32xf32> -> vector<16x32xf32>
    %c0_11 = arith.constant 0 : index
    %c0_12 = arith.constant 0 : index
    %23 = vector.load %arg8[%c0_11, %c0_12] : memref<24x128xf32, #tpu.memory_space<vmem>>, vector<1x32xf32>
    %c1_13 = arith.constant 1 : index
    %c0_14 = arith.constant 0 : index
    %24 = vector.load %arg8[%c1_13, %c0_14] : memref<24x128xf32, #tpu.memory_space<vmem>>, vector<1x32xf32>
    %cst_15 = arith.constant dense<0.000000e+00> : vector<16xf32>
    %25 = vector.multi_reduction <add>, %22, %cst_15 [1] : vector<16x32xf32> to vector<16xf32>
    %26 = vector.shape_cast %25 : vector<16xf32> to vector<16x1xf32>
    %cst_16 = arith.constant 3.200000e+01 : f32
    %27 = vector.broadcast %cst_16 : f32 to vector<16x1xf32>
    %28 = arith.divf %26, %27 : vector<16x1xf32>
    %29 = vector.broadcast %28 : vector<16x1xf32> to vector<16x32xf32>
    %30 = arith.subf %22, %29 : vector<16x32xf32>
    %31 = arith.mulf %30, %30 : vector<16x32xf32>
    %cst_17 = arith.constant dense<0.000000e+00> : vector<16xf32>
    %32 = vector.multi_reduction <add>, %31, %cst_17 [1] : vector<16x32xf32> to vector<16xf32>
    %33 = vector.shape_cast %32 : vector<16xf32> to vector<16x1xf32>
    %cst_18 = arith.constant 3.200000e+01 : f32
    %34 = vector.broadcast %cst_18 : f32 to vector<16x1xf32>
    %35 = arith.divf %33, %34 : vector<16x1xf32>
    %36 = vector.broadcast %28 : vector<16x1xf32> to vector<16x32xf32>
    %37 = arith.subf %22, %36 : vector<16x32xf32>
    %cst_19 = arith.constant 9.99999996E-13 : f32
    %38 = vector.broadcast %cst_19 : f32 to vector<16x1xf32>
    %39 = arith.addf %35, %38 : vector<16x1xf32>
    %40 = math.rsqrt %39 : vector<16x1xf32>
    %41 = vector.broadcast %40 : vector<16x1xf32> to vector<16x32xf32>
    %42 = arith.mulf %37, %41 : vector<16x32xf32>
    %43 = vector.broadcast %23 : vector<1x32xf32> to vector<16x32xf32>
    %44 = arith.mulf %42, %43 : vector<16x32xf32>
    %45 = vector.broadcast %24 : vector<1x32xf32> to vector<16x32xf32>
    %46 = arith.addf %44, %45 : vector<16x32xf32>
    %c0_20 = arith.constant 0 : index
    %c0_21 = arith.constant 0 : index
    %c0_22 = arith.constant 0 : index
    %47 = vector.load %arg3[%c0_20, %c0_21, %c0_22] : memref<2x32x96xf32, #tpu.memory_space<vmem>>, vector<1x32x96xf32>
    %48 = vector.shape_cast %47 : vector<1x32x96xf32> to vector<32x96xf32>
    %cst_23 = arith.constant dense<0.000000e+00> : vector<16x96xf32>
    %49 = tpu.matmul %46, %48, %cst_23 {dimension_numbers = #tpu.dot_dimension_numbers<[1], [0], [0], [1], [0, 0, 1, 1], [], []>} : vector<16x32xf32>, vector<32x96xf32>, vector<16x96xf32> -> vector<16x96xf32>
    %c3 = arith.constant 3 : index
    %c0_24 = arith.constant 0 : index
    %50 = vector.load %arg8[%c3, %c0_24] : memref<24x128xf32, #tpu.memory_space<vmem>>, vector<1x96xf32>
    %51 = vector.broadcast %50 : vector<1x96xf32> to vector<16x96xf32>
    %52 = arith.addf %49, %51 : vector<16x96xf32>
    %53 = vector.extract_strided_slice %52 {offsets = [0, 0], sizes = [16, 32], strides = [1, 1]} : vector<16x96xf32> to vector<16x32xf32>
    %54 = vector.extract_strided_slice %52 {offsets = [0, 32], sizes = [16, 32], strides = [1, 1]} : vector<16x96xf32> to vector<16x32xf32>
    %55 = vector.extract_strided_slice %52 {offsets = [0, 64], sizes = [16, 32], strides = [1, 1]} : vector<16x96xf32> to vector<16x32xf32>
    %56 = vector.extract_strided_slice %53 {offsets = [0, 0], sizes = [8, 32], strides = [1, 1]} : vector<16x32xf32> to vector<8x32xf32>
    %57 = vector.extract_strided_slice %54 {offsets = [0, 0], sizes = [8, 32], strides = [1, 1]} : vector<16x32xf32> to vector<8x32xf32>
    %58 = vector.extract_strided_slice %55 {offsets = [0, 0], sizes = [8, 32], strides = [1, 1]} : vector<16x32xf32> to vector<8x32xf32>
    %c0_25 = arith.constant 0 : index
    %c0_26 = arith.constant 0 : index
    %59 = vector.load %arg1[%c0_25, %c0_26] : memref<2x8xf32, #tpu.memory_space<vmem>>, vector<1x8xf32>
    %60 = vector.shape_cast %59 : vector<1x8xf32> to vector<1x8xf32>
    %61 = vector.broadcast %60 : vector<1x8xf32> to vector<8x8xf32>
    %62 = vector.extract_strided_slice %56 {offsets = [0, 0], sizes = [8, 8], strides = [1, 1]} : vector<8x32xf32> to vector<8x8xf32>
    %63 = vector.extract_strided_slice %57 {offsets = [0, 0], sizes = [8, 8], strides = [1, 1]} : vector<8x32xf32> to vector<8x8xf32>
    %cst_27 = arith.constant dense<0.000000e+00> : vector<8x8xf32>
    %64 = tpu.matmul %62, %63, %cst_27 {dimension_numbers = #tpu.dot_dimension_numbers<[1], [1], [0], [0], [0, 0, 1, 0], [], []>} : vector<8x8xf32>, vector<8x8xf32>, vector<8x8xf32> -> vector<8x8xf32>
    %65 = arith.addf %64, %61 : vector<8x8xf32>
    %cst_28 = arith.constant dense<0xFF800000> : vector<8xf32>
    %66 = vector.multi_reduction <maximumf>, %65, %cst_28 [1] : vector<8x8xf32> to vector<8xf32>
    %67 = vector.shape_cast %66 : vector<8xf32> to vector<8x1xf32>
    %68 = vector.broadcast %67 : vector<8x1xf32> to vector<8x8xf32>
    %69 = arith.subf %65, %68 : vector<8x8xf32>
    %70 = math.exp %69 : vector<8x8xf32>
    %cst_29 = arith.constant dense<0.000000e+00> : vector<8xf32>
    %71 = vector.multi_reduction <add>, %70, %cst_29 [1] : vector<8x8xf32> to vector<8xf32>
    %72 = vector.shape_cast %71 : vector<8xf32> to vector<8x1xf32>
    %73 = tpu.reciprocal %72 {approx = true} : vector<8x1xf32> -> vector<8x1xf32>
    %74 = vector.broadcast %73 : vector<8x1xf32> to vector<8x8xf32>
    %75 = arith.mulf %70, %74 : vector<8x8xf32>
    %76 = vector.extract_strided_slice %58 {offsets = [0, 0], sizes = [8, 8], strides = [1, 1]} : vector<8x32xf32> to vector<8x8xf32>
    %cst_30 = arith.constant dense<0.000000e+00> : vector<8x8xf32>
    %77 = tpu.matmul %75, %76, %cst_30 {dimension_numbers = #tpu.dot_dimension_numbers<[1], [0], [0], [1], [0, 0, 1, 1], [], []>} : vector<8x8xf32>, vector<8x8xf32>, vector<8x8xf32> -> vector<8x8xf32>
    %78 = vector.extract_strided_slice %56 {offsets = [0, 8], sizes = [8, 8], strides = [1, 1]} : vector<8x32xf32> to vector<8x8xf32>
    %79 = vector.extract_strided_slice %57 {offsets = [0, 8], sizes = [8, 8], strides = [1, 1]} : vector<8x32xf32> to vector<8x8xf32>
    %cst_31 = arith.constant dense<0.000000e+00> : vector<8x8xf32>
    %80 = tpu.matmul %78, %79, %cst_31 {dimension_numbers = #tpu.dot_dimension_numbers<[1], [1], [0], [0], [0, 0, 1, 0], [], []>} : vector<8x8xf32>, vector<8x8xf32>, vector<8x8xf32> -> vector<8x8xf32>
    %81 = arith.addf %80, %61 : vector<8x8xf32>
    %cst_32 = arith.constant dense<0xFF800000> : vector<8xf32>
    %82 = vector.multi_reduction <maximumf>, %81, %cst_32 [1] : vector<8x8xf32> to vector<8xf32>
    %83 = vector.shape_cast %82 : vector<8xf32> to vector<8x1xf32>
    %84 = vector.broadcast %83 : vector<8x1xf32> to vector<8x8xf32>
    %85 = arith.subf %81, %84 : vector<8x8xf32>
    %86 = math.exp %85 : vector<8x8xf32>
    %cst_33 = arith.constant dense<0.000000e+00> : vector<8xf32>
    %87 = vector.multi_reduction <add>, %86, %cst_33 [1] : vector<8x8xf32> to vector<8xf32>
    %88 = vector.shape_cast %87 : vector<8xf32> to vector<8x1xf32>
    %89 = tpu.reciprocal %88 {approx = true} : vector<8x1xf32> -> vector<8x1xf32>
    %90 = vector.broadcast %89 : vector<8x1xf32> to vector<8x8xf32>
    %91 = arith.mulf %86, %90 : vector<8x8xf32>
    %92 = vector.extract_strided_slice %58 {offsets = [0, 8], sizes = [8, 8], strides = [1, 1]} : vector<8x32xf32> to vector<8x8xf32>
    %cst_34 = arith.constant dense<0.000000e+00> : vector<8x8xf32>
    %93 = tpu.matmul %91, %92, %cst_34 {dimension_numbers = #tpu.dot_dimension_numbers<[1], [0], [0], [1], [0, 0, 1, 1], [], []>} : vector<8x8xf32>, vector<8x8xf32>, vector<8x8xf32> -> vector<8x8xf32>
    %94 = vector.extract_strided_slice %56 {offsets = [0, 16], sizes = [8, 8], strides = [1, 1]} : vector<8x32xf32> to vector<8x8xf32>
    %95 = vector.extract_strided_slice %57 {offsets = [0, 16], sizes = [8, 8], strides = [1, 1]} : vector<8x32xf32> to vector<8x8xf32>
    %cst_35 = arith.constant dense<0.000000e+00> : vector<8x8xf32>
    %96 = tpu.matmul %94, %95, %cst_35 {dimension_numbers = #tpu.dot_dimension_numbers<[1], [1], [0], [0], [0, 0, 1, 0], [], []>} : vector<8x8xf32>, vector<8x8xf32>, vector<8x8xf32> -> vector<8x8xf32>
    %97 = arith.addf %96, %61 : vector<8x8xf32>
    %cst_36 = arith.constant dense<0xFF800000> : vector<8xf32>
    %98 = vector.multi_reduction <maximumf>, %97, %cst_36 [1] : vector<8x8xf32> to vector<8xf32>
    %99 = vector.shape_cast %98 : vector<8xf32> to vector<8x1xf32>
    %100 = vector.broadcast %99 : vector<8x1xf32> to vector<8x8xf32>
    %101 = arith.subf %97, %100 : vector<8x8xf32>
    %102 = math.exp %101 : vector<8x8xf32>
    %cst_37 = arith.constant dense<0.000000e+00> : vector<8xf32>
    %103 = vector.multi_reduction <add>, %102, %cst_37 [1] : vector<8x8xf32> to vector<8xf32>
    %104 = vector.shape_cast %103 : vector<8xf32> to vector<8x1xf32>
    %105 = tpu.reciprocal %104 {approx = true} : vector<8x1xf32> -> vector<8x1xf32>
    %106 = vector.broadcast %105 : vector<8x1xf32> to vector<8x8xf32>
    %107 = arith.mulf %102, %106 : vector<8x8xf32>
    %108 = vector.extract_strided_slice %58 {offsets = [0, 16], sizes = [8, 8], strides = [1, 1]} : vector<8x32xf32> to vector<8x8xf32>
    %cst_38 = arith.constant dense<0.000000e+00> : vector<8x8xf32>
    %109 = tpu.matmul %107, %108, %cst_38 {dimension_numbers = #tpu.dot_dimension_numbers<[1], [0], [0], [1], [0, 0, 1, 1], [], []>} : vector<8x8xf32>, vector<8x8xf32>, vector<8x8xf32> -> vector<8x8xf32>
    %110 = vector.extract_strided_slice %56 {offsets = [0, 24], sizes = [8, 8], strides = [1, 1]} : vector<8x32xf32> to vector<8x8xf32>
    %111 = vector.extract_strided_slice %57 {offsets = [0, 24], sizes = [8, 8], strides = [1, 1]} : vector<8x32xf32> to vector<8x8xf32>
    %cst_39 = arith.constant dense<0.000000e+00> : vector<8x8xf32>
    %112 = tpu.matmul %110, %111, %cst_39 {dimension_numbers = #tpu.dot_dimension_numbers<[1], [1], [0], [0], [0, 0, 1, 0], [], []>} : vector<8x8xf32>, vector<8x8xf32>, vector<8x8xf32> -> vector<8x8xf32>
    %113 = arith.addf %112, %61 : vector<8x8xf32>
    %cst_40 = arith.constant dense<0xFF800000> : vector<8xf32>
    %114 = vector.multi_reduction <maximumf>, %113, %cst_40 [1] : vector<8x8xf32> to vector<8xf32>
    %115 = vector.shape_cast %114 : vector<8xf32> to vector<8x1xf32>
    %116 = vector.broadcast %115 : vector<8x1xf32> to vector<8x8xf32>
    %117 = arith.subf %113, %116 : vector<8x8xf32>
    %118 = math.exp %117 : vector<8x8xf32>
    %cst_41 = arith.constant dense<0.000000e+00> : vector<8xf32>
    %119 = vector.multi_reduction <add>, %118, %cst_41 [1] : vector<8x8xf32> to vector<8xf32>
    %120 = vector.shape_cast %119 : vector<8xf32> to vector<8x1xf32>
    %121 = tpu.reciprocal %120 {approx = true} : vector<8x1xf32> -> vector<8x1xf32>
    %122 = vector.broadcast %121 : vector<8x1xf32> to vector<8x8xf32>
    %123 = arith.mulf %118, %122 : vector<8x8xf32>
    %124 = vector.extract_strided_slice %58 {offsets = [0, 24], sizes = [8, 8], strides = [1, 1]} : vector<8x32xf32> to vector<8x8xf32>
    %cst_42 = arith.constant dense<0.000000e+00> : vector<8x8xf32>
    %125 = tpu.matmul %123, %124, %cst_42 {dimension_numbers = #tpu.dot_dimension_numbers<[1], [0], [0], [1], [0, 0, 1, 1], [], []>} : vector<8x8xf32>, vector<8x8xf32>, vector<8x8xf32> -> vector<8x8xf32>
    %126 = tpu.concatenate %77, %93, %109, %125 in 1 : vector<8x8xf32>, vector<8x8xf32>, vector<8x8xf32>, vector<8x8xf32> -> vector<8x32xf32>
    %127 = vector.extract_strided_slice %53 {offsets = [8, 0], sizes = [8, 32], strides = [1, 1]} : vector<16x32xf32> to vector<8x32xf32>
    %128 = vector.extract_strided_slice %54 {offsets = [8, 0], sizes = [8, 32], strides = [1, 1]} : vector<16x32xf32> to vector<8x32xf32>
    %129 = vector.extract_strided_slice %55 {offsets = [8, 0], sizes = [8, 32], strides = [1, 1]} : vector<16x32xf32> to vector<8x32xf32>
    %c1_43 = arith.constant 1 : index
    %c0_44 = arith.constant 0 : index
    %130 = vector.load %arg1[%c1_43, %c0_44] : memref<2x8xf32, #tpu.memory_space<vmem>>, vector<1x8xf32>
    %131 = vector.shape_cast %130 : vector<1x8xf32> to vector<1x8xf32>
    %132 = vector.broadcast %131 : vector<1x8xf32> to vector<8x8xf32>
    %133 = vector.extract_strided_slice %127 {offsets = [0, 0], sizes = [8, 8], strides = [1, 1]} : vector<8x32xf32> to vector<8x8xf32>
    %134 = vector.extract_strided_slice %128 {offsets = [0, 0], sizes = [8, 8], strides = [1, 1]} : vector<8x32xf32> to vector<8x8xf32>
    %cst_45 = arith.constant dense<0.000000e+00> : vector<8x8xf32>
    %135 = tpu.matmul %133, %134, %cst_45 {dimension_numbers = #tpu.dot_dimension_numbers<[1], [1], [0], [0], [0, 0, 1, 0], [], []>} : vector<8x8xf32>, vector<8x8xf32>, vector<8x8xf32> -> vector<8x8xf32>
    %136 = arith.addf %135, %132 : vector<8x8xf32>
    %cst_46 = arith.constant dense<0xFF800000> : vector<8xf32>
    %137 = vector.multi_reduction <maximumf>, %136, %cst_46 [1] : vector<8x8xf32> to vector<8xf32>
    %138 = vector.shape_cast %137 : vector<8xf32> to vector<8x1xf32>
    %139 = vector.broadcast %138 : vector<8x1xf32> to vector<8x8xf32>
    %140 = arith.subf %136, %139 : vector<8x8xf32>
    %141 = math.exp %140 : vector<8x8xf32>
    %cst_47 = arith.constant dense<0.000000e+00> : vector<8xf32>
    %142 = vector.multi_reduction <add>, %141, %cst_47 [1] : vector<8x8xf32> to vector<8xf32>
    %143 = vector.shape_cast %142 : vector<8xf32> to vector<8x1xf32>
    %144 = tpu.reciprocal %143 {approx = true} : vector<8x1xf32> -> vector<8x1xf32>
    %145 = vector.broadcast %144 : vector<8x1xf32> to vector<8x8xf32>
    %146 = arith.mulf %141, %145 : vector<8x8xf32>
    %147 = vector.extract_strided_slice %129 {offsets = [0, 0], sizes = [8, 8], strides = [1, 1]} : vector<8x32xf32> to vector<8x8xf32>
    %cst_48 = arith.constant dense<0.000000e+00> : vector<8x8xf32>
    %148 = tpu.matmul %146, %147, %cst_48 {dimension_numbers = #tpu.dot_dimension_numbers<[1], [0], [0], [1], [0, 0, 1, 1], [], []>} : vector<8x8xf32>, vector<8x8xf32>, vector<8x8xf32> -> vector<8x8xf32>
    %149 = vector.extract_strided_slice %127 {offsets = [0, 8], sizes = [8, 8], strides = [1, 1]} : vector<8x32xf32> to vector<8x8xf32>
    %150 = vector.extract_strided_slice %128 {offsets = [0, 8], sizes = [8, 8], strides = [1, 1]} : vector<8x32xf32> to vector<8x8xf32>
    %cst_49 = arith.constant dense<0.000000e+00> : vector<8x8xf32>
    %151 = tpu.matmul %149, %150, %cst_49 {dimension_numbers = #tpu.dot_dimension_numbers<[1], [1], [0], [0], [0, 0, 1, 0], [], []>} : vector<8x8xf32>, vector<8x8xf32>, vector<8x8xf32> -> vector<8x8xf32>
    %152 = arith.addf %151, %132 : vector<8x8xf32>
    %cst_50 = arith.constant dense<0xFF800000> : vector<8xf32>
    %153 = vector.multi_reduction <maximumf>, %152, %cst_50 [1] : vector<8x8xf32> to vector<8xf32>
    %154 = vector.shape_cast %153 : vector<8xf32> to vector<8x1xf32>
    %155 = vector.broadcast %154 : vector<8x1xf32> to vector<8x8xf32>
    %156 = arith.subf %152, %155 : vector<8x8xf32>
    %157 = math.exp %156 : vector<8x8xf32>
    %cst_51 = arith.constant dense<0.000000e+00> : vector<8xf32>
    %158 = vector.multi_reduction <add>, %157, %cst_51 [1] : vector<8x8xf32> to vector<8xf32>
    %159 = vector.shape_cast %158 : vector<8xf32> to vector<8x1xf32>
    %160 = tpu.reciprocal %159 {approx = true} : vector<8x1xf32> -> vector<8x1xf32>
    %161 = vector.broadcast %160 : vector<8x1xf32> to vector<8x8xf32>
    %162 = arith.mulf %157, %161 : vector<8x8xf32>
    %163 = vector.extract_strided_slice %129 {offsets = [0, 8], sizes = [8, 8], strides = [1, 1]} : vector<8x32xf32> to vector<8x8xf32>
    %cst_52 = arith.constant dense<0.000000e+00> : vector<8x8xf32>
    %164 = tpu.matmul %162, %163, %cst_52 {dimension_numbers = #tpu.dot_dimension_numbers<[1], [0], [0], [1], [0, 0, 1, 1], [], []>} : vector<8x8xf32>, vector<8x8xf32>, vector<8x8xf32> -> vector<8x8xf32>
    %165 = vector.extract_strided_slice %127 {offsets = [0, 16], sizes = [8, 8], strides = [1, 1]} : vector<8x32xf32> to vector<8x8xf32>
    %166 = vector.extract_strided_slice %128 {offsets = [0, 16], sizes = [8, 8], strides = [1, 1]} : vector<8x32xf32> to vector<8x8xf32>
    %cst_53 = arith.constant dense<0.000000e+00> : vector<8x8xf32>
    %167 = tpu.matmul %165, %166, %cst_53 {dimension_numbers = #tpu.dot_dimension_numbers<[1], [1], [0], [0], [0, 0, 1, 0], [], []>} : vector<8x8xf32>, vector<8x8xf32>, vector<8x8xf32> -> vector<8x8xf32>
    %168 = arith.addf %167, %132 : vector<8x8xf32>
    %cst_54 = arith.constant dense<0xFF800000> : vector<8xf32>
    %169 = vector.multi_reduction <maximumf>, %168, %cst_54 [1] : vector<8x8xf32> to vector<8xf32>
    %170 = vector.shape_cast %169 : vector<8xf32> to vector<8x1xf32>
    %171 = vector.broadcast %170 : vector<8x1xf32> to vector<8x8xf32>
    %172 = arith.subf %168, %171 : vector<8x8xf32>
    %173 = math.exp %172 : vector<8x8xf32>
    %cst_55 = arith.constant dense<0.000000e+00> : vector<8xf32>
    %174 = vector.multi_reduction <add>, %173, %cst_55 [1] : vector<8x8xf32> to vector<8xf32>
    %175 = vector.shape_cast %174 : vector<8xf32> to vector<8x1xf32>
    %176 = tpu.reciprocal %175 {approx = true} : vector<8x1xf32> -> vector<8x1xf32>
    %177 = vector.broadcast %176 : vector<8x1xf32> to vector<8x8xf32>
    %178 = arith.mulf %173, %177 : vector<8x8xf32>
    %179 = vector.extract_strided_slice %129 {offsets = [0, 16], sizes = [8, 8], strides = [1, 1]} : vector<8x32xf32> to vector<8x8xf32>
    %cst_56 = arith.constant dense<0.000000e+00> : vector<8x8xf32>
    %180 = tpu.matmul %178, %179, %cst_56 {dimension_numbers = #tpu.dot_dimension_numbers<[1], [0], [0], [1], [0, 0, 1, 1], [], []>} : vector<8x8xf32>, vector<8x8xf32>, vector<8x8xf32> -> vector<8x8xf32>
    %181 = vector.extract_strided_slice %127 {offsets = [0, 24], sizes = [8, 8], strides = [1, 1]} : vector<8x32xf32> to vector<8x8xf32>
    %182 = vector.extract_strided_slice %128 {offsets = [0, 24], sizes = [8, 8], strides = [1, 1]} : vector<8x32xf32> to vector<8x8xf32>
    %cst_57 = arith.constant dense<0.000000e+00> : vector<8x8xf32>
    %183 = tpu.matmul %181, %182, %cst_57 {dimension_numbers = #tpu.dot_dimension_numbers<[1], [1], [0], [0], [0, 0, 1, 0], [], []>} : vector<8x8xf32>, vector<8x8xf32>, vector<8x8xf32> -> vector<8x8xf32>
    %184 = arith.addf %183, %132 : vector<8x8xf32>
    %cst_58 = arith.constant dense<0xFF800000> : vector<8xf32>
    %185 = vector.multi_reduction <maximumf>, %184, %cst_58 [1] : vector<8x8xf32> to vector<8xf32>
    %186 = vector.shape_cast %185 : vector<8xf32> to vector<8x1xf32>
    %187 = vector.broadcast %186 : vector<8x1xf32> to vector<8x8xf32>
    %188 = arith.subf %184, %187 : vector<8x8xf32>
    %189 = math.exp %188 : vector<8x8xf32>
    %cst_59 = arith.constant dense<0.000000e+00> : vector<8xf32>
    %190 = vector.multi_reduction <add>, %189, %cst_59 [1] : vector<8x8xf32> to vector<8xf32>
    %191 = vector.shape_cast %190 : vector<8xf32> to vector<8x1xf32>
    %192 = tpu.reciprocal %191 {approx = true} : vector<8x1xf32> -> vector<8x1xf32>
    %193 = vector.broadcast %192 : vector<8x1xf32> to vector<8x8xf32>
    %194 = arith.mulf %189, %193 : vector<8x8xf32>
    %195 = vector.extract_strided_slice %129 {offsets = [0, 24], sizes = [8, 8], strides = [1, 1]} : vector<8x32xf32> to vector<8x8xf32>
    %cst_60 = arith.constant dense<0.000000e+00> : vector<8x8xf32>
    %196 = tpu.matmul %194, %195, %cst_60 {dimension_numbers = #tpu.dot_dimension_numbers<[1], [0], [0], [1], [0, 0, 1, 1], [], []>} : vector<8x8xf32>, vector<8x8xf32>, vector<8x8xf32> -> vector<8x8xf32>
    %197 = tpu.concatenate %148, %164, %180, %196 in 1 : vector<8x8xf32>, vector<8x8xf32>, vector<8x8xf32>, vector<8x8xf32> -> vector<8x32xf32>
    %198 = tpu.concatenate %126, %197 in 0 : vector<8x32xf32>, vector<8x32xf32> -> vector<16x32xf32>
    %c0_61 = arith.constant 0 : index
    %c0_62 = arith.constant 0 : index
    %c0_63 = arith.constant 0 : index
    %199 = vector.load %arg4[%c0_61, %c0_62, %c0_63] : memref<2x32x32xf32, #tpu.memory_space<vmem>>, vector<1x32x32xf32>
    %200 = vector.shape_cast %199 : vector<1x32x32xf32> to vector<32x32xf32>
    %cst_64 = arith.constant dense<0.000000e+00> : vector<16x32xf32>
    %201 = tpu.matmul %198, %200, %cst_64 {dimension_numbers = #tpu.dot_dimension_numbers<[1], [0], [0], [1], [0, 0, 1, 1], [], []>} : vector<16x32xf32>, vector<32x32xf32>, vector<16x32xf32> -> vector<16x32xf32>
    %c4 = arith.constant 4 : index
    %c0_65 = arith.constant 0 : index
    %202 = vector.load %arg8[%c4, %c0_65] : memref<24x128xf32, #tpu.memory_space<vmem>>, vector<1x32xf32>
    %203 = vector.broadcast %202 : vector<1x32xf32> to vector<16x32xf32>
    %204 = arith.addf %201, %203 : vector<16x32xf32>
    %205 = arith.addf %46, %204 : vector<16x32xf32>
    %c5 = arith.constant 5 : index
    %c0_66 = arith.constant 0 : index
    %206 = vector.load %arg8[%c5, %c0_66] : memref<24x128xf32, #tpu.memory_space<vmem>>, vector<1x32xf32>
    %c6 = arith.constant 6 : index
    %c0_67 = arith.constant 0 : index
    %207 = vector.load %arg8[%c6, %c0_67] : memref<24x128xf32, #tpu.memory_space<vmem>>, vector<1x32xf32>
    %cst_68 = arith.constant dense<0.000000e+00> : vector<16xf32>
    %208 = vector.multi_reduction <add>, %205, %cst_68 [1] : vector<16x32xf32> to vector<16xf32>
    %209 = vector.shape_cast %208 : vector<16xf32> to vector<16x1xf32>
    %cst_69 = arith.constant 3.200000e+01 : f32
    %210 = vector.broadcast %cst_69 : f32 to vector<16x1xf32>
    %211 = arith.divf %209, %210 : vector<16x1xf32>
    %212 = vector.broadcast %211 : vector<16x1xf32> to vector<16x32xf32>
    %213 = arith.subf %205, %212 : vector<16x32xf32>
    %214 = arith.mulf %213, %213 : vector<16x32xf32>
    %cst_70 = arith.constant dense<0.000000e+00> : vector<16xf32>
    %215 = vector.multi_reduction <add>, %214, %cst_70 [1] : vector<16x32xf32> to vector<16xf32>
    %216 = vector.shape_cast %215 : vector<16xf32> to vector<16x1xf32>
    %cst_71 = arith.constant 3.200000e+01 : f32
    %217 = vector.broadcast %cst_71 : f32 to vector<16x1xf32>
    %218 = arith.divf %216, %217 : vector<16x1xf32>
    %219 = vector.broadcast %211 : vector<16x1xf32> to vector<16x32xf32>
    %220 = arith.subf %205, %219 : vector<16x32xf32>
    %cst_72 = arith.constant 9.99999996E-13 : f32
    %221 = vector.broadcast %cst_72 : f32 to vector<16x1xf32>
    %222 = arith.addf %218, %221 : vector<16x1xf32>
    %223 = math.rsqrt %222 : vector<16x1xf32>
    %224 = vector.broadcast %223 : vector<16x1xf32> to vector<16x32xf32>
    %225 = arith.mulf %220, %224 : vector<16x32xf32>
    %226 = vector.broadcast %206 : vector<1x32xf32> to vector<16x32xf32>
    %227 = arith.mulf %225, %226 : vector<16x32xf32>
    %228 = vector.broadcast %207 : vector<1x32xf32> to vector<16x32xf32>
    %229 = arith.addf %227, %228 : vector<16x32xf32>
    %c0_73 = arith.constant 0 : index
    %c0_74 = arith.constant 0 : index
    %c0_75 = arith.constant 0 : index
    %230 = vector.load %arg5[%c0_73, %c0_74, %c0_75] : memref<2x32x128xf32, #tpu.memory_space<vmem>>, vector<1x32x128xf32>
    %231 = vector.shape_cast %230 : vector<1x32x128xf32> to vector<32x128xf32>
    %cst_76 = arith.constant dense<0.000000e+00> : vector<16x128xf32>
    %232 = tpu.matmul %229, %231, %cst_76 {dimension_numbers = #tpu.dot_dimension_numbers<[1], [0], [0], [1], [0, 0, 1, 1], [], []>} : vector<16x32xf32>, vector<32x128xf32>, vector<16x128xf32> -> vector<16x128xf32>
    %c7 = arith.constant 7 : index
    %c0_77 = arith.constant 0 : index
    %233 = vector.load %arg8[%c7, %c0_77] : memref<24x128xf32, #tpu.memory_space<vmem>>, vector<1x128xf32>
    %234 = vector.broadcast %233 : vector<1x128xf32> to vector<16x128xf32>
    %235 = arith.addf %232, %234 : vector<16x128xf32>
    %cst_78 = arith.constant 5.000000e-01 : f32
    %236 = vector.broadcast %cst_78 : f32 to vector<16x128xf32>
    %237 = arith.mulf %236, %235 : vector<16x128xf32>
    %cst_79 = arith.constant 0.707106769 : f32
    %238 = vector.broadcast %cst_79 : f32 to vector<16x128xf32>
    %239 = arith.mulf %235, %238 : vector<16x128xf32>
    %240 = math.erf %239 : vector<16x128xf32>
    %cst_80 = arith.constant 1.000000e+00 : f32
    %241 = vector.broadcast %cst_80 : f32 to vector<16x128xf32>
    %242 = arith.addf %241, %240 : vector<16x128xf32>
    %243 = arith.mulf %237, %242 : vector<16x128xf32>
    %c0_81 = arith.constant 0 : index
    %c0_82 = arith.constant 0 : index
    %c0_83 = arith.constant 0 : index
    %244 = vector.load %arg6[%c0_81, %c0_82, %c0_83] : memref<2x128x32xf32, #tpu.memory_space<vmem>>, vector<1x128x32xf32>
    %245 = vector.shape_cast %244 : vector<1x128x32xf32> to vector<128x32xf32>
    %cst_84 = arith.constant dense<0.000000e+00> : vector<16x32xf32>
    %246 = tpu.matmul %243, %245, %cst_84 {dimension_numbers = #tpu.dot_dimension_numbers<[1], [0], [0], [1], [0, 0, 1, 1], [], []>} : vector<16x128xf32>, vector<128x32xf32>, vector<16x32xf32> -> vector<16x32xf32>
    %c8 = arith.constant 8 : index
    %c0_85 = arith.constant 0 : index
    %247 = vector.load %arg8[%c8, %c0_85] : memref<24x128xf32, #tpu.memory_space<vmem>>, vector<1x32xf32>
    %248 = vector.broadcast %247 : vector<1x32xf32> to vector<16x32xf32>
    %249 = arith.addf %246, %248 : vector<16x32xf32>
    %250 = arith.addf %229, %249 : vector<16x32xf32>
    %c9 = arith.constant 9 : index
    %c0_86 = arith.constant 0 : index
    %251 = vector.load %arg8[%c9, %c0_86] : memref<24x128xf32, #tpu.memory_space<vmem>>, vector<1x32xf32>
    %c10 = arith.constant 10 : index
    %c0_87 = arith.constant 0 : index
    %252 = vector.load %arg8[%c10, %c0_87] : memref<24x128xf32, #tpu.memory_space<vmem>>, vector<1x32xf32>
    %cst_88 = arith.constant dense<0.000000e+00> : vector<16xf32>
    %253 = vector.multi_reduction <add>, %250, %cst_88 [1] : vector<16x32xf32> to vector<16xf32>
    %254 = vector.shape_cast %253 : vector<16xf32> to vector<16x1xf32>
    %cst_89 = arith.constant 3.200000e+01 : f32
    %255 = vector.broadcast %cst_89 : f32 to vector<16x1xf32>
    %256 = arith.divf %254, %255 : vector<16x1xf32>
    %257 = vector.broadcast %256 : vector<16x1xf32> to vector<16x32xf32>
    %258 = arith.subf %250, %257 : vector<16x32xf32>
    %259 = arith.mulf %258, %258 : vector<16x32xf32>
    %cst_90 = arith.constant dense<0.000000e+00> : vector<16xf32>
    %260 = vector.multi_reduction <add>, %259, %cst_90 [1] : vector<16x32xf32> to vector<16xf32>
    %261 = vector.shape_cast %260 : vector<16xf32> to vector<16x1xf32>
    %cst_91 = arith.constant 3.200000e+01 : f32
    %262 = vector.broadcast %cst_91 : f32 to vector<16x1xf32>
    %263 = arith.divf %261, %262 : vector<16x1xf32>
    %264 = vector.broadcast %256 : vector<16x1xf32> to vector<16x32xf32>
    %265 = arith.subf %250, %264 : vector<16x32xf32>
    %cst_92 = arith.constant 9.99999996E-13 : f32
    %266 = vector.broadcast %cst_92 : f32 to vector<16x1xf32>
    %267 = arith.addf %263, %266 : vector<16x1xf32>
    %268 = math.rsqrt %267 : vector<16x1xf32>
    %269 = vector.broadcast %268 : vector<16x1xf32> to vector<16x32xf32>
    %270 = arith.mulf %265, %269 : vector<16x32xf32>
    %271 = vector.broadcast %251 : vector<1x32xf32> to vector<16x32xf32>
    %272 = arith.mulf %270, %271 : vector<16x32xf32>
    %273 = vector.broadcast %252 : vector<1x32xf32> to vector<16x32xf32>
    %274 = arith.addf %272, %273 : vector<16x32xf32>
    %c1_93 = arith.constant 1 : index
    %c0_94 = arith.constant 0 : index
    %c0_95 = arith.constant 0 : index
    %275 = vector.load %arg3[%c1_93, %c0_94, %c0_95] : memref<2x32x96xf32, #tpu.memory_space<vmem>>, vector<1x32x96xf32>
    %276 = vector.shape_cast %275 : vector<1x32x96xf32> to vector<32x96xf32>
    %cst_96 = arith.constant dense<0.000000e+00> : vector<16x96xf32>
    %277 = tpu.matmul %274, %276, %cst_96 {dimension_numbers = #tpu.dot_dimension_numbers<[1], [0], [0], [1], [0, 0, 1, 1], [], []>} : vector<16x32xf32>, vector<32x96xf32>, vector<16x96xf32> -> vector<16x96xf32>
    %c11 = arith.constant 11 : index
    %c0_97 = arith.constant 0 : index
    %278 = vector.load %arg8[%c11, %c0_97] : memref<24x128xf32, #tpu.memory_space<vmem>>, vector<1x96xf32>
    %279 = vector.broadcast %278 : vector<1x96xf32> to vector<16x96xf32>
    %280 = arith.addf %277, %279 : vector<16x96xf32>
    %281 = vector.extract_strided_slice %280 {offsets = [0, 0], sizes = [16, 32], strides = [1, 1]} : vector<16x96xf32> to vector<16x32xf32>
    %282 = vector.extract_strided_slice %280 {offsets = [0, 32], sizes = [16, 32], strides = [1, 1]} : vector<16x96xf32> to vector<16x32xf32>
    %283 = vector.extract_strided_slice %280 {offsets = [0, 64], sizes = [16, 32], strides = [1, 1]} : vector<16x96xf32> to vector<16x32xf32>
    %284 = vector.extract_strided_slice %281 {offsets = [0, 0], sizes = [8, 32], strides = [1, 1]} : vector<16x32xf32> to vector<8x32xf32>
    %285 = vector.extract_strided_slice %282 {offsets = [0, 0], sizes = [8, 32], strides = [1, 1]} : vector<16x32xf32> to vector<8x32xf32>
    %286 = vector.extract_strided_slice %283 {offsets = [0, 0], sizes = [8, 32], strides = [1, 1]} : vector<16x32xf32> to vector<8x32xf32>
    %c0_98 = arith.constant 0 : index
    %c0_99 = arith.constant 0 : index
    %287 = vector.load %arg1[%c0_98, %c0_99] : memref<2x8xf32, #tpu.memory_space<vmem>>, vector<1x8xf32>
    %288 = vector.shape_cast %287 : vector<1x8xf32> to vector<1x8xf32>
    %289 = vector.broadcast %288 : vector<1x8xf32> to vector<8x8xf32>
    %290 = vector.extract_strided_slice %284 {offsets = [0, 0], sizes = [8, 8], strides = [1, 1]} : vector<8x32xf32> to vector<8x8xf32>
    %291 = vector.extract_strided_slice %285 {offsets = [0, 0], sizes = [8, 8], strides = [1, 1]} : vector<8x32xf32> to vector<8x8xf32>
    %cst_100 = arith.constant dense<0.000000e+00> : vector<8x8xf32>
    %292 = tpu.matmul %290, %291, %cst_100 {dimension_numbers = #tpu.dot_dimension_numbers<[1], [1], [0], [0], [0, 0, 1, 0], [], []>} : vector<8x8xf32>, vector<8x8xf32>, vector<8x8xf32> -> vector<8x8xf32>
    %293 = arith.addf %292, %289 : vector<8x8xf32>
    %cst_101 = arith.constant dense<0xFF800000> : vector<8xf32>
    %294 = vector.multi_reduction <maximumf>, %293, %cst_101 [1] : vector<8x8xf32> to vector<8xf32>
    %295 = vector.shape_cast %294 : vector<8xf32> to vector<8x1xf32>
    %296 = vector.broadcast %295 : vector<8x1xf32> to vector<8x8xf32>
    %297 = arith.subf %293, %296 : vector<8x8xf32>
    %298 = math.exp %297 : vector<8x8xf32>
    %cst_102 = arith.constant dense<0.000000e+00> : vector<8xf32>
    %299 = vector.multi_reduction <add>, %298, %cst_102 [1] : vector<8x8xf32> to vector<8xf32>
    %300 = vector.shape_cast %299 : vector<8xf32> to vector<8x1xf32>
    %301 = tpu.reciprocal %300 {approx = true} : vector<8x1xf32> -> vector<8x1xf32>
    %302 = vector.broadcast %301 : vector<8x1xf32> to vector<8x8xf32>
    %303 = arith.mulf %298, %302 : vector<8x8xf32>
    %304 = vector.extract_strided_slice %286 {offsets = [0, 0], sizes = [8, 8], strides = [1, 1]} : vector<8x32xf32> to vector<8x8xf32>
    %cst_103 = arith.constant dense<0.000000e+00> : vector<8x8xf32>
    %305 = tpu.matmul %303, %304, %cst_103 {dimension_numbers = #tpu.dot_dimension_numbers<[1], [0], [0], [1], [0, 0, 1, 1], [], []>} : vector<8x8xf32>, vector<8x8xf32>, vector<8x8xf32> -> vector<8x8xf32>
    %306 = vector.extract_strided_slice %284 {offsets = [0, 8], sizes = [8, 8], strides = [1, 1]} : vector<8x32xf32> to vector<8x8xf32>
    %307 = vector.extract_strided_slice %285 {offsets = [0, 8], sizes = [8, 8], strides = [1, 1]} : vector<8x32xf32> to vector<8x8xf32>
    %cst_104 = arith.constant dense<0.000000e+00> : vector<8x8xf32>
    %308 = tpu.matmul %306, %307, %cst_104 {dimension_numbers = #tpu.dot_dimension_numbers<[1], [1], [0], [0], [0, 0, 1, 0], [], []>} : vector<8x8xf32>, vector<8x8xf32>, vector<8x8xf32> -> vector<8x8xf32>
    %309 = arith.addf %308, %289 : vector<8x8xf32>
    %cst_105 = arith.constant dense<0xFF800000> : vector<8xf32>
    %310 = vector.multi_reduction <maximumf>, %309, %cst_105 [1] : vector<8x8xf32> to vector<8xf32>
    %311 = vector.shape_cast %310 : vector<8xf32> to vector<8x1xf32>
    %312 = vector.broadcast %311 : vector<8x1xf32> to vector<8x8xf32>
    %313 = arith.subf %309, %312 : vector<8x8xf32>
    %314 = math.exp %313 : vector<8x8xf32>
    %cst_106 = arith.constant dense<0.000000e+00> : vector<8xf32>
    %315 = vector.multi_reduction <add>, %314, %cst_106 [1] : vector<8x8xf32> to vector<8xf32>
    %316 = vector.shape_cast %315 : vector<8xf32> to vector<8x1xf32>
    %317 = tpu.reciprocal %316 {approx = true} : vector<8x1xf32> -> vector<8x1xf32>
    %318 = vector.broadcast %317 : vector<8x1xf32> to vector<8x8xf32>
    %319 = arith.mulf %314, %318 : vector<8x8xf32>
    %320 = vector.extract_strided_slice %286 {offsets = [0, 8], sizes = [8, 8], strides = [1, 1]} : vector<8x32xf32> to vector<8x8xf32>
    %cst_107 = arith.constant dense<0.000000e+00> : vector<8x8xf32>
    %321 = tpu.matmul %319, %320, %cst_107 {dimension_numbers = #tpu.dot_dimension_numbers<[1], [0], [0], [1], [0, 0, 1, 1], [], []>} : vector<8x8xf32>, vector<8x8xf32>, vector<8x8xf32> -> vector<8x8xf32>
    %322 = vector.extract_strided_slice %284 {offsets = [0, 16], sizes = [8, 8], strides = [1, 1]} : vector<8x32xf32> to vector<8x8xf32>
    %323 = vector.extract_strided_slice %285 {offsets = [0, 16], sizes = [8, 8], strides = [1, 1]} : vector<8x32xf32> to vector<8x8xf32>
    %cst_108 = arith.constant dense<0.000000e+00> : vector<8x8xf32>
    %324 = tpu.matmul %322, %323, %cst_108 {dimension_numbers = #tpu.dot_dimension_numbers<[1], [1], [0], [0], [0, 0, 1, 0], [], []>} : vector<8x8xf32>, vector<8x8xf32>, vector<8x8xf32> -> vector<8x8xf32>
    %325 = arith.addf %324, %289 : vector<8x8xf32>
    %cst_109 = arith.constant dense<0xFF800000> : vector<8xf32>
    %326 = vector.multi_reduction <maximumf>, %325, %cst_109 [1] : vector<8x8xf32> to vector<8xf32>
    %327 = vector.shape_cast %326 : vector<8xf32> to vector<8x1xf32>
    %328 = vector.broadcast %327 : vector<8x1xf32> to vector<8x8xf32>
    %329 = arith.subf %325, %328 : vector<8x8xf32>
    %330 = math.exp %329 : vector<8x8xf32>
    %cst_110 = arith.constant dense<0.000000e+00> : vector<8xf32>
    %331 = vector.multi_reduction <add>, %330, %cst_110 [1] : vector<8x8xf32> to vector<8xf32>
    %332 = vector.shape_cast %331 : vector<8xf32> to vector<8x1xf32>
    %333 = tpu.reciprocal %332 {approx = true} : vector<8x1xf32> -> vector<8x1xf32>
    %334 = vector.broadcast %333 : vector<8x1xf32> to vector<8x8xf32>
    %335 = arith.mulf %330, %334 : vector<8x8xf32>
    %336 = vector.extract_strided_slice %286 {offsets = [0, 16], sizes = [8, 8], strides = [1, 1]} : vector<8x32xf32> to vector<8x8xf32>
    %cst_111 = arith.constant dense<0.000000e+00> : vector<8x8xf32>
    %337 = tpu.matmul %335, %336, %cst_111 {dimension_numbers = #tpu.dot_dimension_numbers<[1], [0], [0], [1], [0, 0, 1, 1], [], []>} : vector<8x8xf32>, vector<8x8xf32>, vector<8x8xf32> -> vector<8x8xf32>
    %338 = vector.extract_strided_slice %284 {offsets = [0, 24], sizes = [8, 8], strides = [1, 1]} : vector<8x32xf32> to vector<8x8xf32>
    %339 = vector.extract_strided_slice %285 {offsets = [0, 24], sizes = [8, 8], strides = [1, 1]} : vector<8x32xf32> to vector<8x8xf32>
    %cst_112 = arith.constant dense<0.000000e+00> : vector<8x8xf32>
    %340 = tpu.matmul %338, %339, %cst_112 {dimension_numbers = #tpu.dot_dimension_numbers<[1], [1], [0], [0], [0, 0, 1, 0], [], []>} : vector<8x8xf32>, vector<8x8xf32>, vector<8x8xf32> -> vector<8x8xf32>
    %341 = arith.addf %340, %289 : vector<8x8xf32>
    %cst_113 = arith.constant dense<0xFF800000> : vector<8xf32>
    %342 = vector.multi_reduction <maximumf>, %341, %cst_113 [1] : vector<8x8xf32> to vector<8xf32>
    %343 = vector.shape_cast %342 : vector<8xf32> to vector<8x1xf32>
    %344 = vector.broadcast %343 : vector<8x1xf32> to vector<8x8xf32>
    %345 = arith.subf %341, %344 : vector<8x8xf32>
    %346 = math.exp %345 : vector<8x8xf32>
    %cst_114 = arith.constant dense<0.000000e+00> : vector<8xf32>
    %347 = vector.multi_reduction <add>, %346, %cst_114 [1] : vector<8x8xf32> to vector<8xf32>
    %348 = vector.shape_cast %347 : vector<8xf32> to vector<8x1xf32>
    %349 = tpu.reciprocal %348 {approx = true} : vector<8x1xf32> -> vector<8x1xf32>
    %350 = vector.broadcast %349 : vector<8x1xf32> to vector<8x8xf32>
    %351 = arith.mulf %346, %350 : vector<8x8xf32>
    %352 = vector.extract_strided_slice %286 {offsets = [0, 24], sizes = [8, 8], strides = [1, 1]} : vector<8x32xf32> to vector<8x8xf32>
    %cst_115 = arith.constant dense<0.000000e+00> : vector<8x8xf32>
    %353 = tpu.matmul %351, %352, %cst_115 {dimension_numbers = #tpu.dot_dimension_numbers<[1], [0], [0], [1], [0, 0, 1, 1], [], []>} : vector<8x8xf32>, vector<8x8xf32>, vector<8x8xf32> -> vector<8x8xf32>
    %354 = tpu.concatenate %305, %321, %337, %353 in 1 : vector<8x8xf32>, vector<8x8xf32>, vector<8x8xf32>, vector<8x8xf32> -> vector<8x32xf32>
    %355 = vector.extract_strided_slice %281 {offsets = [8, 0], sizes = [8, 32], strides = [1, 1]} : vector<16x32xf32> to vector<8x32xf32>
    %356 = vector.extract_strided_slice %282 {offsets = [8, 0], sizes = [8, 32], strides = [1, 1]} : vector<16x32xf32> to vector<8x32xf32>
    %357 = vector.extract_strided_slice %283 {offsets = [8, 0], sizes = [8, 32], strides = [1, 1]} : vector<16x32xf32> to vector<8x32xf32>
    %c1_116 = arith.constant 1 : index
    %c0_117 = arith.constant 0 : index
    %358 = vector.load %arg1[%c1_116, %c0_117] : memref<2x8xf32, #tpu.memory_space<vmem>>, vector<1x8xf32>
    %359 = vector.shape_cast %358 : vector<1x8xf32> to vector<1x8xf32>
    %360 = vector.broadcast %359 : vector<1x8xf32> to vector<8x8xf32>
    %361 = vector.extract_strided_slice %355 {offsets = [0, 0], sizes = [8, 8], strides = [1, 1]} : vector<8x32xf32> to vector<8x8xf32>
    %362 = vector.extract_strided_slice %356 {offsets = [0, 0], sizes = [8, 8], strides = [1, 1]} : vector<8x32xf32> to vector<8x8xf32>
    %cst_118 = arith.constant dense<0.000000e+00> : vector<8x8xf32>
    %363 = tpu.matmul %361, %362, %cst_118 {dimension_numbers = #tpu.dot_dimension_numbers<[1], [1], [0], [0], [0, 0, 1, 0], [], []>} : vector<8x8xf32>, vector<8x8xf32>, vector<8x8xf32> -> vector<8x8xf32>
    %364 = arith.addf %363, %360 : vector<8x8xf32>
    %cst_119 = arith.constant dense<0xFF800000> : vector<8xf32>
    %365 = vector.multi_reduction <maximumf>, %364, %cst_119 [1] : vector<8x8xf32> to vector<8xf32>
    %366 = vector.shape_cast %365 : vector<8xf32> to vector<8x1xf32>
    %367 = vector.broadcast %366 : vector<8x1xf32> to vector<8x8xf32>
    %368 = arith.subf %364, %367 : vector<8x8xf32>
    %369 = math.exp %368 : vector<8x8xf32>
    %cst_120 = arith.constant dense<0.000000e+00> : vector<8xf32>
    %370 = vector.multi_reduction <add>, %369, %cst_120 [1] : vector<8x8xf32> to vector<8xf32>
    %371 = vector.shape_cast %370 : vector<8xf32> to vector<8x1xf32>
    %372 = tpu.reciprocal %371 {approx = true} : vector<8x1xf32> -> vector<8x1xf32>
    %373 = vector.broadcast %372 : vector<8x1xf32> to vector<8x8xf32>
    %374 = arith.mulf %369, %373 : vector<8x8xf32>
    %375 = vector.extract_strided_slice %357 {offsets = [0, 0], sizes = [8, 8], strides = [1, 1]} : vector<8x32xf32> to vector<8x8xf32>
    %cst_121 = arith.constant dense<0.000000e+00> : vector<8x8xf32>
    %376 = tpu.matmul %374, %375, %cst_121 {dimension_numbers = #tpu.dot_dimension_numbers<[1], [0], [0], [1], [0, 0, 1, 1], [], []>} : vector<8x8xf32>, vector<8x8xf32>, vector<8x8xf32> -> vector<8x8xf32>
    %377 = vector.extract_strided_slice %355 {offsets = [0, 8], sizes = [8, 8], strides = [1, 1]} : vector<8x32xf32> to vector<8x8xf32>
    %378 = vector.extract_strided_slice %356 {offsets = [0, 8], sizes = [8, 8], strides = [1, 1]} : vector<8x32xf32> to vector<8x8xf32>
    %cst_122 = arith.constant dense<0.000000e+00> : vector<8x8xf32>
    %379 = tpu.matmul %377, %378, %cst_122 {dimension_numbers = #tpu.dot_dimension_numbers<[1], [1], [0], [0], [0, 0, 1, 0], [], []>} : vector<8x8xf32>, vector<8x8xf32>, vector<8x8xf32> -> vector<8x8xf32>
    %380 = arith.addf %379, %360 : vector<8x8xf32>
    %cst_123 = arith.constant dense<0xFF800000> : vector<8xf32>
    %381 = vector.multi_reduction <maximumf>, %380, %cst_123 [1] : vector<8x8xf32> to vector<8xf32>
    %382 = vector.shape_cast %381 : vector<8xf32> to vector<8x1xf32>
    %383 = vector.broadcast %382 : vector<8x1xf32> to vector<8x8xf32>
    %384 = arith.subf %380, %383 : vector<8x8xf32>
    %385 = math.exp %384 : vector<8x8xf32>
    %cst_124 = arith.constant dense<0.000000e+00> : vector<8xf32>
    %386 = vector.multi_reduction <add>, %385, %cst_124 [1] : vector<8x8xf32> to vector<8xf32>
    %387 = vector.shape_cast %386 : vector<8xf32> to vector<8x1xf32>
    %388 = tpu.reciprocal %387 {approx = true} : vector<8x1xf32> -> vector<8x1xf32>
    %389 = vector.broadcast %388 : vector<8x1xf32> to vector<8x8xf32>
    %390 = arith.mulf %385, %389 : vector<8x8xf32>
    %391 = vector.extract_strided_slice %357 {offsets = [0, 8], sizes = [8, 8], strides = [1, 1]} : vector<8x32xf32> to vector<8x8xf32>
    %cst_125 = arith.constant dense<0.000000e+00> : vector<8x8xf32>
    %392 = tpu.matmul %390, %391, %cst_125 {dimension_numbers = #tpu.dot_dimension_numbers<[1], [0], [0], [1], [0, 0, 1, 1], [], []>} : vector<8x8xf32>, vector<8x8xf32>, vector<8x8xf32> -> vector<8x8xf32>
    %393 = vector.extract_strided_slice %355 {offsets = [0, 16], sizes = [8, 8], strides = [1, 1]} : vector<8x32xf32> to vector<8x8xf32>
    %394 = vector.extract_strided_slice %356 {offsets = [0, 16], sizes = [8, 8], strides = [1, 1]} : vector<8x32xf32> to vector<8x8xf32>
    %cst_126 = arith.constant dense<0.000000e+00> : vector<8x8xf32>
    %395 = tpu.matmul %393, %394, %cst_126 {dimension_numbers = #tpu.dot_dimension_numbers<[1], [1], [0], [0], [0, 0, 1, 0], [], []>} : vector<8x8xf32>, vector<8x8xf32>, vector<8x8xf32> -> vector<8x8xf32>
    %396 = arith.addf %395, %360 : vector<8x8xf32>
    %cst_127 = arith.constant dense<0xFF800000> : vector<8xf32>
    %397 = vector.multi_reduction <maximumf>, %396, %cst_127 [1] : vector<8x8xf32> to vector<8xf32>
    %398 = vector.shape_cast %397 : vector<8xf32> to vector<8x1xf32>
    %399 = vector.broadcast %398 : vector<8x1xf32> to vector<8x8xf32>
    %400 = arith.subf %396, %399 : vector<8x8xf32>
    %401 = math.exp %400 : vector<8x8xf32>
    %cst_128 = arith.constant dense<0.000000e+00> : vector<8xf32>
    %402 = vector.multi_reduction <add>, %401, %cst_128 [1] : vector<8x8xf32> to vector<8xf32>
    %403 = vector.shape_cast %402 : vector<8xf32> to vector<8x1xf32>
    %404 = tpu.reciprocal %403 {approx = true} : vector<8x1xf32> -> vector<8x1xf32>
    %405 = vector.broadcast %404 : vector<8x1xf32> to vector<8x8xf32>
    %406 = arith.mulf %401, %405 : vector<8x8xf32>
    %407 = vector.extract_strided_slice %357 {offsets = [0, 16], sizes = [8, 8], strides = [1, 1]} : vector<8x32xf32> to vector<8x8xf32>
    %cst_129 = arith.constant dense<0.000000e+00> : vector<8x8xf32>
    %408 = tpu.matmul %406, %407, %cst_129 {dimension_numbers = #tpu.dot_dimension_numbers<[1], [0], [0], [1], [0, 0, 1, 1], [], []>} : vector<8x8xf32>, vector<8x8xf32>, vector<8x8xf32> -> vector<8x8xf32>
    %409 = vector.extract_strided_slice %355 {offsets = [0, 24], sizes = [8, 8], strides = [1, 1]} : vector<8x32xf32> to vector<8x8xf32>
    %410 = vector.extract_strided_slice %356 {offsets = [0, 24], sizes = [8, 8], strides = [1, 1]} : vector<8x32xf32> to vector<8x8xf32>
    %cst_130 = arith.constant dense<0.000000e+00> : vector<8x8xf32>
    %411 = tpu.matmul %409, %410, %cst_130 {dimension_numbers = #tpu.dot_dimension_numbers<[1], [1], [0], [0], [0, 0, 1, 0], [], []>} : vector<8x8xf32>, vector<8x8xf32>, vector<8x8xf32> -> vector<8x8xf32>
    %412 = arith.addf %411, %360 : vector<8x8xf32>
    %cst_131 = arith.constant dense<0xFF800000> : vector<8xf32>
    %413 = vector.multi_reduction <maximumf>, %412, %cst_131 [1] : vector<8x8xf32> to vector<8xf32>
    %414 = vector.shape_cast %413 : vector<8xf32> to vector<8x1xf32>
    %415 = vector.broadcast %414 : vector<8x1xf32> to vector<8x8xf32>
    %416 = arith.subf %412, %415 : vector<8x8xf32>
    %417 = math.exp %416 : vector<8x8xf32>
    %cst_132 = arith.constant dense<0.000000e+00> : vector<8xf32>
    %418 = vector.multi_reduction <add>, %417, %cst_132 [1] : vector<8x8xf32> to vector<8xf32>
    %419 = vector.shape_cast %418 : vector<8xf32> to vector<8x1xf32>
    %420 = tpu.reciprocal %419 {approx = true} : vector<8x1xf32> -> vector<8x1xf32>
    %421 = vector.broadcast %420 : vector<8x1xf32> to vector<8x8xf32>
    %422 = arith.mulf %417, %421 : vector<8x8xf32>
    %423 = vector.extract_strided_slice %357 {offsets = [0, 24], sizes = [8, 8], strides = [1, 1]} : vector<8x32xf32> to vector<8x8xf32>
    %cst_133 = arith.constant dense<0.000000e+00> : vector<8x8xf32>
    %424 = tpu.matmul %422, %423, %cst_133 {dimension_numbers = #tpu.dot_dimension_numbers<[1], [0], [0], [1], [0, 0, 1, 1], [], []>} : vector<8x8xf32>, vector<8x8xf32>, vector<8x8xf32> -> vector<8x8xf32>
    %425 = tpu.concatenate %376, %392, %408, %424 in 1 : vector<8x8xf32>, vector<8x8xf32>, vector<8x8xf32>, vector<8x8xf32> -> vector<8x32xf32>
    %426 = tpu.concatenate %354, %425 in 0 : vector<8x32xf32>, vector<8x32xf32> -> vector<16x32xf32>
    %c1_134 = arith.constant 1 : index
    %c0_135 = arith.constant 0 : index
    %c0_136 = arith.constant 0 : index
    %427 = vector.load %arg4[%c1_134, %c0_135, %c0_136] : memref<2x32x32xf32, #tpu.memory_space<vmem>>, vector<1x32x32xf32>
    %428 = vector.shape_cast %427 : vector<1x32x32xf32> to vector<32x32xf32>
    %cst_137 = arith.constant dense<0.000000e+00> : vector<16x32xf32>
    %429 = tpu.matmul %426, %428, %cst_137 {dimension_numbers = #tpu.dot_dimension_numbers<[1], [0], [0], [1], [0, 0, 1, 1], [], []>} : vector<16x32xf32>, vector<32x32xf32>, vector<16x32xf32> -> vector<16x32xf32>
    %c12 = arith.constant 12 : index
    %c0_138 = arith.constant 0 : index
    %430 = vector.load %arg8[%c12, %c0_138] : memref<24x128xf32, #tpu.memory_space<vmem>>, vector<1x32xf32>
    %431 = vector.broadcast %430 : vector<1x32xf32> to vector<16x32xf32>
    %432 = arith.addf %429, %431 : vector<16x32xf32>
    %433 = arith.addf %274, %432 : vector<16x32xf32>
    %c13 = arith.constant 13 : index
    %c0_139 = arith.constant 0 : index
    %434 = vector.load %arg8[%c13, %c0_139] : memref<24x128xf32, #tpu.memory_space<vmem>>, vector<1x32xf32>
    %c14 = arith.constant 14 : index
    %c0_140 = arith.constant 0 : index
    %435 = vector.load %arg8[%c14, %c0_140] : memref<24x128xf32, #tpu.memory_space<vmem>>, vector<1x32xf32>
    %cst_141 = arith.constant dense<0.000000e+00> : vector<16xf32>
    %436 = vector.multi_reduction <add>, %433, %cst_141 [1] : vector<16x32xf32> to vector<16xf32>
    %437 = vector.shape_cast %436 : vector<16xf32> to vector<16x1xf32>
    %cst_142 = arith.constant 3.200000e+01 : f32
    %438 = vector.broadcast %cst_142 : f32 to vector<16x1xf32>
    %439 = arith.divf %437, %438 : vector<16x1xf32>
    %440 = vector.broadcast %439 : vector<16x1xf32> to vector<16x32xf32>
    %441 = arith.subf %433, %440 : vector<16x32xf32>
    %442 = arith.mulf %441, %441 : vector<16x32xf32>
    %cst_143 = arith.constant dense<0.000000e+00> : vector<16xf32>
    %443 = vector.multi_reduction <add>, %442, %cst_143 [1] : vector<16x32xf32> to vector<16xf32>
    %444 = vector.shape_cast %443 : vector<16xf32> to vector<16x1xf32>
    %cst_144 = arith.constant 3.200000e+01 : f32
    %445 = vector.broadcast %cst_144 : f32 to vector<16x1xf32>
    %446 = arith.divf %444, %445 : vector<16x1xf32>
    %447 = vector.broadcast %439 : vector<16x1xf32> to vector<16x32xf32>
    %448 = arith.subf %433, %447 : vector<16x32xf32>
    %cst_145 = arith.constant 9.99999996E-13 : f32
    %449 = vector.broadcast %cst_145 : f32 to vector<16x1xf32>
    %450 = arith.addf %446, %449 : vector<16x1xf32>
    %451 = math.rsqrt %450 : vector<16x1xf32>
    %452 = vector.broadcast %451 : vector<16x1xf32> to vector<16x32xf32>
    %453 = arith.mulf %448, %452 : vector<16x32xf32>
    %454 = vector.broadcast %434 : vector<1x32xf32> to vector<16x32xf32>
    %455 = arith.mulf %453, %454 : vector<16x32xf32>
    %456 = vector.broadcast %435 : vector<1x32xf32> to vector<16x32xf32>
    %457 = arith.addf %455, %456 : vector<16x32xf32>
    %c1_146 = arith.constant 1 : index
    %c0_147 = arith.constant 0 : index
    %c0_148 = arith.constant 0 : index
    %458 = vector.load %arg5[%c1_146, %c0_147, %c0_148] : memref<2x32x128xf32, #tpu.memory_space<vmem>>, vector<1x32x128xf32>
    %459 = vector.shape_cast %458 : vector<1x32x128xf32> to vector<32x128xf32>
    %cst_149 = arith.constant dense<0.000000e+00> : vector<16x128xf32>
    %460 = tpu.matmul %457, %459, %cst_149 {dimension_numbers = #tpu.dot_dimension_numbers<[1], [0], [0], [1], [0, 0, 1, 1], [], []>} : vector<16x32xf32>, vector<32x128xf32>, vector<16x128xf32> -> vector<16x128xf32>
    %c15 = arith.constant 15 : index
    %c0_150 = arith.constant 0 : index
    %461 = vector.load %arg8[%c15, %c0_150] : memref<24x128xf32, #tpu.memory_space<vmem>>, vector<1x128xf32>
    %462 = vector.broadcast %461 : vector<1x128xf32> to vector<16x128xf32>
    %463 = arith.addf %460, %462 : vector<16x128xf32>
    %cst_151 = arith.constant 5.000000e-01 : f32
    %464 = vector.broadcast %cst_151 : f32 to vector<16x128xf32>
    %465 = arith.mulf %464, %463 : vector<16x128xf32>
    %cst_152 = arith.constant 0.707106769 : f32
    %466 = vector.broadcast %cst_152 : f32 to vector<16x128xf32>
    %467 = arith.mulf %463, %466 : vector<16x128xf32>
    %468 = math.erf %467 : vector<16x128xf32>
    %cst_153 = arith.constant 1.000000e+00 : f32
    %469 = vector.broadcast %cst_153 : f32 to vector<16x128xf32>
    %470 = arith.addf %469, %468 : vector<16x128xf32>
    %471 = arith.mulf %465, %470 : vector<16x128xf32>
    %c1_154 = arith.constant 1 : index
    %c0_155 = arith.constant 0 : index
    %c0_156 = arith.constant 0 : index
    %472 = vector.load %arg6[%c1_154, %c0_155, %c0_156] : memref<2x128x32xf32, #tpu.memory_space<vmem>>, vector<1x128x32xf32>
    %473 = vector.shape_cast %472 : vector<1x128x32xf32> to vector<128x32xf32>
    %cst_157 = arith.constant dense<0.000000e+00> : vector<16x32xf32>
    %474 = tpu.matmul %471, %473, %cst_157 {dimension_numbers = #tpu.dot_dimension_numbers<[1], [0], [0], [1], [0, 0, 1, 1], [], []>} : vector<16x128xf32>, vector<128x32xf32>, vector<16x32xf32> -> vector<16x32xf32>
    %c16 = arith.constant 16 : index
    %c0_158 = arith.constant 0 : index
    %475 = vector.load %arg8[%c16, %c0_158] : memref<24x128xf32, #tpu.memory_space<vmem>>, vector<1x32xf32>
    %476 = vector.broadcast %475 : vector<1x32xf32> to vector<16x32xf32>
    %477 = arith.addf %474, %476 : vector<16x32xf32>
    %478 = arith.addf %457, %477 : vector<16x32xf32>
    %c17 = arith.constant 17 : index
    %c0_159 = arith.constant 0 : index
    %479 = vector.load %arg8[%c17, %c0_159] : memref<24x128xf32, #tpu.memory_space<vmem>>, vector<1x32xf32>
    %c18 = arith.constant 18 : index
    %c0_160 = arith.constant 0 : index
    %480 = vector.load %arg8[%c18, %c0_160] : memref<24x128xf32, #tpu.memory_space<vmem>>, vector<1x32xf32>
    %cst_161 = arith.constant dense<0.000000e+00> : vector<16xf32>
    %481 = vector.multi_reduction <add>, %478, %cst_161 [1] : vector<16x32xf32> to vector<16xf32>
    %482 = vector.shape_cast %481 : vector<16xf32> to vector<16x1xf32>
    %cst_162 = arith.constant 3.200000e+01 : f32
    %483 = vector.broadcast %cst_162 : f32 to vector<16x1xf32>
    %484 = arith.divf %482, %483 : vector<16x1xf32>
    %485 = vector.broadcast %484 : vector<16x1xf32> to vector<16x32xf32>
    %486 = arith.subf %478, %485 : vector<16x32xf32>
    %487 = arith.mulf %486, %486 : vector<16x32xf32>
    %cst_163 = arith.constant dense<0.000000e+00> : vector<16xf32>
    %488 = vector.multi_reduction <add>, %487, %cst_163 [1] : vector<16x32xf32> to vector<16xf32>
    %489 = vector.shape_cast %488 : vector<16xf32> to vector<16x1xf32>
    %cst_164 = arith.constant 3.200000e+01 : f32
    %490 = vector.broadcast %cst_164 : f32 to vector<16x1xf32>
    %491 = arith.divf %489, %490 : vector<16x1xf32>
    %492 = vector.broadcast %484 : vector<16x1xf32> to vector<16x32xf32>
    %493 = arith.subf %478, %492 : vector<16x32xf32>
    %cst_165 = arith.constant 9.99999996E-13 : f32
    %494 = vector.broadcast %cst_165 : f32 to vector<16x1xf32>
    %495 = arith.addf %491, %494 : vector<16x1xf32>
    %496 = math.rsqrt %495 : vector<16x1xf32>
    %497 = vector.broadcast %496 : vector<16x1xf32> to vector<16x32xf32>
    %498 = arith.mulf %493, %497 : vector<16x32xf32>
    %499 = vector.broadcast %479 : vector<1x32xf32> to vector<16x32xf32>
    %500 = arith.mulf %498, %499 : vector<16x32xf32>
    %501 = vector.broadcast %480 : vector<1x32xf32> to vector<16x32xf32>
    %502 = arith.addf %500, %501 : vector<16x32xf32>
    %503 = tpu.iota {dimensions = array<i32: 1>} : vector<2x16xi32>
    %504 = tpu.iota {dimensions = array<i32: 0>} : vector<2x16xi32>
    %c8_i32 = arith.constant 8 : i32
    %505 = vector.broadcast %c8_i32 : i32 to vector<2x16xi32>
    %506 = arith.muli %504, %505 : vector<2x16xi32>
    %507 = arith.cmpi eq, %503, %506 : vector<2x16xi32>
    %cst_166 = arith.constant 1.000000e+00 : f32
    %cst_167 = arith.constant 0.000000e+00 : f32
    %508 = vector.broadcast %cst_166 : f32 to vector<2x16xf32>
    %509 = vector.broadcast %cst_167 : f32 to vector<2x16xf32>
    %510 = arith.select %507, %508, %509 : vector<2x16xi1>, vector<2x16xf32>
    %cst_168 = arith.constant dense<0.000000e+00> : vector<2x32xf32>
    %511 = tpu.matmul %510, %502, %cst_168 {dimension_numbers = #tpu.dot_dimension_numbers<[1], [0], [0], [1], [0, 0, 1, 1], [], []>} : vector<2x16xf32>, vector<16x32xf32>, vector<2x32xf32> -> vector<2x32xf32>
    %c0_169 = arith.constant 0 : index
    %c0_170 = arith.constant 0 : index
    %512 = vector.load %arg7[%c0_169, %c0_170] : memref<32x32xf32, #tpu.memory_space<vmem>>, vector<32x32xf32>
    %cst_171 = arith.constant dense<0.000000e+00> : vector<2x32xf32>
    %513 = tpu.matmul %511, %512, %cst_171 {dimension_numbers = #tpu.dot_dimension_numbers<[1], [0], [0], [1], [0, 0, 1, 1], [], []>} : vector<2x32xf32>, vector<32x32xf32>, vector<2x32xf32> -> vector<2x32xf32>
    %c2_172 = arith.constant 2 : index
    %c0_173 = arith.constant 0 : index
    %514 = vector.load %arg8[%c2_172, %c0_173] : memref<24x128xf32, #tpu.memory_space<vmem>>, vector<1x32xf32>
    %515 = vector.broadcast %514 : vector<1x32xf32> to vector<2x32xf32>
    %516 = arith.addf %513, %515 : vector<2x32xf32>
    %517 = math.tanh %516 : vector<2x32xf32>
    %c0_174 = arith.constant 0 : index
    %c0_175 = arith.constant 0 : index
    %518 = vector.load %arg9[%c0_174, %c0_175] : memref<2x32xf32, #tpu.memory_space<vmem>>, vector<2x32xf32>
    tpu.vector_store %arg9[%c0_174, %c0_175], %517 {strides = array<i32>} : memref<2x32xf32, #tpu.memory_space<vmem>>, vector<2x32xf32>,
    return
  }
}

</mosaic_0001>

<llo_original>
// kernel: model_with_pooler.1
$region0: #{model_with_pooler.1}
  #allocation0 [shape = 'u32[]', space=smem, size = 0x4, offset = 0x4, fixed_abs, tag = 'smem constant byte address 0x4 - core index']
  #allocation1 [shape = 'u32[144,128]{1,0:T(1,128)}', space=vmem, size = 0x12000, scoped, tag = 'internal scratch']
  %s0 = inlined_call_operand.vmem [shape: s32[16,3], index: 0, kind: input, shape index: {}]
  %s1 = inlined_call_operand.vmem [shape: f32[2,8], index: 1, kind: input, shape index: {}]
  %s2 = inlined_call_operand.vmem [shape: f32[128,32], index: 2, kind: input, shape index: {}]
  %s3 = inlined_call_operand.vmem [shape: f32[2,32,96], index: 3, kind: input, shape index: {}]
  %s4 = inlined_call_operand.vmem [shape: f32[2,32,32], index: 4, kind: input, shape index: {}]
  %s5 = inlined_call_operand.vmem [shape: f32[2,32,128], index: 5, kind: input, shape index: {}]
  %s6 = inlined_call_operand.vmem [shape: f32[2,128,32], index: 6, kind: input, shape index: {}]
  %s7 = inlined_call_operand.vmem [shape: f32[32,32], index: 7, kind: input, shape index: {}]
  %s8 = inlined_call_operand.vmem [shape: f32[24,128], index: 8, kind: input, shape index: {}]
  %s9 = inlined_call_operand.hbm [shape: f32[2,32], index: 9, kind: output, shape index: {}]
  %s10 = sld [smem:[#allocation0]]
  $region46: #{model_with_pooler.1} parent=0
    _
  %s12 = ssub.s32 1, %s10
  %s13 = scalar_select 0, %s12, %s10
  $region1: #{model_with_pooler.1} parent=0
    #allocation2 [shape = 'u8[1024]{0}', space=vmem, size = 0x400, scoped, tag = 'output window, operand 0, single buffered']
    #allocation3 [shape = 's32[1]{0}', space=sflag, size = 0x4, scoped, tag = 'scoped memory for model_with_pooler.1']
    %14 = vsyncpa [#allocation3], 0
    // Predicated region
    $region2: #{model_with_pooler.1} parent=1 // pred_check
      _
    $region3: #{model_with_pooler.1} parent=1 // pred_check_branch
      %16 = sbr.rel (0) target = $region5
    $region4: #{model_with_pooler.1} parent=1 // pred_region
      _
    $region5: #{model_with_pooler.1} parent=1 // pred_fallthru
      _
    // Predicated region
    $region6: #{model_with_pooler.1} parent=1 // pred_check
      _
    $region7: #{model_with_pooler.1} parent=1 // pred_check_branch
      %18 = sbr.rel (0) target = $region9
    $region8: #{model_with_pooler.1} parent=1 // pred_region
      _
    $region9: #{model_with_pooler.1} parent=1 // pred_fallthru
      _
    // Predicated region
    $region10: #{model_with_pooler.1} parent=1 // pred_check
      _
    $region11: #{model_with_pooler.1} parent=1 // pred_check_branch
      %20 = sbr.rel (0) target = $region13
    $region12: #{model_with_pooler.1} parent=1 // pred_region
      _
    $region13: #{model_with_pooler.1} parent=1 // pred_fallthru
      _
    // Predicated region
    $region14: #{model_with_pooler.1} parent=1 // pred_check
      _
    $region15: #{model_with_pooler.1} parent=1 // pred_check_branch
      %22 = sbr.rel (0) target = $region17
    $region16: #{model_with_pooler.1} parent=1 // pred_region
      _
    $region17: #{model_with_pooler.1} parent=1 // pred_fallthru
      _
    // Predicated region
    $region18: #{model_with_pooler.1} parent=1 // pred_check
      _
    $region19: #{model_with_pooler.1} parent=1 // pred_check_branch
      %24 = sbr.rel (0) target = $region21
    $region20: #{model_with_pooler.1} parent=1 // pred_region
      _
    $region21: #{model_with_pooler.1} parent=1 // pred_fallthru
      _
    // Predicated region
    $region22: #{model_with_pooler.1} parent=1 // pred_check
      _
    $region23: #{model_with_pooler.1} parent=1 // pred_check_branch
      %26 = sbr.rel (0) target = $region25
    $region24: #{model_with_pooler.1} parent=1 // pred_region
      _
    $region25: #{model_with_pooler.1} parent=1 // pred_fallthru
      _
    // Predicated region
    $region26: #{model_with_pooler.1} parent=1 // pred_check
      _
    $region27: #{model_with_pooler.1} parent=1 // pred_check_branch
      %28 = sbr.rel (0) target = $region29
    $region28: #{model_with_pooler.1} parent=1 // pred_region
      _
    $region29: #{model_with_pooler.1} parent=1 // pred_fallthru
      _
    // Predicated region
    $region30: #{model_with_pooler.1} parent=1 // pred_check
      _
    $region31: #{model_with_pooler.1} parent=1 // pred_check_branch
      %30 = sbr.rel (0) target = $region33
    $region32: #{model_with_pooler.1} parent=1 // pred_region
      _
    $region33: #{model_with_pooler.1} parent=1 // pred_fallthru
      _
    // Predicated region
    $region34: #{model_with_pooler.1} parent=1 // pred_check
      _
    $region35: #{model_with_pooler.1} parent=1 // pred_check_branch
      %32 = sbr.rel (0) target = $region37
    $region36: #{model_with_pooler.1} parent=1 // pred_region
      _
    $region37: #{model_with_pooler.1} parent=1 // pred_fallthru
      _
    %v33 = vlaneseq
    %v34 = vand.u32 %v33, 127
    %v35 = vld [vmem:[%s0] sm:$0xff]
    %v36 = vld [vmem:[%s0 + $0x8] sm:$0xff]
    %37 = vset.pattern.permute.xlu0 0
    %38 = vperm.xlu0 %37, %v35
    %v39 = vpop.permute.xlu0 %38
    %40 = vset.pattern.permute.xlu0 0
    %41 = vperm.xlu0 %40, %v36
    %v42 = vpop.permute.xlu0 %41
    %vm43 = vcmp.eq.s32.totalorder %v34, %v39
    %vm44 = vcmp.eq.s32.totalorder %v34, %v42
    %v45 = vsel %vm43, 1.0, 0.0
    %v46 = vsel %vm44, 1.0, 0.0
    %47 = vset.pattern.permute.xlu0 1
    %48 = vperm.xlu0 %47, %v35
    %v49 = vpop.permute.xlu0 %48
    %50 = vset.pattern.permute.xlu0 1
    %51 = vperm.xlu0 %50, %v36
    %v52 = vpop.permute.xlu0 %51
    %vm53 = vcmp.eq.s32.totalorder %v34, %v49
    %vm54 = vcmp.eq.s32.totalorder %v34, %v52
    %v55 = vsel %vm53, 1.0, 0.0
    %v56 = vsel %vm54, 1.0, 0.0
    %v57 = vadd.f32 %v45, %v55
    %v58 = vadd.f32 %v46, %v56
    %59 = vset.pattern.permute.xlu0 2
    %60 = vperm.xlu0 %59, %v35
    %v61 = vpop.permute.xlu0 %60
    %62 = vset.pattern.permute.xlu0 2
    %63 = vperm.xlu0 %62, %v36
    %v64 = vpop.permute.xlu0 %63
    %vm65 = vcmp.eq.s32.totalorder %v34, %v61
    %vm66 = vcmp.eq.s32.totalorder %v34, %v64
    %v67 = vsel %vm65, 1.0, 0.0
    %v68 = vsel %vm66, 1.0, 0.0
    %v69 = vadd.f32 %v57, %v67
    %v70 = vadd.f32 %v58, %v68
    %v71 = vld [vmem:[%s2] sm:$0xff]
    %v72 = vld [vmem:[%s2 + $0x8] sm:$0xff]
    %v73 = vld [vmem:[%s2 + $0x10] sm:$0xff]
    %v74 = vld [vmem:[%s2 + $0x18] sm:$0xff]
    %v75 = vld [vmem:[%s2 + $0x20] sm:$0xff]
    %v76 = vld [vmem:[%s2 + $0x28] sm:$0xff]
    %v77 = vld [vmem:[%s2 + $0x30] sm:$0xff]
    %v78 = vld [vmem:[%s2 + $0x38] sm:$0xff]
    %v79 = vld [vmem:[%s2 + $0x40] sm:$0xff]
    %v80 = vld [vmem:[%s2 + $0x48] sm:$0xff]
    %v81 = vld [vmem:[%s2 + $0x50] sm:$0xff]
    %v82 = vld [vmem:[%s2 + $0x58] sm:$0xff]
    %v83 = vld [vmem:[%s2 + $0x60] sm:$0xff]
    %v84 = vld [vmem:[%s2 + $0x68] sm:$0xff]
    %v85 = vld [vmem:[%s2 + $0x70] sm:$0xff]
    %v86 = vld [vmem:[%s2 + $0x78] sm:$0xff]
    %87 = vmatprep.subr.mxu0 0.0
    %88 = vmatpush1.msra.mxu0 %v86
    %89 = vmatprep.subr.mxu0 0.0
    %90 = vmatpush1.msra.mxu0 %v85
    %91 = vmatprep.subr.mxu0 0.0
    %92 = vmatpush1.msra.mxu0 %v84
    %93 = vmatprep.subr.mxu0 0.0
    %94 = vmatpush1.msra.mxu0 %v83
    %95 = vmatprep.subr.mxu0 0.0
    %96 = vmatpush1.msra.mxu0 %v82
    %97 = vmatprep.subr.mxu0 0.0
    %98 = vmatpush1.msra.mxu0 %v81
    %99 = vmatprep.subr.mxu0 0.0
    %100 = vmatpush1.msra.mxu0 %v80
    %101 = vmatprep.subr.mxu0 0.0
    %102 = vmatpush1.msra.mxu0 %v79
    %103 = vmatprep.subr.mxu0 0.0
    %104 = vmatpush1.msra.mxu0 %v78
    %105 = vmatprep.subr.mxu0 0.0
    %106 = vmatpush1.msra.mxu0 %v77
    %107 = vmatprep.subr.mxu0 0.0
    %108 = vmatpush1.msra.mxu0 %v76
    %109 = vmatprep.subr.mxu0 0.0
    %110 = vmatpush1.msra.mxu0 %v75
    %111 = vmatprep.subr.mxu0 0.0
    %112 = vmatpush1.msra.mxu0 %v74
    %113 = vmatprep.subr.mxu0 0.0
    %114 = vmatpush1.msra.mxu0 %v73
    %115 = vmatprep.subr.mxu0 0.0
    %116 = vmatpush1.msra.mxu0 %v72
    %117 = vmatprep.subr.mxu0 0.0
    %118 = vmatpush1.msra.mxu0 %v71
    %119 = vmatprep.subr.mxu0 0.0
    %120 = vmatpush2.msra.mxu0 0.0
    %121 = vmatprep.subr.mxu0 0.0
    %122 = vmatpush2.msra.mxu0 0.0
    %123 = vmatprep.subr.mxu0 0.0
    %124 = vmatpush2.msra.mxu0 0.0
    %125 = vmatprep.subr.mxu0 0.0
    %126 = vmatpush2.msra.mxu0 0.0
    %127 = vmatprep.subr.mxu0 0.0
    %128 = vmatpush2.msra.mxu0 0.0
    %129 = vmatprep.subr.mxu0 0.0
    %130 = vmatpush2.msra.mxu0 0.0
    %131 = vmatprep.subr.mxu0 0.0
    %132 = vmatpush2.msra.mxu0 0.0
    %133 = vmatprep.subr.mxu0 0.0
    %134 = vmatpush2.msra.mxu0 0.0
    %135 = vmatprep.subr.mxu0 0.0
    %136 = vmatpush2.msra.mxu0 0.0
    %137 = vmatprep.subr.mxu0 0.0
    %138 = vmatpush2.msra.mxu0 0.0
    %139 = vmatprep.subr.mxu0 0.0
    %140 = vmatpush2.msra.mxu0 0.0
    %141 = vmatprep.subr.mxu0 0.0
    %142 = vmatpush2.msra.mxu0 0.0
    %143 = vmatprep.subr.mxu0 0.0
    %144 = vmatpush2.msra.mxu0 0.0
    %145 = vmatprep.subr.mxu0 0.0
    %146 = vmatpush2.msra.mxu0 0.0
    %147 = vmatprep.subr.mxu0 0.0
    %148 = vmatpush2.msra.mxu0 0.0
    %149 = vmatprep.subr.mxu0 0.0
    %150 = vmatpush2.msra.mxu0 0.0
    %151 = vmatprep.mubr.f32.mxu0 0.0
    %152 = vmatmul.mubr.f32.gmra.mxu0 %v69
    %v153 = vpop.f32.mrf.mxu0
    %v154 = vadd.f32 0.0, %v153
    %v155 = vpop.f32.mrf.mxu0
    %156 = vmatprep.mubr.f32.mxu0 0.0
    %157 = vmatmul.mubr.f32.gmra.mxu0 %v70
    %v158 = vpop.f32.mrf.mxu0
    %v159 = vadd.f32 0.0, %v158
    %v160 = vpop.f32.mrf.mxu0
    %161 = vdwg.mxu0
    %v162 = vld [vmem:[%s8] sm:$0x1]
    %v163 = vld [vmem:[%s8 + $0x1] sm:$0x1]
    %vm164 = vcmask 261120
    %v165 = vsel %vm164, %v154, 0.0
    %166 = vadd.xlane.f32.xlu0 %v165
    %v167 = vpop.xlane.xlu0 %166
    %v168 = vsel %vm164, %v159, 0.0
    %169 = vadd.xlane.f32.xlu0 %v168
    %v170 = vpop.xlane.xlu0 %169
    %v171 = vrcp.pop 32.0
    %v172 = vmul.f32 %v167, %v171
    %v173 = vmul.f32 %v170, %v171
    %v174 = vsub.f32 %v154, %v172
    %v175 = vsub.f32 %v159, %v173
    %v176 = vmul.f32 %v174, %v174
    %v177 = vmul.f32 %v175, %v175
    %v178 = vsel %vm164, %v176, 0.0
    %179 = vadd.xlane.f32.xlu0 %v178
    %v180 = vpop.xlane.xlu0 %179
    %v181 = vsel %vm164, %v177, 0.0
    %182 = vadd.xlane.f32.xlu0 %v181
    %v183 = vpop.xlane.xlu0 %182
    %v184 = vmul.f32 %v180, %v171
    %v185 = vmul.f32 %v183, %v171
    %v186 = vadd.f32 %v184, 1e-12
    %v187 = vadd.f32 %v185, 1e-12
    %v188 = vrsqrt.pop %v186
    %v189 = vrsqrt.pop %v187
    %v190 = vmul.f32 %v174, %v188
    %v191 = vmul.f32 %v175, %v189
    %v192 = vlaneseq
    %v193 = vshrl.u32 %v192, 7
    %v194 = vsub.s32 0, %v193
    %v195 = vrot.slane %v162, %v194
    %v196 = vmul.f32 %v190, %v195
    %v197 = vmul.f32 %v191, %v195
    %v198 = vlaneseq
    %v199 = vshrl.u32 %v198, 7
    %v200 = vsub.s32 0, %v199
    %v201 = vrot.slane %v163, %v200
    %v202 = vadd.f32 %v196, %v201
    %v203 = vadd.f32 %v197, %v201
    %v204 = vld [vmem:[%s3] sm:$0xff]
    %v205 = vld [vmem:[%s3 + $0x8] sm:$0xff]
    %v206 = vld [vmem:[%s3 + $0x10] sm:$0xff]
    %v207 = vld [vmem:[%s3 + $0x18] sm:$0xff]
    %v208 = vld [vmem:[%s8 + $0x3] sm:$0x1]
    %v209 = vlaneseq
    %v210 = vshrl.u32 %v209, 7
    %v211 = vsub.s32 0, %v210
    %v212 = vrot.slane %v208, %v211
    %v214 = vsel %vm164, %v202, 0
    %v217 = vsel %vm164, %v203, 0
    %219 = vmatprep.subr.mxu0 0.0
    %220 = vmatpush1.msra.mxu0 0.0
    %221 = vmatprep.subr.mxu0 0.0
    %222 = vmatpush1.msra.mxu0 0.0
    %223 = vmatprep.subr.mxu0 0.0
    %224 = vmatpush1.msra.mxu0 0.0
    %225 = vmatprep.subr.mxu0 0.0
    %226 = vmatpush1.msra.mxu0 0.0
    %227 = vmatprep.subr.mxu0 0.0
    %228 = vmatpush1.msra.mxu0 0.0
    %229 = vmatprep.subr.mxu0 0.0
    %230 = vmatpush1.msra.mxu0 0.0
    %231 = vmatprep.subr.mxu0 0.0
    %232 = vmatpush1.msra.mxu0 0.0
    %233 = vmatprep.subr.mxu0 0.0
    %234 = vmatpush1.msra.mxu0 0.0
    %235 = vmatprep.subr.mxu0 0.0
    %236 = vmatpush1.msra.mxu0 0.0
    %237 = vmatprep.subr.mxu0 0.0
    %238 = vmatpush1.msra.mxu0 0.0
    %239 = vmatprep.subr.mxu0 0.0
    %240 = vmatpush1.msra.mxu0 0.0
    %241 = vmatprep.subr.mxu0 0.0
    %242 = vmatpush1.msra.mxu0 0.0
    %243 = vmatprep.subr.mxu0 0.0
    %244 = vmatpush1.msra.mxu0 %v207
    %245 = vmatprep.subr.mxu0 0.0
    %246 = vmatpush1.msra.mxu0 %v206
    %247 = vmatprep.subr.mxu0 0.0
    %248 = vmatpush1.msra.mxu0 %v205
    %249 = vmatprep.subr.mxu0 0.0
    %250 = vmatpush1.msra.mxu0 %v204
    %251 = vmatprep.subr.mxu0 0.0
    %252 = vmatpush2.msra.mxu0 0.0
    %253 = vmatprep.subr.mxu0 0.0
    %254 = vmatpush2.msra.mxu0 0.0
    %255 = vmatprep.subr.mxu0 0.0
    %256 = vmatpush2.msra.mxu0 0.0
    %257 = vmatprep.subr.mxu0 0.0
    %258 = vmatpush2.msra.mxu0 0.0
    %259 = vmatprep.subr.mxu0 0.0
    %260 = vmatpush2.msra.mxu0 0.0
    %261 = vmatprep.subr.mxu0 0.0
    %262 = vmatpush2.msra.mxu0 0.0
    %263 = vmatprep.subr.mxu0 0.0
    %264 = vmatpush2.msra.mxu0 0.0
    %265 = vmatprep.subr.mxu0 0.0
    %266 = vmatpush2.msra.mxu0 0.0
    %267 = vmatprep.subr.mxu0 0.0
    %268 = vmatpush2.msra.mxu0 0.0
    %269 = vmatprep.subr.mxu0 0.0
    %270 = vmatpush2.msra.mxu0 0.0
    %271 = vmatprep.subr.mxu0 0.0
    %272 = vmatpush2.msra.mxu0 0.0
    %273 = vmatprep.subr.mxu0 0.0
    %274 = vmatpush2.msra.mxu0 0.0
    %275 = vmatprep.subr.mxu0 0.0
    %276 = vmatpush2.msra.mxu0 0.0
    %277 = vmatprep.subr.mxu0 0.0
    %278 = vmatpush2.msra.mxu0 0.0
    %279 = vmatprep.subr.mxu0 0.0
    %280 = vmatpush2.msra.mxu0 0.0
    %281 = vmatprep.subr.mxu0 0.0
    %282 = vmatpush2.msra.mxu0 0.0
    %283 = vmatprep.mubr.f32.mxu0 0.0
    %284 = vmatmul.mubr.f32.gmra.mxu0 %v214
    %v285 = vpop.f32.mrf.mxu0
    %v286 = vadd.f32 %v212, %v285
    %v287 = vpop.f32.mrf.mxu0
    %288 = vmatprep.mubr.f32.mxu0 0.0
    %289 = vmatmul.mubr.f32.gmra.mxu0 %v217
    %v290 = vpop.f32.mrf.mxu0
    %v291 = vadd.f32 %v212, %v290
    %v292 = vpop.f32.mrf.mxu0
    %293 = vdwg.mxu0
    %v294 = vld [vmem:[%s1] sm:$0x1]
    %v295 = vlaneseq
    %v296 = vshrl.u32 %v295, 7
    %v297 = vsub.s32 0, %v296
    %v298 = vrot.slane %v294, %v297
    %300 = vrot.lane.b32.xlu0 %v286, 96
    %v301 = vpop.permute.xlu0 %300
    %vm302 = vcmask 64512
    %v303 = vsel %vm302, %v286, 0
    %v305 = vsel %vm302, %v301, 0
    %307 = vmatprep.subr.mxu0 0.0
    %308 = vmatpush1.xpose.msra.mxu0 0.0
    %309 = vmatprep.subr.mxu0 0.0
    %310 = vmatpush1.xpose.msra.mxu0 0.0
    %311 = vmatprep.subr.mxu0 0.0
    %312 = vmatpush1.xpose.msra.mxu0 0.0
    %313 = vmatprep.subr.mxu0 0.0
    %314 = vmatpush1.xpose.msra.mxu0 0.0
    %315 = vmatprep.subr.mxu0 0.0
    %316 = vmatpush1.xpose.msra.mxu0 0.0
    %317 = vmatprep.subr.mxu0 0.0
    %318 = vmatpush1.xpose.msra.mxu0 0.0
    %319 = vmatprep.subr.mxu0 0.0
    %320 = vmatpush1.xpose.msra.mxu0 0.0
    %321 = vmatprep.subr.mxu0 0.0
    %322 = vmatpush1.xpose.msra.mxu0 0.0
    %323 = vmatprep.subr.mxu0 0.0
    %324 = vmatpush1.xpose.msra.mxu0 0.0
    %325 = vmatprep.subr.mxu0 0.0
    %326 = vmatpush1.xpose.msra.mxu0 0.0
    %327 = vmatprep.subr.mxu0 0.0
    %328 = vmatpush1.xpose.msra.mxu0 0.0
    %329 = vmatprep.subr.mxu0 0.0
    %330 = vmatpush1.xpose.msra.mxu0 0.0
    %331 = vmatprep.subr.mxu0 0.0
    %332 = vmatpush1.xpose.msra.mxu0 0.0
    %333 = vmatprep.subr.mxu0 0.0
    %334 = vmatpush1.xpose.msra.mxu0 0.0
    %335 = vmatprep.subr.mxu0 0.0
    %336 = vmatpush1.xpose.msra.mxu0 0.0
    %337 = vmatprep.subr.mxu0 0.0
    %338 = vmatpush1.xpose.msra.mxu0 %v305
    %339 = vmatprep.subr.mxu0 0.0
    %340 = vmatpush2.xpose.msra.mxu0 0.0
    %341 = vmatprep.subr.mxu0 0.0
    %342 = vmatpush2.xpose.msra.mxu0 0.0
    %343 = vmatprep.subr.mxu0 0.0
    %344 = vmatpush2.xpose.msra.mxu0 0.0
    %345 = vmatprep.subr.mxu0 0.0
    %346 = vmatpush2.xpose.msra.mxu0 0.0
    %347 = vmatprep.subr.mxu0 0.0
    %348 = vmatpush2.xpose.msra.mxu0 0.0
    %349 = vmatprep.subr.mxu0 0.0
    %350 = vmatpush2.xpose.msra.mxu0 0.0
    %351 = vmatprep.subr.mxu0 0.0
    %352 = vmatpush2.xpose.msra.mxu0 0.0
    %353 = vmatprep.subr.mxu0 0.0
    %354 = vmatpush2.xpose.msra.mxu0 0.0
    %355 = vmatprep.subr.mxu0 0.0
    %356 = vmatpush2.xpose.msra.mxu0 0.0
    %357 = vmatprep.subr.mxu0 0.0
    %358 = vmatpush2.xpose.msra.mxu0 0.0
    %359 = vmatprep.subr.mxu0 0.0
    %360 = vmatpush2.xpose.msra.mxu0 0.0
    %361 = vmatprep.subr.mxu0 0.0
    %362 = vmatpush2.xpose.msra.mxu0 0.0
    %363 = vmatprep.subr.mxu0 0.0
    %364 = vmatpush2.xpose.msra.mxu0 0.0
    %365 = vmatprep.subr.mxu0 0.0
    %366 = vmatpush2.xpose.msra.mxu0 0.0
    %367 = vmatprep.subr.mxu0 0.0
    %368 = vmatpush2.xpose.msra.mxu0 0.0
    %369 = vmatprep.subr.mxu0 0.0
    %370 = vmatpush2.xpose.msra.mxu0 0.0
    %371 = vmatprep.mubr.f32.mxu0 0.0
    %372 = vmatmul.mubr.f32.gmra.mxu0 %v303
    %v373 = vpop.f32.mrf.mxu0
    %v374 = vadd.f32 %v298, %v373
    %v375 = vpop.f32.mrf.mxu0
    %376 = vdwg.mxu0
    %v377 = vsel %vm302, %v374, -inf
    %378 = vmax.xlane.f32.xlu0 %v377
    %v379 = vpop.xlane.xlu0 %378
    %v380 = vsub.f32 %v374, %v379
    %v381 = vmul.f32 %v380, 1.442695
    %v382 = vpow.pop %v381
    %v383 = vsel %vm302, %v382, 0.0
    %384 = vadd.xlane.f32.xlu0 %v383
    %v385 = vpop.xlane.xlu0 %384
    %v386 = vrcp.pop %v385
    %v387 = vmul.f32 %v382, %v386
    %388 = vrot.lane.b32.xlu0 %v286, 64
    %v389 = vpop.permute.xlu0 %388
    %v392 = vsel %vm302, %v387, 0
    %394 = vmatprep.subr.mxu0 0.0
    %395 = vmatpush1.msra.mxu0 0.0
    %396 = vmatprep.subr.mxu0 0.0
    %397 = vmatpush1.msra.mxu0 0.0
    %398 = vmatprep.subr.mxu0 0.0
    %399 = vmatpush1.msra.mxu0 0.0
    %400 = vmatprep.subr.mxu0 0.0
    %401 = vmatpush1.msra.mxu0 0.0
    %402 = vmatprep.subr.mxu0 0.0
    %403 = vmatpush1.msra.mxu0 0.0
    %404 = vmatprep.subr.mxu0 0.0
    %405 = vmatpush1.msra.mxu0 0.0
    %406 = vmatprep.subr.mxu0 0.0
    %407 = vmatpush1.msra.mxu0 0.0
    %408 = vmatprep.subr.mxu0 0.0
    %409 = vmatpush1.msra.mxu0 0.0
    %410 = vmatprep.subr.mxu0 0.0
    %411 = vmatpush1.msra.mxu0 0.0
    %412 = vmatprep.subr.mxu0 0.0
    %413 = vmatpush1.msra.mxu0 0.0
    %414 = vmatprep.subr.mxu0 0.0
    %415 = vmatpush1.msra.mxu0 0.0
    %416 = vmatprep.subr.mxu0 0.0
    %417 = vmatpush1.msra.mxu0 0.0
    %418 = vmatprep.subr.mxu0 0.0
    %419 = vmatpush1.msra.mxu0 0.0
    %420 = vmatprep.subr.mxu0 0.0
    %421 = vmatpush1.msra.mxu0 0.0
    %422 = vmatprep.subr.mxu0 0.0
    %423 = vmatpush1.msra.mxu0 0.0
    %424 = vmatprep.subr.mxu0 0.0
    %425 = vmatpush1.msra.mxu0 %v389
    %426 = vmatprep.subr.mxu0 0.0
    %427 = vmatpush2.msra.mxu0 0.0
    %428 = vmatprep.subr.mxu0 0.0
    %429 = vmatpush2.msra.mxu0 0.0
    %430 = vmatprep.subr.mxu0 0.0
    %431 = vmatpush2.msra.mxu0 0.0
    %432 = vmatprep.subr.mxu0 0.0
    %433 = vmatpush2.msra.mxu0 0.0
    %434 = vmatprep.subr.mxu0 0.0
    %435 = vmatpush2.msra.mxu0 0.0
    %436 = vmatprep.subr.mxu0 0.0
    %437 = vmatpush2.msra.mxu0 0.0
    %438 = vmatprep.subr.mxu0 0.0
    %439 = vmatpush2.msra.mxu0 0.0
    %440 = vmatprep.subr.mxu0 0.0
    %441 = vmatpush2.msra.mxu0 0.0
    %442 = vmatprep.subr.mxu0 0.0
    %443 = vmatpush2.msra.mxu0 0.0
    %444 = vmatprep.subr.mxu0 0.0
    %445 = vmatpush2.msra.mxu0 0.0
    %446 = vmatprep.subr.mxu0 0.0
    %447 = vmatpush2.msra.mxu0 0.0
    %448 = vmatprep.subr.mxu0 0.0
    %449 = vmatpush2.msra.mxu0 0.0
    %450 = vmatprep.subr.mxu0 0.0
    %451 = vmatpush2.msra.mxu0 0.0
    %452 = vmatprep.subr.mxu0 0.0
    %453 = vmatpush2.msra.mxu0 0.0
    %454 = vmatprep.subr.mxu0 0.0
    %455 = vmatpush2.msra.mxu0 0.0
    %456 = vmatprep.subr.mxu0 0.0
    %457 = vmatpush2.msra.mxu0 0.0
    %458 = vmatprep.mubr.f32.mxu0 0.0
    %459 = vmatmul.mubr.f32.gmra.mxu0 %v392
    %v460 = vpop.f32.mrf.mxu0
    %v461 = vadd.f32 0.0, %v460
    %v462 = vpop.f32.mrf.mxu0
    %463 = vdwg.mxu0
    %464 = vrot.lane.b32.xlu0 %v286, 120
    %v465 = vpop.permute.xlu0 %464
    %466 = vrot.lane.b32.xlu0 %v286, 88
    %v467 = vpop.permute.xlu0 %466
    %v468 = vsel %vm302, %v465, 0
    %v470 = vsel %vm302, %v467, 0
    %472 = vmatprep.subr.mxu0 0.0
    %473 = vmatpush1.xpose.msra.mxu0 0.0
    %474 = vmatprep.subr.mxu0 0.0
    %475 = vmatpush1.xpose.msra.mxu0 0.0
    %476 = vmatprep.subr.mxu0 0.0
    %477 = vmatpush1.xpose.msra.mxu0 0.0
    %478 = vmatprep.subr.mxu0 0.0
    %479 = vmatpush1.xpose.msra.mxu0 0.0
    %480 = vmatprep.subr.mxu0 0.0
    %481 = vmatpush1.xpose.msra.mxu0 0.0
    %482 = vmatprep.subr.mxu0 0.0
    %483 = vmatpush1.xpose.msra.mxu0 0.0
    %484 = vmatprep.subr.mxu0 0.0
    %485 = vmatpush1.xpose.msra.mxu0 0.0
    %486 = vmatprep.subr.mxu0 0.0
    %487 = vmatpush1.xpose.msra.mxu0 0.0
    %488 = vmatprep.subr.mxu0 0.0
    %489 = vmatpush1.xpose.msra.mxu0 0.0
    %490 = vmatprep.subr.mxu0 0.0
    %491 = vmatpush1.xpose.msra.mxu0 0.0
    %492 = vmatprep.subr.mxu0 0.0
    %493 = vmatpush1.xpose.msra.mxu0 0.0
    %494 = vmatprep.subr.mxu0 0.0
    %495 = vmatpush1.xpose.msra.mxu0 0.0
    %496 = vmatprep.subr.mxu0 0.0
    %497 = vmatpush1.xpose.msra.mxu0 0.0
    %498 = vmatprep.subr.mxu0 0.0
    %499 = vmatpush1.xpose.msra.mxu0 0.0
    %500 = vmatprep.subr.mxu0 0.0
    %501 = vmatpush1.xpose.msra.mxu0 0.0
    %502 = vmatprep.subr.mxu0 0.0
    %503 = vmatpush1.xpose.msra.mxu0 %v470
    %504 = vmatprep.subr.mxu0 0.0
    %505 = vmatpush2.xpose.msra.mxu0 0.0
    %506 = vmatprep.subr.mxu0 0.0
    %507 = vmatpush2.xpose.msra.mxu0 0.0
    %508 = vmatprep.subr.mxu0 0.0
    %509 = vmatpush2.xpose.msra.mxu0 0.0
    %510 = vmatprep.subr.mxu0 0.0
    %511 = vmatpush2.xpose.msra.mxu0 0.0
    %512 = vmatprep.subr.mxu0 0.0
    %513 = vmatpush2.xpose.msra.mxu0 0.0
    %514 = vmatprep.subr.mxu0 0.0
    %515 = vmatpush2.xpose.msra.mxu0 0.0
    %516 = vmatprep.subr.mxu0 0.0
    %517 = vmatpush2.xpose.msra.mxu0 0.0
    %518 = vmatprep.subr.mxu0 0.0
    %519 = vmatpush2.xpose.msra.mxu0 0.0
    %520 = vmatprep.subr.mxu0 0.0
    %521 = vmatpush2.xpose.msra.mxu0 0.0
    %522 = vmatprep.subr.mxu0 0.0
    %523 = vmatpush2.xpose.msra.mxu0 0.0
    %524 = vmatprep.subr.mxu0 0.0
    %525 = vmatpush2.xpose.msra.mxu0 0.0
    %526 = vmatprep.subr.mxu0 0.0
    %527 = vmatpush2.xpose.msra.mxu0 0.0
    %528 = vmatprep.subr.mxu0 0.0
    %529 = vmatpush2.xpose.msra.mxu0 0.0
    %530 = vmatprep.subr.mxu0 0.0
    %531 = vmatpush2.xpose.msra.mxu0 0.0
    %532 = vmatprep.subr.mxu0 0.0
    %533 = vmatpush2.xpose.msra.mxu0 0.0
    %534 = vmatprep.subr.mxu0 0.0
    %535 = vmatpush2.xpose.msra.mxu0 0.0
    %536 = vmatprep.mubr.f32.mxu0 0.0
    %537 = vmatmul.mubr.f32.gmra.mxu0 %v468
    %v538 = vpop.f32.mrf.mxu0
    %v539 = vadd.f32 %v298, %v538
    %v540 = vpop.f32.mrf.mxu0
    %541 = vdwg.mxu0
    %v542 = vsel %vm302, %v539, -inf
    %543 = vmax.xlane.f32.xlu0 %v542
    %v544 = vpop.xlane.xlu0 %543
    %v545 = vsub.f32 %v539, %v544
    %v546 = vmul.f32 %v545, 1.442695
    %v547 = vpow.pop %v546
    %v548 = vsel %vm302, %v547, 0.0
    %549 = vadd.xlane.f32.xlu0 %v548
    %v550 = vpop.xlane.xlu0 %549
    %v551 = vrcp.pop %v550
    %v552 = vmul.f32 %v547, %v551
    %553 = vrot.lane.b32.xlu0 %v286, 56
    %v554 = vpop.permute.xlu0 %553
    %v557 = vsel %vm302, %v552, 0
    %559 = vmatprep.subr.mxu0 0.0
    %560 = vmatpush1.msra.mxu0 0.0
    %561 = vmatprep.subr.mxu0 0.0
    %562 = vmatpush1.msra.mxu0 0.0
    %563 = vmatprep.subr.mxu0 0.0
    %564 = vmatpush1.msra.mxu0 0.0
    %565 = vmatprep.subr.mxu0 0.0
    %566 = vmatpush1.msra.mxu0 0.0
    %567 = vmatprep.subr.mxu0 0.0
    %568 = vmatpush1.msra.mxu0 0.0
    %569 = vmatprep.subr.mxu0 0.0
    %570 = vmatpush1.msra.mxu0 0.0
    %571 = vmatprep.subr.mxu0 0.0
    %572 = vmatpush1.msra.mxu0 0.0
    %573 = vmatprep.subr.mxu0 0.0
    %574 = vmatpush1.msra.mxu0 0.0
    %575 = vmatprep.subr.mxu0 0.0
    %576 = vmatpush1.msra.mxu0 0.0
    %577 = vmatprep.subr.mxu0 0.0
    %578 = vmatpush1.msra.mxu0 0.0
    %579 = vmatprep.subr.mxu0 0.0
    %580 = vmatpush1.msra.mxu0 0.0
    %581 = vmatprep.subr.mxu0 0.0
    %582 = vmatpush1.msra.mxu0 0.0
    %583 = vmatprep.subr.mxu0 0.0
    %584 = vmatpush1.msra.mxu0 0.0
    %585 = vmatprep.subr.mxu0 0.0
    %586 = vmatpush1.msra.mxu0 0.0
    %587 = vmatprep.subr.mxu0 0.0
    %588 = vmatpush1.msra.mxu0 0.0
    %589 = vmatprep.subr.mxu0 0.0
    %590 = vmatpush1.msra.mxu0 %v554
    %591 = vmatprep.subr.mxu0 0.0
    %592 = vmatpush2.msra.mxu0 0.0
    %593 = vmatprep.subr.mxu0 0.0
    %594 = vmatpush2.msra.mxu0 0.0
    %595 = vmatprep.subr.mxu0 0.0
    %596 = vmatpush2.msra.mxu0 0.0
    %597 = vmatprep.subr.mxu0 0.0
    %598 = vmatpush2.msra.mxu0 0.0
    %599 = vmatprep.subr.mxu0 0.0
    %600 = vmatpush2.msra.mxu0 0.0
    %601 = vmatprep.subr.mxu0 0.0
    %602 = vmatpush2.msra.mxu0 0.0
    %603 = vmatprep.subr.mxu0 0.0
    %604 = vmatpush2.msra.mxu0 0.0
    %605 = vmatprep.subr.mxu0 0.0
    %606 = vmatpush2.msra.mxu0 0.0
    %607 = vmatprep.subr.mxu0 0.0
    %608 = vmatpush2.msra.mxu0 0.0
    %609 = vmatprep.subr.mxu0 0.0
    %610 = vmatpush2.msra.mxu0 0.0
    %611 = vmatprep.subr.mxu0 0.0
    %612 = vmatpush2.msra.mxu0 0.0
    %613 = vmatprep.subr.mxu0 0.0
    %614 = vmatpush2.msra.mxu0 0.0
    %615 = vmatprep.subr.mxu0 0.0
    %616 = vmatpush2.msra.mxu0 0.0
    %617 = vmatprep.subr.mxu0 0.0
    %618 = vmatpush2.msra.mxu0 0.0
    %619 = vmatprep.subr.mxu0 0.0
    %620 = vmatpush2.msra.mxu0 0.0
    %621 = vmatprep.subr.mxu0 0.0
    %622 = vmatpush2.msra.mxu0 0.0
    %623 = vmatprep.mubr.f32.mxu0 0.0
    %624 = vmatmul.mubr.f32.gmra.mxu0 %v557
    %v625 = vpop.f32.mrf.mxu0
    %v626 = vadd.f32 0.0, %v625
    %v627 = vpop.f32.mrf.mxu0
    %628 = vdwg.mxu0
    %629 = vrot.lane.b32.xlu0 %v286, 112
    %v630 = vpop.permute.xlu0 %629
    %631 = vrot.lane.b32.xlu0 %v286, 80
    %v632 = vpop.permute.xlu0 %631
    %v633 = vsel %vm302, %v630, 0
    %v635 = vsel %vm302, %v632, 0
    %637 = vmatprep.subr.mxu0 0.0
    %638 = vmatpush1.xpose.msra.mxu0 0.0
    %639 = vmatprep.subr.mxu0 0.0
    %640 = vmatpush1.xpose.msra.mxu0 0.0
    %641 = vmatprep.subr.mxu0 0.0
    %642 = vmatpush1.xpose.msra.mxu0 0.0
    %643 = vmatprep.subr.mxu0 0.0
    %644 = vmatpush1.xpose.msra.mxu0 0.0
    %645 = vmatprep.subr.mxu0 0.0
    %646 = vmatpush1.xpose.msra.mxu0 0.0
    %647 = vmatprep.subr.mxu0 0.0
    %648 = vmatpush1.xpose.msra.mxu0 0.0
    %649 = vmatprep.subr.mxu0 0.0
    %650 = vmatpush1.xpose.msra.mxu0 0.0
    %651 = vmatprep.subr.mxu0 0.0
    %652 = vmatpush1.xpose.msra.mxu0 0.0
    %653 = vmatprep.subr.mxu0 0.0
    %654 = vmatpush1.xpose.msra.mxu0 0.0
    %655 = vmatprep.subr.mxu0 0.0
    %656 = vmatpush1.xpose.msra.mxu0 0.0
    %657 = vmatprep.subr.mxu0 0.0
    %658 = vmatpush1.xpose.msra.mxu0 0.0
    %659 = vmatprep.subr.mxu0 0.0
    %660 = vmatpush1.xpose.msra.mxu0 0.0
    %661 = vmatprep.subr.mxu0 0.0
    %662 = vmatpush1.xpose.msra.mxu0 0.0
    %663 = vmatprep.subr.mxu0 0.0
    %664 = vmatpush1.xpose.msra.mxu0 0.0
    %665 = vmatprep.subr.mxu0 0.0
    %666 = vmatpush1.xpose.msra.mxu0 0.0
    %667 = vmatprep.subr.mxu0 0.0
    %668 = vmatpush1.xpose.msra.mxu0 %v635
    %669 = vmatprep.subr.mxu0 0.0
    %670 = vmatpush2.xpose.msra.mxu0 0.0
    %671 = vmatprep.subr.mxu0 0.0
    %672 = vmatpush2.xpose.msra.mxu0 0.0
    %673 = vmatprep.subr.mxu0 0.0
    %674 = vmatpush2.xpose.msra.mxu0 0.0
    %675 = vmatprep.subr.mxu0 0.0
    %676 = vmatpush2.xpose.msra.mxu0 0.0
    %677 = vmatprep.subr.mxu0 0.0
    %678 = vmatpush2.xpose.msra.mxu0 0.0
    %679 = vmatprep.subr.mxu0 0.0
    %680 = vmatpush2.xpose.msra.mxu0 0.0
    %681 = vmatprep.subr.mxu0 0.0
    %682 = vmatpush2.xpose.msra.mxu0 0.0
    %683 = vmatprep.subr.mxu0 0.0
    %684 = vmatpush2.xpose.msra.mxu0 0.0
    %685 = vmatprep.subr.mxu0 0.0
    %686 = vmatpush2.xpose.msra.mxu0 0.0
    %687 = vmatprep.subr.mxu0 0.0
    %688 = vmatpush2.xpose.msra.mxu0 0.0
    %689 = vmatprep.subr.mxu0 0.0
    %690 = vmatpush2.xpose.msra.mxu0 0.0
    %691 = vmatprep.subr.mxu0 0.0
    %692 = vmatpush2.xpose.msra.mxu0 0.0
    %693 = vmatprep.subr.mxu0 0.0
    %694 = vmatpush2.xpose.msra.mxu0 0.0
    %695 = vmatprep.subr.mxu0 0.0
    %696 = vmatpush2.xpose.msra.mxu0 0.0
    %697 = vmatprep.subr.mxu0 0.0
    %698 = vmatpush2.xpose.msra.mxu0 0.0
    %699 = vmatprep.subr.mxu0 0.0
    %700 = vmatpush2.xpose.msra.mxu0 0.0
    %701 = vmatprep.mubr.f32.mxu0 0.0
    %702 = vmatmul.mubr.f32.gmra.mxu0 %v633
    %v703 = vpop.f32.mrf.mxu0
    %v704 = vadd.f32 %v298, %v703
    %v705 = vpop.f32.mrf.mxu0
    %706 = vdwg.mxu0
    %v707 = vsel %vm302, %v704, -inf
    %708 = vmax.xlane.f32.xlu0 %v707
    %v709 = vpop.xlane.xlu0 %708
    %v710 = vsub.f32 %v704, %v709
    %v711 = vmul.f32 %v710, 1.442695
    %v712 = vpow.pop %v711
    %v713 = vsel %vm302, %v712, 0.0
    %714 = vadd.xlane.f32.xlu0 %v713
    %v715 = vpop.xlane.xlu0 %714
    %v716 = vrcp.pop %v715
    %v717 = vmul.f32 %v712, %v716
    %718 = vrot.lane.b32.xlu0 %v286, 48
    %v719 = vpop.permute.xlu0 %718
    %v722 = vsel %vm302, %v717, 0
    %724 = vmatprep.subr.mxu0 0.0
    %725 = vmatpush1.msra.mxu0 0.0
    %726 = vmatprep.subr.mxu0 0.0
    %727 = vmatpush1.msra.mxu0 0.0
    %728 = vmatprep.subr.mxu0 0.0
    %729 = vmatpush1.msra.mxu0 0.0
    %730 = vmatprep.subr.mxu0 0.0
    %731 = vmatpush1.msra.mxu0 0.0
    %732 = vmatprep.subr.mxu0 0.0
    %733 = vmatpush1.msra.mxu0 0.0
    %734 = vmatprep.subr.mxu0 0.0
    %735 = vmatpush1.msra.mxu0 0.0
    %736 = vmatprep.subr.mxu0 0.0
    %737 = vmatpush1.msra.mxu0 0.0
    %738 = vmatprep.subr.mxu0 0.0
    %739 = vmatpush1.msra.mxu0 0.0
    %740 = vmatprep.subr.mxu0 0.0
    %741 = vmatpush1.msra.mxu0 0.0
    %742 = vmatprep.subr.mxu0 0.0
    %743 = vmatpush1.msra.mxu0 0.0
    %744 = vmatprep.subr.mxu0 0.0
    %745 = vmatpush1.msra.mxu0 0.0
    %746 = vmatprep.subr.mxu0 0.0
    %747 = vmatpush1.msra.mxu0 0.0
    %748 = vmatprep.subr.mxu0 0.0
    %749 = vmatpush1.msra.mxu0 0.0
    %750 = vmatprep.subr.mxu0 0.0
    %751 = vmatpush1.msra.mxu0 0.0
    %752 = vmatprep.subr.mxu0 0.0
    %753 = vmatpush1.msra.mxu0 0.0
    %754 = vmatprep.subr.mxu0 0.0
    %755 = vmatpush1.msra.mxu0 %v719
    %756 = vmatprep.subr.mxu0 0.0
    %757 = vmatpush2.msra.mxu0 0.0
    %758 = vmatprep.subr.mxu0 0.0
    %759 = vmatpush2.msra.mxu0 0.0
    %760 = vmatprep.subr.mxu0 0.0
    %761 = vmatpush2.msra.mxu0 0.0
    %762 = vmatprep.subr.mxu0 0.0
    %763 = vmatpush2.msra.mxu0 0.0
    %764 = vmatprep.subr.mxu0 0.0
    %765 = vmatpush2.msra.mxu0 0.0
    %766 = vmatprep.subr.mxu0 0.0
    %767 = vmatpush2.msra.mxu0 0.0
    %768 = vmatprep.subr.mxu0 0.0
    %769 = vmatpush2.msra.mxu0 0.0
    %770 = vmatprep.subr.mxu0 0.0
    %771 = vmatpush2.msra.mxu0 0.0
    %772 = vmatprep.subr.mxu0 0.0
    %773 = vmatpush2.msra.mxu0 0.0
    %774 = vmatprep.subr.mxu0 0.0
    %775 = vmatpush2.msra.mxu0 0.0
    %776 = vmatprep.subr.mxu0 0.0
    %777 = vmatpush2.msra.mxu0 0.0
    %778 = vmatprep.subr.mxu0 0.0
    %779 = vmatpush2.msra.mxu0 0.0
    %780 = vmatprep.subr.mxu0 0.0
    %781 = vmatpush2.msra.mxu0 0.0
    %782 = vmatprep.subr.mxu0 0.0
    %783 = vmatpush2.msra.mxu0 0.0
    %784 = vmatprep.subr.mxu0 0.0
    %785 = vmatpush2.msra.mxu0 0.0
    %786 = vmatprep.subr.mxu0 0.0
    %787 = vmatpush2.msra.mxu0 0.0
    %788 = vmatprep.mubr.f32.mxu0 0.0
    %789 = vmatmul.mubr.f32.gmra.mxu0 %v722
    %v790 = vpop.f32.mrf.mxu0
    %v791 = vadd.f32 0.0, %v790
    %v792 = vpop.f32.mrf.mxu0
    %793 = vdwg.mxu0
    %794 = vrot.lane.b32.xlu0 %v286, 104
    %v795 = vpop.permute.xlu0 %794
    %796 = vrot.lane.b32.xlu0 %v286, 72
    %v797 = vpop.permute.xlu0 %796
    %v798 = vsel %vm302, %v795, 0
    %v800 = vsel %vm302, %v797, 0
    %802 = vmatprep.subr.mxu0 0.0
    %803 = vmatpush1.xpose.msra.mxu0 0.0
    %804 = vmatprep.subr.mxu0 0.0
    %805 = vmatpush1.xpose.msra.mxu0 0.0
    %806 = vmatprep.subr.mxu0 0.0
    %807 = vmatpush1.xpose.msra.mxu0 0.0
    %808 = vmatprep.subr.mxu0 0.0
    %809 = vmatpush1.xpose.msra.mxu0 0.0
    %810 = vmatprep.subr.mxu0 0.0
    %811 = vmatpush1.xpose.msra.mxu0 0.0
    %812 = vmatprep.subr.mxu0 0.0
    %813 = vmatpush1.xpose.msra.mxu0 0.0
    %814 = vmatprep.subr.mxu0 0.0
    %815 = vmatpush1.xpose.msra.mxu0 0.0
    %816 = vmatprep.subr.mxu0 0.0
    %817 = vmatpush1.xpose.msra.mxu0 0.0
    %818 = vmatprep.subr.mxu0 0.0
    %819 = vmatpush1.xpose.msra.mxu0 0.0
    %820 = vmatprep.subr.mxu0 0.0
    %821 = vmatpush1.xpose.msra.mxu0 0.0
    %822 = vmatprep.subr.mxu0 0.0
    %823 = vmatpush1.xpose.msra.mxu0 0.0
    %824 = vmatprep.subr.mxu0 0.0
    %825 = vmatpush1.xpose.msra.mxu0 0.0
    %826 = vmatprep.subr.mxu0 0.0
    %827 = vmatpush1.xpose.msra.mxu0 0.0
    %828 = vmatprep.subr.mxu0 0.0
    %829 = vmatpush1.xpose.msra.mxu0 0.0
    %830 = vmatprep.subr.mxu0 0.0
    %831 = vmatpush1.xpose.msra.mxu0 0.0
    %832 = vmatprep.subr.mxu0 0.0
    %833 = vmatpush1.xpose.msra.mxu0 %v800
    %834 = vmatprep.subr.mxu0 0.0
    %835 = vmatpush2.xpose.msra.mxu0 0.0
    %836 = vmatprep.subr.mxu0 0.0
    %837 = vmatpush2.xpose.msra.mxu0 0.0
    %838 = vmatprep.subr.mxu0 0.0
    %839 = vmatpush2.xpose.msra.mxu0 0.0
    %840 = vmatprep.subr.mxu0 0.0
    %841 = vmatpush2.xpose.msra.mxu0 0.0
    %842 = vmatprep.subr.mxu0 0.0
    %843 = vmatpush2.xpose.msra.mxu0 0.0
    %844 = vmatprep.subr.mxu0 0.0
    %845 = vmatpush2.xpose.msra.mxu0 0.0
    %846 = vmatprep.subr.mxu0 0.0
    %847 = vmatpush2.xpose.msra.mxu0 0.0
    %848 = vmatprep.subr.mxu0 0.0
    %849 = vmatpush2.xpose.msra.mxu0 0.0
    %850 = vmatprep.subr.mxu0 0.0
    %851 = vmatpush2.xpose.msra.mxu0 0.0
    %852 = vmatprep.subr.mxu0 0.0
    %853 = vmatpush2.xpose.msra.mxu0 0.0
    %854 = vmatprep.subr.mxu0 0.0
    %855 = vmatpush2.xpose.msra.mxu0 0.0
    %856 = vmatprep.subr.mxu0 0.0
    %857 = vmatpush2.xpose.msra.mxu0 0.0
    %858 = vmatprep.subr.mxu0 0.0
    %859 = vmatpush2.xpose.msra.mxu0 0.0
    %860 = vmatprep.subr.mxu0 0.0
    %861 = vmatpush2.xpose.msra.mxu0 0.0
    %862 = vmatprep.subr.mxu0 0.0
    %863 = vmatpush2.xpose.msra.mxu0 0.0
    %864 = vmatprep.subr.mxu0 0.0
    %865 = vmatpush2.xpose.msra.mxu0 0.0
    %866 = vmatprep.mubr.f32.mxu0 0.0
    %867 = vmatmul.mubr.f32.gmra.mxu0 %v798
    %v868 = vpop.f32.mrf.mxu0
    %v869 = vadd.f32 %v298, %v868
    %v870 = vpop.f32.mrf.mxu0
    %871 = vdwg.mxu0
    %v872 = vsel %vm302, %v869, -inf
    %873 = vmax.xlane.f32.xlu0 %v872
    %v874 = vpop.xlane.xlu0 %873
    %v875 = vsub.f32 %v869, %v874
    %v876 = vmul.f32 %v875, 1.442695
    %v877 = vpow.pop %v876
    %v878 = vsel %vm302, %v877, 0.0
    %879 = vadd.xlane.f32.xlu0 %v878
    %v880 = vpop.xlane.xlu0 %879
    %v881 = vrcp.pop %v880
    %v882 = vmul.f32 %v877, %v881
    %883 = vrot.lane.b32.xlu0 %v286, 40
    %v884 = vpop.permute.xlu0 %883
    %v887 = vsel %vm302, %v882, 0
    %889 = vmatprep.subr.mxu0 0.0
    %890 = vmatpush1.msra.mxu0 0.0
    %891 = vmatprep.subr.mxu0 0.0
    %892 = vmatpush1.msra.mxu0 0.0
    %893 = vmatprep.subr.mxu0 0.0
    %894 = vmatpush1.msra.mxu0 0.0
    %895 = vmatprep.subr.mxu0 0.0
    %896 = vmatpush1.msra.mxu0 0.0
    %897 = vmatprep.subr.mxu0 0.0
    %898 = vmatpush1.msra.mxu0 0.0
    %899 = vmatprep.subr.mxu0 0.0
    %900 = vmatpush1.msra.mxu0 0.0
    %901 = vmatprep.subr.mxu0 0.0
    %902 = vmatpush1.msra.mxu0 0.0
    %903 = vmatprep.subr.mxu0 0.0
    %904 = vmatpush1.msra.mxu0 0.0
    %905 = vmatprep.subr.mxu0 0.0
    %906 = vmatpush1.msra.mxu0 0.0
    %907 = vmatprep.subr.mxu0 0.0
    %908 = vmatpush1.msra.mxu0 0.0
    %909 = vmatprep.subr.mxu0 0.0
    %910 = vmatpush1.msra.mxu0 0.0
    %911 = vmatprep.subr.mxu0 0.0
    %912 = vmatpush1.msra.mxu0 0.0
    %913 = vmatprep.subr.mxu0 0.0
    %914 = vmatpush1.msra.mxu0 0.0
    %915 = vmatprep.subr.mxu0 0.0
    %916 = vmatpush1.msra.mxu0 0.0
    %917 = vmatprep.subr.mxu0 0.0
    %918 = vmatpush1.msra.mxu0 0.0
    %919 = vmatprep.subr.mxu0 0.0
    %920 = vmatpush1.msra.mxu0 %v884
    %921 = vmatprep.subr.mxu0 0.0
    %922 = vmatpush2.msra.mxu0 0.0
    %923 = vmatprep.subr.mxu0 0.0
    %924 = vmatpush2.msra.mxu0 0.0
    %925 = vmatprep.subr.mxu0 0.0
    %926 = vmatpush2.msra.mxu0 0.0
    %927 = vmatprep.subr.mxu0 0.0
    %928 = vmatpush2.msra.mxu0 0.0
    %929 = vmatprep.subr.mxu0 0.0
    %930 = vmatpush2.msra.mxu0 0.0
    %931 = vmatprep.subr.mxu0 0.0
    %932 = vmatpush2.msra.mxu0 0.0
    %933 = vmatprep.subr.mxu0 0.0
    %934 = vmatpush2.msra.mxu0 0.0
    %935 = vmatprep.subr.mxu0 0.0
    %936 = vmatpush2.msra.mxu0 0.0
    %937 = vmatprep.subr.mxu0 0.0
    %938 = vmatpush2.msra.mxu0 0.0
    %939 = vmatprep.subr.mxu0 0.0
    %940 = vmatpush2.msra.mxu0 0.0
    %941 = vmatprep.subr.mxu0 0.0
    %942 = vmatpush2.msra.mxu0 0.0
    %943 = vmatprep.subr.mxu0 0.0
    %944 = vmatpush2.msra.mxu0 0.0
    %945 = vmatprep.subr.mxu0 0.0
    %946 = vmatpush2.msra.mxu0 0.0
    %947 = vmatprep.subr.mxu0 0.0
    %948 = vmatpush2.msra.mxu0 0.0
    %949 = vmatprep.subr.mxu0 0.0
    %950 = vmatpush2.msra.mxu0 0.0
    %951 = vmatprep.subr.mxu0 0.0
    %952 = vmatpush2.msra.mxu0 0.0
    %953 = vmatprep.mubr.f32.mxu0 0.0
    %954 = vmatmul.mubr.f32.gmra.mxu0 %v887
    %v955 = vpop.f32.mrf.mxu0
    %v956 = vadd.f32 0.0, %v955
    %v957 = vpop.f32.mrf.mxu0
    %958 = vdwg.mxu0
    %960 = vrot.lane.b32.xlu0 %v626, 8
    %v961 = vpop.permute.xlu0 %960
    %964 = vrot.lane.b32.xlu0 %v791, 16
    %v965 = vpop.permute.xlu0 %964
    %968 = vrot.lane.b32.xlu0 %v956, 24
    %v969 = vpop.permute.xlu0 %968
    %v971 = vsel %vm302, %v461, %v961
    %vm972 = vcmask 130048
    %v973 = vsel %vm972, %v971, %v965
    %vm974 = vcmask 195584
    %v975 = vsel %vm974, %v973, %v969
    %v976 = vld [vmem:[%s1 + $0x1] sm:$0x1]
    %v977 = vlaneseq
    %v978 = vshrl.u32 %v977, 7
    %v979 = vsub.s32 0, %v978
    %v980 = vrot.slane %v976, %v979
    %982 = vrot.lane.b32.xlu0 %v291, 96
    %v983 = vpop.permute.xlu0 %982
    %v984 = vsel %vm302, %v291, 0
    %v986 = vsel %vm302, %v983, 0
    %988 = vmatprep.subr.mxu0 0.0
    %989 = vmatpush1.xpose.msra.mxu0 0.0
    %990 = vmatprep.subr.mxu0 0.0
    %991 = vmatpush1.xpose.msra.mxu0 0.0
    %992 = vmatprep.subr.mxu0 0.0
    %993 = vmatpush1.xpose.msra.mxu0 0.0
    %994 = vmatprep.subr.mxu0 0.0
    %995 = vmatpush1.xpose.msra.mxu0 0.0
    %996 = vmatprep.subr.mxu0 0.0
    %997 = vmatpush1.xpose.msra.mxu0 0.0
    %998 = vmatprep.subr.mxu0 0.0
    %999 = vmatpush1.xpose.msra.mxu0 0.0
    %1000 = vmatprep.subr.mxu0 0.0
    %1001 = vmatpush1.xpose.msra.mxu0 0.0
    %1002 = vmatprep.subr.mxu0 0.0
    %1003 = vmatpush1.xpose.msra.mxu0 0.0
    %1004 = vmatprep.subr.mxu0 0.0
    %1005 = vmatpush1.xpose.msra.mxu0 0.0
    %1006 = vmatprep.subr.mxu0 0.0
    %1007 = vmatpush1.xpose.msra.mxu0 0.0
    %1008 = vmatprep.subr.mxu0 0.0
    %1009 = vmatpush1.xpose.msra.mxu0 0.0
    %1010 = vmatprep.subr.mxu0 0.0
    %1011 = vmatpush1.xpose.msra.mxu0 0.0
    %1012 = vmatprep.subr.mxu0 0.0
    %1013 = vmatpush1.xpose.msra.mxu0 0.0
    %1014 = vmatprep.subr.mxu0 0.0
    %1015 = vmatpush1.xpose.msra.mxu0 0.0
    %1016 = vmatprep.subr.mxu0 0.0
    %1017 = vmatpush1.xpose.msra.mxu0 0.0
    %1018 = vmatprep.subr.mxu0 0.0
    %1019 = vmatpush1.xpose.msra.mxu0 %v986
    %1020 = vmatprep.subr.mxu0 0.0
    %1021 = vmatpush2.xpose.msra.mxu0 0.0
    %1022 = vmatprep.subr.mxu0 0.0
    %1023 = vmatpush2.xpose.msra.mxu0 0.0
    %1024 = vmatprep.subr.mxu0 0.0
    %1025 = vmatpush2.xpose.msra.mxu0 0.0
    %1026 = vmatprep.subr.mxu0 0.0
    %1027 = vmatpush2.xpose.msra.mxu0 0.0
    %1028 = vmatprep.subr.mxu0 0.0
    %1029 = vmatpush2.xpose.msra.mxu0 0.0
    %1030 = vmatprep.subr.mxu0 0.0
    %1031 = vmatpush2.xpose.msra.mxu0 0.0
    %1032 = vmatprep.subr.mxu0 0.0
    %1033 = vmatpush2.xpose.msra.mxu0 0.0
    %1034 = vmatprep.subr.mxu0 0.0
    %1035 = vmatpush2.xpose.msra.mxu0 0.0
    %1036 = vmatprep.subr.mxu0 0.0
    %1037 = vmatpush2.xpose.msra.mxu0 0.0
    %1038 = vmatprep.subr.mxu0 0.0
    %1039 = vmatpush2.xpose.msra.mxu0 0.0
    %1040 = vmatprep.subr.mxu0 0.0
    %1041 = vmatpush2.xpose.msra.mxu0 0.0
    %1042 = vmatprep.subr.mxu0 0.0
    %1043 = vmatpush2.xpose.msra.mxu0 0.0
    %1044 = vmatprep.subr.mxu0 0.0
    %1045 = vmatpush2.xpose.msra.mxu0 0.0
    %1046 = vmatprep.subr.mxu0 0.0
    %1047 = vmatpush2.xpose.msra.mxu0 0.0
    %1048 = vmatprep.subr.mxu0 0.0
    %1049 = vmatpush2.xpose.msra.mxu0 0.0
    %1050 = vmatprep.subr.mxu0 0.0
    %1051 = vmatpush2.xpose.msra.mxu0 0.0
    %1052 = vmatprep.mubr.f32.mxu0 0.0
    %1053 = vmatmul.mubr.f32.gmra.mxu0 %v984
    %v1054 = vpop.f32.mrf.mxu0
    %v1055 = vadd.f32 %v980, %v1054
    %v1056 = vpop.f32.mrf.mxu0
    %1057 = vdwg.mxu0
    %v1058 = vsel %vm302, %v1055, -inf
    %1059 = vmax.xlane.f32.xlu0 %v1058
    %v1060 = vpop.xlane.xlu0 %1059
    %v1061 = vsub.f32 %v1055, %v1060
    %v1062 = vmul.f32 %v1061, 1.442695
    %v1063 = vpow.pop %v1062
    %v1064 = vsel %vm302, %v1063, 0.0
    %1065 = vadd.xlane.f32.xlu0 %v1064
    %v1066 = vpop.xlane.xlu0 %1065
    %v1067 = vrcp.pop %v1066
    %v1068 = vmul.f32 %v1063, %v1067
    %1069 = vrot.lane.b32.xlu0 %v291, 64
    %v1070 = vpop.permute.xlu0 %1069
    %v1073 = vsel %vm302, %v1068, 0
    %1075 = vmatprep.subr.mxu0 0.0
    %1076 = vmatpush1.msra.mxu0 0.0
    %1077 = vmatprep.subr.mxu0 0.0
    %1078 = vmatpush1.msra.mxu0 0.0
    %1079 = vmatprep.subr.mxu0 0.0
    %1080 = vmatpush1.msra.mxu0 0.0
    %1081 = vmatprep.subr.mxu0 0.0
    %1082 = vmatpush1.msra.mxu0 0.0
    %1083 = vmatprep.subr.mxu0 0.0
    %1084 = vmatpush1.msra.mxu0 0.0
    %1085 = vmatprep.subr.mxu0 0.0
    %1086 = vmatpush1.msra.mxu0 0.0
    %1087 = vmatprep.subr.mxu0 0.0
    %1088 = vmatpush1.msra.mxu0 0.0
    %1089 = vmatprep.subr.mxu0 0.0
    %1090 = vmatpush1.msra.mxu0 0.0
    %1091 = vmatprep.subr.mxu0 0.0
    %1092 = vmatpush1.msra.mxu0 0.0
    %1093 = vmatprep.subr.mxu0 0.0
    %1094 = vmatpush1.msra.mxu0 0.0
    %1095 = vmatprep.subr.mxu0 0.0
    %1096 = vmatpush1.msra.mxu0 0.0
    %1097 = vmatprep.subr.mxu0 0.0
    %1098 = vmatpush1.msra.mxu0 0.0
    %1099 = vmatprep.subr.mxu0 0.0
    %1100 = vmatpush1.msra.mxu0 0.0
    %1101 = vmatprep.subr.mxu0 0.0
    %1102 = vmatpush1.msra.mxu0 0.0
    %1103 = vmatprep.subr.mxu0 0.0
    %1104 = vmatpush1.msra.mxu0 0.0
    %1105 = vmatprep.subr.mxu0 0.0
    %1106 = vmatpush1.msra.mxu0 %v1070
    %1107 = vmatprep.subr.mxu0 0.0
    %1108 = vmatpush2.msra.mxu0 0.0
    %1109 = vmatprep.subr.mxu0 0.0
    %1110 = vmatpush2.msra.mxu0 0.0
    %1111 = vmatprep.subr.mxu0 0.0
    %1112 = vmatpush2.msra.mxu0 0.0
    %1113 = vmatprep.subr.mxu0 0.0
    %1114 = vmatpush2.msra.mxu0 0.0
    %1115 = vmatprep.subr.mxu0 0.0
    %1116 = vmatpush2.msra.mxu0 0.0
    %1117 = vmatprep.subr.mxu0 0.0
    %1118 = vmatpush2.msra.mxu0 0.0
    %1119 = vmatprep.subr.mxu0 0.0
    %1120 = vmatpush2.msra.mxu0 0.0
    %1121 = vmatprep.subr.mxu0 0.0
    %1122 = vmatpush2.msra.mxu0 0.0
    %1123 = vmatprep.subr.mxu0 0.0
    %1124 = vmatpush2.msra.mxu0 0.0
    %1125 = vmatprep.subr.mxu0 0.0
    %1126 = vmatpush2.msra.mxu0 0.0
    %1127 = vmatprep.subr.mxu0 0.0
    %1128 = vmatpush2.msra.mxu0 0.0
    %1129 = vmatprep.subr.mxu0 0.0
    %1130 = vmatpush2.msra.mxu0 0.0
    %1131 = vmatprep.subr.mxu0 0.0
    %1132 = vmatpush2.msra.mxu0 0.0
    %1133 = vmatprep.subr.mxu0 0.0
    %1134 = vmatpush2.msra.mxu0 0.0
    %1135 = vmatprep.subr.mxu0 0.0
    %1136 = vmatpush2.msra.mxu0 0.0
    %1137 = vmatprep.subr.mxu0 0.0
    %1138 = vmatpush2.msra.mxu0 0.0
    %1139 = vmatprep.mubr.f32.mxu0 0.0
    %1140 = vmatmul.mubr.f32.gmra.mxu0 %v1073
    %v1141 = vpop.f32.mrf.mxu0
    %v1142 = vadd.f32 0.0, %v1141
    %v1143 = vpop.f32.mrf.mxu0
    %1144 = vdwg.mxu0
    %1145 = vrot.lane.b32.xlu0 %v291, 120
    %v1146 = vpop.permute.xlu0 %1145
    %1147 = vrot.lane.b32.xlu0 %v291, 88
    %v1148 = vpop.permute.xlu0 %1147
    %v1149 = vsel %vm302, %v1146, 0
    %v1151 = vsel %vm302, %v1148, 0
    %1153 = vmatprep.subr.mxu0 0.0
    %1154 = vmatpush1.xpose.msra.mxu0 0.0
    %1155 = vmatprep.subr.mxu0 0.0
    %1156 = vmatpush1.xpose.msra.mxu0 0.0
    %1157 = vmatprep.subr.mxu0 0.0
    %1158 = vmatpush1.xpose.msra.mxu0 0.0
    %1159 = vmatprep.subr.mxu0 0.0
    %1160 = vmatpush1.xpose.msra.mxu0 0.0
    %1161 = vmatprep.subr.mxu0 0.0
    %1162 = vmatpush1.xpose.msra.mxu0 0.0
    %1163 = vmatprep.subr.mxu0 0.0
    %1164 = vmatpush1.xpose.msra.mxu0 0.0
    %1165 = vmatprep.subr.mxu0 0.0
    %1166 = vmatpush1.xpose.msra.mxu0 0.0
    %1167 = vmatprep.subr.mxu0 0.0
    %1168 = vmatpush1.xpose.msra.mxu0 0.0
    %1169 = vmatprep.subr.mxu0 0.0
    %1170 = vmatpush1.xpose.msra.mxu0 0.0
    %1171 = vmatprep.subr.mxu0 0.0
    %1172 = vmatpush1.xpose.msra.mxu0 0.0
    %1173 = vmatprep.subr.mxu0 0.0
    %1174 = vmatpush1.xpose.msra.mxu0 0.0
    %1175 = vmatprep.subr.mxu0 0.0
    %1176 = vmatpush1.xpose.msra.mxu0 0.0
    %1177 = vmatprep.subr.mxu0 0.0
    %1178 = vmatpush1.xpose.msra.mxu0 0.0
    %1179 = vmatprep.subr.mxu0 0.0
    %1180 = vmatpush1.xpose.msra.mxu0 0.0
    %1181 = vmatprep.subr.mxu0 0.0
    %1182 = vmatpush1.xpose.msra.mxu0 0.0
    %1183 = vmatprep.subr.mxu0 0.0
    %1184 = vmatpush1.xpose.msra.mxu0 %v1151
    %1185 = vmatprep.subr.mxu0 0.0
    %1186 = vmatpush2.xpose.msra.mxu0 0.0
    %1187 = vmatprep.subr.mxu0 0.0
    %1188 = vmatpush2.xpose.msra.mxu0 0.0
    %1189 = vmatprep.subr.mxu0 0.0
    %1190 = vmatpush2.xpose.msra.mxu0 0.0
    %1191 = vmatprep.subr.mxu0 0.0
    %1192 = vmatpush2.xpose.msra.mxu0 0.0
    %1193 = vmatprep.subr.mxu0 0.0
    %1194 = vmatpush2.xpose.msra.mxu0 0.0
    %1195 = vmatprep.subr.mxu0 0.0
    %1196 = vmatpush2.xpose.msra.mxu0 0.0
    %1197 = vmatprep.subr.mxu0 0.0
    %1198 = vmatpush2.xpose.msra.mxu0 0.0
    %1199 = vmatprep.subr.mxu0 0.0
    %1200 = vmatpush2.xpose.msra.mxu0 0.0
    %1201 = vmatprep.subr.mxu0 0.0
    %1202 = vmatpush2.xpose.msra.mxu0 0.0
    %1203 = vmatprep.subr.mxu0 0.0
    %1204 = vmatpush2.xpose.msra.mxu0 0.0
    %1205 = vmatprep.subr.mxu0 0.0
    %1206 = vmatpush2.xpose.msra.mxu0 0.0
    %1207 = vmatprep.subr.mxu0 0.0
    %1208 = vmatpush2.xpose.msra.mxu0 0.0
    %1209 = vmatprep.subr.mxu0 0.0
    %1210 = vmatpush2.xpose.msra.mxu0 0.0
    %1211 = vmatprep.subr.mxu0 0.0
    %1212 = vmatpush2.xpose.msra.mxu0 0.0
    %1213 = vmatprep.subr.mxu0 0.0
    %1214 = vmatpush2.xpose.msra.mxu0 0.0
    %1215 = vmatprep.subr.mxu0 0.0
    %1216 = vmatpush2.xpose.msra.mxu0 0.0
    %1217 = vmatprep.mubr.f32.mxu0 0.0
    %1218 = vmatmul.mubr.f32.gmra.mxu0 %v1149
    %v1219 = vpop.f32.mrf.mxu0
    %v1220 = vadd.f32 %v980, %v1219
    %v1221 = vpop.f32.mrf.mxu0
    %1222 = vdwg.mxu0
    %v1223 = vsel %vm302, %v1220, -inf
    %1224 = vmax.xlane.f32.xlu0 %v1223
    %v1225 = vpop.xlane.xlu0 %1224
    %v1226 = vsub.f32 %v1220, %v1225
    %v1227 = vmul.f32 %v1226, 1.442695
    %v1228 = vpow.pop %v1227
    %v1229 = vsel %vm302, %v1228, 0.0
    %1230 = vadd.xlane.f32.xlu0 %v1229
    %v1231 = vpop.xlane.xlu0 %1230
    %v1232 = vrcp.pop %v1231
    %v1233 = vmul.f32 %v1228, %v1232
    %1234 = vrot.lane.b32.xlu0 %v291, 56
    %v1235 = vpop.permute.xlu0 %1234
    %v1238 = vsel %vm302, %v1233, 0
    %1240 = vmatprep.subr.mxu0 0.0
    %1241 = vmatpush1.msra.mxu0 0.0
    %1242 = vmatprep.subr.mxu0 0.0
    %1243 = vmatpush1.msra.mxu0 0.0
    %1244 = vmatprep.subr.mxu0 0.0
    %1245 = vmatpush1.msra.mxu0 0.0
    %1246 = vmatprep.subr.mxu0 0.0
    %1247 = vmatpush1.msra.mxu0 0.0
    %1248 = vmatprep.subr.mxu0 0.0
    %1249 = vmatpush1.msra.mxu0 0.0
    %1250 = vmatprep.subr.mxu0 0.0
    %1251 = vmatpush1.msra.mxu0 0.0
    %1252 = vmatprep.subr.mxu0 0.0
    %1253 = vmatpush1.msra.mxu0 0.0
    %1254 = vmatprep.subr.mxu0 0.0
    %1255 = vmatpush1.msra.mxu0 0.0
    %1256 = vmatprep.subr.mxu0 0.0
    %1257 = vmatpush1.msra.mxu0 0.0
    %1258 = vmatprep.subr.mxu0 0.0
    %1259 = vmatpush1.msra.mxu0 0.0
    %1260 = vmatprep.subr.mxu0 0.0
    %1261 = vmatpush1.msra.mxu0 0.0
    %1262 = vmatprep.subr.mxu0 0.0
    %1263 = vmatpush1.msra.mxu0 0.0
    %1264 = vmatprep.subr.mxu0 0.0
    %1265 = vmatpush1.msra.mxu0 0.0
    %1266 = vmatprep.subr.mxu0 0.0
    %1267 = vmatpush1.msra.mxu0 0.0
    %1268 = vmatprep.subr.mxu0 0.0
    %1269 = vmatpush1.msra.mxu0 0.0
    %1270 = vmatprep.subr.mxu0 0.0
    %1271 = vmatpush1.msra.mxu0 %v1235
    %1272 = vmatprep.subr.mxu0 0.0
    %1273 = vmatpush2.msra.mxu0 0.0
    %1274 = vmatprep.subr.mxu0 0.0
    %1275 = vmatpush2.msra.mxu0 0.0
    %1276 = vmatprep.subr.mxu0 0.0
    %1277 = vmatpush2.msra.mxu0 0.0
    %1278 = vmatprep.subr.mxu0 0.0
    %1279 = vmatpush2.msra.mxu0 0.0
    %1280 = vmatprep.subr.mxu0 0.0
    %1281 = vmatpush2.msra.mxu0 0.0
    %1282 = vmatprep.subr.mxu0 0.0
    %1283 = vmatpush2.msra.mxu0 0.0
    %1284 = vmatprep.subr.mxu0 0.0
    %1285 = vmatpush2.msra.mxu0 0.0
    %1286 = vmatprep.subr.mxu0 0.0
    %1287 = vmatpush2.msra.mxu0 0.0
    %1288 = vmatprep.subr.mxu0 0.0
    %1289 = vmatpush2.msra.mxu0 0.0
    %1290 = vmatprep.subr.mxu0 0.0
    %1291 = vmatpush2.msra.mxu0 0.0
    %1292 = vmatprep.subr.mxu0 0.0
    %1293 = vmatpush2.msra.mxu0 0.0
    %1294 = vmatprep.subr.mxu0 0.0
    %1295 = vmatpush2.msra.mxu0 0.0
    %1296 = vmatprep.subr.mxu0 0.0
    %1297 = vmatpush2.msra.mxu0 0.0
    %1298 = vmatprep.subr.mxu0 0.0
    %1299 = vmatpush2.msra.mxu0 0.0
    %1300 = vmatprep.subr.mxu0 0.0
    %1301 = vmatpush2.msra.mxu0 0.0
    %1302 = vmatprep.subr.mxu0 0.0
    %1303 = vmatpush2.msra.mxu0 0.0
    %1304 = vmatprep.mubr.f32.mxu0 0.0
    %1305 = vmatmul.mubr.f32.gmra.mxu0 %v1238
    %v1306 = vpop.f32.mrf.mxu0
    %v1307 = vadd.f32 0.0, %v1306
    %v1308 = vpop.f32.mrf.mxu0
    %1309 = vdwg.mxu0
    %1310 = vrot.lane.b32.xlu0 %v291, 112
    %v1311 = vpop.permute.xlu0 %1310
    %1312 = vrot.lane.b32.xlu0 %v291, 80
    %v1313 = vpop.permute.xlu0 %1312
    %v1314 = vsel %vm302, %v1311, 0
    %v1316 = vsel %vm302, %v1313, 0
    %1318 = vmatprep.subr.mxu0 0.0
    %1319 = vmatpush1.xpose.msra.mxu0 0.0
    %1320 = vmatprep.subr.mxu0 0.0
    %1321 = vmatpush1.xpose.msra.mxu0 0.0
    %1322 = vmatprep.subr.mxu0 0.0
    %1323 = vmatpush1.xpose.msra.mxu0 0.0
    %1324 = vmatprep.subr.mxu0 0.0
    %1325 = vmatpush1.xpose.msra.mxu0 0.0
    %1326 = vmatprep.subr.mxu0 0.0
    %1327 = vmatpush1.xpose.msra.mxu0 0.0
    %1328 = vmatprep.subr.mxu0 0.0
    %1329 = vmatpush1.xpose.msra.mxu0 0.0
    %1330 = vmatprep.subr.mxu0 0.0
    %1331 = vmatpush1.xpose.msra.mxu0 0.0
    %1332 = vmatprep.subr.mxu0 0.0
    %1333 = vmatpush1.xpose.msra.mxu0 0.0
    %1334 = vmatprep.subr.mxu0 0.0
    %1335 = vmatpush1.xpose.msra.mxu0 0.0
    %1336 = vmatprep.subr.mxu0 0.0
    %1337 = vmatpush1.xpose.msra.mxu0 0.0
    %1338 = vmatprep.subr.mxu0 0.0
    %1339 = vmatpush1.xpose.msra.mxu0 0.0
    %1340 = vmatprep.subr.mxu0 0.0
    %1341 = vmatpush1.xpose.msra.mxu0 0.0
    %1342 = vmatprep.subr.mxu0 0.0
    %1343 = vmatpush1.xpose.msra.mxu0 0.0
    %1344 = vmatprep.subr.mxu0 0.0
    %1345 = vmatpush1.xpose.msra.mxu0 0.0
    %1346 = vmatprep.subr.mxu0 0.0
    %1347 = vmatpush1.xpose.msra.mxu0 0.0
    %1348 = vmatprep.subr.mxu0 0.0
    %1349 = vmatpush1.xpose.msra.mxu0 %v1316
    %1350 = vmatprep.subr.mxu0 0.0
    %1351 = vmatpush2.xpose.msra.mxu0 0.0
    %1352 = vmatprep.subr.mxu0 0.0
    %1353 = vmatpush2.xpose.msra.mxu0 0.0
    %1354 = vmatprep.subr.mxu0 0.0
    %1355 = vmatpush2.xpose.msra.mxu0 0.0
    %1356 = vmatprep.subr.mxu0 0.0
    %1357 = vmatpush2.xpose.msra.mxu0 0.0
    %1358 = vmatprep.subr.mxu0 0.0
    %1359 = vmatpush2.xpose.msra.mxu0 0.0
    %1360 = vmatprep.subr.mxu0 0.0
    %1361 = vmatpush2.xpose.msra.mxu0 0.0
    %1362 = vmatprep.subr.mxu0 0.0
    %1363 = vmatpush2.xpose.msra.mxu0 0.0
    %1364 = vmatprep.subr.mxu0 0.0
    %1365 = vmatpush2.xpose.msra.mxu0 0.0
    %1366 = vmatprep.subr.mxu0 0.0
    %1367 = vmatpush2.xpose.msra.mxu0 0.0
    %1368 = vmatprep.subr.mxu0 0.0
    %1369 = vmatpush2.xpose.msra.mxu0 0.0
    %1370 = vmatprep.subr.mxu0 0.0
    %1371 = vmatpush2.xpose.msra.mxu0 0.0
    %1372 = vmatprep.subr.mxu0 0.0
    %1373 = vmatpush2.xpose.msra.mxu0 0.0
    %1374 = vmatprep.subr.mxu0 0.0
    %1375 = vmatpush2.xpose.msra.mxu0 0.0
    %1376 = vmatprep.subr.mxu0 0.0
    %1377 = vmatpush2.xpose.msra.mxu0 0.0
    %1378 = vmatprep.subr.mxu0 0.0
    %1379 = vmatpush2.xpose.msra.mxu0 0.0
    %1380 = vmatprep.subr.mxu0 0.0
    %1381 = vmatpush2.xpose.msra.mxu0 0.0
    %1382 = vmatprep.mubr.f32.mxu0 0.0
    %1383 = vmatmul.mubr.f32.gmra.mxu0 %v1314
    %v1384 = vpop.f32.mrf.mxu0
    %v1385 = vadd.f32 %v980, %v1384
    %v1386 = vpop.f32.mrf.mxu0
    %1387 = vdwg.mxu0
    %v1388 = vsel %vm302, %v1385, -inf
    %1389 = vmax.xlane.f32.xlu0 %v1388
    %v1390 = vpop.xlane.xlu0 %1389
    %v1391 = vsub.f32 %v1385, %v1390
    %v1392 = vmul.f32 %v1391, 1.442695
    %v1393 = vpow.pop %v1392
    %v1394 = vsel %vm302, %v1393, 0.0
    %1395 = vadd.xlane.f32.xlu0 %v1394
    %v1396 = vpop.xlane.xlu0 %1395
    %v1397 = vrcp.pop %v1396
    %v1398 = vmul.f32 %v1393, %v1397
    %1399 = vrot.lane.b32.xlu0 %v291, 48
    %v1400 = vpop.permute.xlu0 %1399
    %v1403 = vsel %vm302, %v1398, 0
    %1405 = vmatprep.subr.mxu0 0.0
    %1406 = vmatpush1.msra.mxu0 0.0
    %1407 = vmatprep.subr.mxu0 0.0
    %1408 = vmatpush1.msra.mxu0 0.0
    %1409 = vmatprep.subr.mxu0 0.0
    %1410 = vmatpush1.msra.mxu0 0.0
    %1411 = vmatprep.subr.mxu0 0.0
    %1412 = vmatpush1.msra.mxu0 0.0
    %1413 = vmatprep.subr.mxu0 0.0
    %1414 = vmatpush1.msra.mxu0 0.0
    %1415 = vmatprep.subr.mxu0 0.0
    %1416 = vmatpush1.msra.mxu0 0.0
    %1417 = vmatprep.subr.mxu0 0.0
    %1418 = vmatpush1.msra.mxu0 0.0
    %1419 = vmatprep.subr.mxu0 0.0
    %1420 = vmatpush1.msra.mxu0 0.0
    %1421 = vmatprep.subr.mxu0 0.0
    %1422 = vmatpush1.msra.mxu0 0.0
    %1423 = vmatprep.subr.mxu0 0.0
    %1424 = vmatpush1.msra.mxu0 0.0
    %1425 = vmatprep.subr.mxu0 0.0
    %1426 = vmatpush1.msra.mxu0 0.0
    %1427 = vmatprep.subr.mxu0 0.0
    %1428 = vmatpush1.msra.mxu0 0.0
    %1429 = vmatprep.subr.mxu0 0.0
    %1430 = vmatpush1.msra.mxu0 0.0
    %1431 = vmatprep.subr.mxu0 0.0
    %1432 = vmatpush1.msra.mxu0 0.0
    %1433 = vmatprep.subr.mxu0 0.0
    %1434 = vmatpush1.msra.mxu0 0.0
    %1435 = vmatprep.subr.mxu0 0.0
    %1436 = vmatpush1.msra.mxu0 %v1400
    %1437 = vmatprep.subr.mxu0 0.0
    %1438 = vmatpush2.msra.mxu0 0.0
    %1439 = vmatprep.subr.mxu0 0.0
    %1440 = vmatpush2.msra.mxu0 0.0
    %1441 = vmatprep.subr.mxu0 0.0
    %1442 = vmatpush2.msra.mxu0 0.0
    %1443 = vmatprep.subr.mxu0 0.0
    %1444 = vmatpush2.msra.mxu0 0.0
    %1445 = vmatprep.subr.mxu0 0.0
    %1446 = vmatpush2.msra.mxu0 0.0
    %1447 = vmatprep.subr.mxu0 0.0
    %1448 = vmatpush2.msra.mxu0 0.0
    %1449 = vmatprep.subr.mxu0 0.0
    %1450 = vmatpush2.msra.mxu0 0.0
    %1451 = vmatprep.subr.mxu0 0.0
    %1452 = vmatpush2.msra.mxu0 0.0
    %1453 = vmatprep.subr.mxu0 0.0
    %1454 = vmatpush2.msra.mxu0 0.0
    %1455 = vmatprep.subr.mxu0 0.0
    %1456 = vmatpush2.msra.mxu0 0.0
    %1457 = vmatprep.subr.mxu0 0.0
    %1458 = vmatpush2.msra.mxu0 0.0
    %1459 = vmatprep.subr.mxu0 0.0
    %1460 = vmatpush2.msra.mxu0 0.0
    %1461 = vmatprep.subr.mxu0 0.0
    %1462 = vmatpush2.msra.mxu0 0.0
    %1463 = vmatprep.subr.mxu0 0.0
    %1464 = vmatpush2.msra.mxu0 0.0
    %1465 = vmatprep.subr.mxu0 0.0
    %1466 = vmatpush2.msra.mxu0 0.0
    %1467 = vmatprep.subr.mxu0 0.0
    %1468 = vmatpush2.msra.mxu0 0.0
    %1469 = vmatprep.mubr.f32.mxu0 0.0
    %1470 = vmatmul.mubr.f32.gmra.mxu0 %v1403
    %v1471 = vpop.f32.mrf.mxu0
    %v1472 = vadd.f32 0.0, %v1471
    %v1473 = vpop.f32.mrf.mxu0
    %1474 = vdwg.mxu0
    %1475 = vrot.lane.b32.xlu0 %v291, 104
    %v1476 = vpop.permute.xlu0 %1475
    %1477 = vrot.lane.b32.xlu0 %v291, 72
    %v1478 = vpop.permute.xlu0 %1477
    %v1479 = vsel %vm302, %v1476, 0
    %v1481 = vsel %vm302, %v1478, 0
    %1483 = vmatprep.subr.mxu0 0.0
    %1484 = vmatpush1.xpose.msra.mxu0 0.0
    %1485 = vmatprep.subr.mxu0 0.0
    %1486 = vmatpush1.xpose.msra.mxu0 0.0
    %1487 = vmatprep.subr.mxu0 0.0
    %1488 = vmatpush1.xpose.msra.mxu0 0.0
    %1489 = vmatprep.subr.mxu0 0.0
    %1490 = vmatpush1.xpose.msra.mxu0 0.0
    %1491 = vmatprep.subr.mxu0 0.0
    %1492 = vmatpush1.xpose.msra.mxu0 0.0
    %1493 = vmatprep.subr.mxu0 0.0
    %1494 = vmatpush1.xpose.msra.mxu0 0.0
    %1495 = vmatprep.subr.mxu0 0.0
    %1496 = vmatpush1.xpose.msra.mxu0 0.0
    %1497 = vmatprep.subr.mxu0 0.0
    %1498 = vmatpush1.xpose.msra.mxu0 0.0
    %1499 = vmatprep.subr.mxu0 0.0
    %1500 = vmatpush1.xpose.msra.mxu0 0.0
    %1501 = vmatprep.subr.mxu0 0.0
    %1502 = vmatpush1.xpose.msra.mxu0 0.0
    %1503 = vmatprep.subr.mxu0 0.0
    %1504 = vmatpush1.xpose.msra.mxu0 0.0
    %1505 = vmatprep.subr.mxu0 0.0
    %1506 = vmatpush1.xpose.msra.mxu0 0.0
    %1507 = vmatprep.subr.mxu0 0.0
    %1508 = vmatpush1.xpose.msra.mxu0 0.0
    %1509 = vmatprep.subr.mxu0 0.0
    %1510 = vmatpush1.xpose.msra.mxu0 0.0
    %1511 = vmatprep.subr.mxu0 0.0
    %1512 = vmatpush1.xpose.msra.mxu0 0.0
    %1513 = vmatprep.subr.mxu0 0.0
    %1514 = vmatpush1.xpose.msra.mxu0 %v1481
    %1515 = vmatprep.subr.mxu0 0.0
    %1516 = vmatpush2.xpose.msra.mxu0 0.0
    %1517 = vmatprep.subr.mxu0 0.0
    %1518 = vmatpush2.xpose.msra.mxu0 0.0
    %1519 = vmatprep.subr.mxu0 0.0
    %1520 = vmatpush2.xpose.msra.mxu0 0.0
    %1521 = vmatprep.subr.mxu0 0.0
    %1522 = vmatpush2.xpose.msra.mxu0 0.0
    %1523 = vmatprep.subr.mxu0 0.0
    %1524 = vmatpush2.xpose.msra.mxu0 0.0
    %1525 = vmatprep.subr.mxu0 0.0
    %1526 = vmatpush2.xpose.msra.mxu0 0.0
    %1527 = vmatprep.subr.mxu0 0.0
    %1528 = vmatpush2.xpose.msra.mxu0 0.0
    %1529 = vmatprep.subr.mxu0 0.0
    %1530 = vmatpush2.xpose.msra.mxu0 0.0
    %1531 = vmatprep.subr.mxu0 0.0
    %1532 = vmatpush2.xpose.msra.mxu0 0.0
    %1533 = vmatprep.subr.mxu0 0.0
    %1534 = vmatpush2.xpose.msra.mxu0 0.0
    %1535 = vmatprep.subr.mxu0 0.0
    %1536 = vmatpush2.xpose.msra.mxu0 0.0
    %1537 = vmatprep.subr.mxu0 0.0
    %1538 = vmatpush2.xpose.msra.mxu0 0.0
    %1539 = vmatprep.subr.mxu0 0.0
    %1540 = vmatpush2.xpose.msra.mxu0 0.0
    %1541 = vmatprep.subr.mxu0 0.0
    %1542 = vmatpush2.xpose.msra.mxu0 0.0
    %1543 = vmatprep.subr.mxu0 0.0
    %1544 = vmatpush2.xpose.msra.mxu0 0.0
    %1545 = vmatprep.subr.mxu0 0.0
    %1546 = vmatpush2.xpose.msra.mxu0 0.0
    %1547 = vmatprep.mubr.f32.mxu0 0.0
    %1548 = vmatmul.mubr.f32.gmra.mxu0 %v1479
    %v1549 = vpop.f32.mrf.mxu0
    %v1550 = vadd.f32 %v980, %v1549
    %v1551 = vpop.f32.mrf.mxu0
    %1552 = vdwg.mxu0
    %v1553 = vsel %vm302, %v1550, -inf
    %1554 = vmax.xlane.f32.xlu0 %v1553
    %v1555 = vpop.xlane.xlu0 %1554
    %v1556 = vsub.f32 %v1550, %v1555
    %v1557 = vmul.f32 %v1556, 1.442695
    %v1558 = vpow.pop %v1557
    %v1559 = vsel %vm302, %v1558, 0.0
    %1560 = vadd.xlane.f32.xlu0 %v1559
    %v1561 = vpop.xlane.xlu0 %1560
    %v1562 = vrcp.pop %v1561
    %v1563 = vmul.f32 %v1558, %v1562
    %1564 = vrot.lane.b32.xlu0 %v291, 40
    %v1565 = vpop.permute.xlu0 %1564
    %v1568 = vsel %vm302, %v1563, 0
    %1570 = vmatprep.subr.mxu0 0.0
    %1571 = vmatpush1.msra.mxu0 0.0
    %1572 = vmatprep.subr.mxu0 0.0
    %1573 = vmatpush1.msra.mxu0 0.0
    %1574 = vmatprep.subr.mxu0 0.0
    %1575 = vmatpush1.msra.mxu0 0.0
    %1576 = vmatprep.subr.mxu0 0.0
    %1577 = vmatpush1.msra.mxu0 0.0
    %1578 = vmatprep.subr.mxu0 0.0
    %1579 = vmatpush1.msra.mxu0 0.0
    %1580 = vmatprep.subr.mxu0 0.0
    %1581 = vmatpush1.msra.mxu0 0.0
    %1582 = vmatprep.subr.mxu0 0.0
    %1583 = vmatpush1.msra.mxu0 0.0
    %1584 = vmatprep.subr.mxu0 0.0
    %1585 = vmatpush1.msra.mxu0 0.0
    %1586 = vmatprep.subr.mxu0 0.0
    %1587 = vmatpush1.msra.mxu0 0.0
    %1588 = vmatprep.subr.mxu0 0.0
    %1589 = vmatpush1.msra.mxu0 0.0
    %1590 = vmatprep.subr.mxu0 0.0
    %1591 = vmatpush1.msra.mxu0 0.0
    %1592 = vmatprep.subr.mxu0 0.0
    %1593 = vmatpush1.msra.mxu0 0.0
    %1594 = vmatprep.subr.mxu0 0.0
    %1595 = vmatpush1.msra.mxu0 0.0
    %1596 = vmatprep.subr.mxu0 0.0
    %1597 = vmatpush1.msra.mxu0 0.0
    %1598 = vmatprep.subr.mxu0 0.0
    %1599 = vmatpush1.msra.mxu0 0.0
    %1600 = vmatprep.subr.mxu0 0.0
    %1601 = vmatpush1.msra.mxu0 %v1565
    %1602 = vmatprep.subr.mxu0 0.0
    %1603 = vmatpush2.msra.mxu0 0.0
    %1604 = vmatprep.subr.mxu0 0.0
    %1605 = vmatpush2.msra.mxu0 0.0
    %1606 = vmatprep.subr.mxu0 0.0
    %1607 = vmatpush2.msra.mxu0 0.0
    %1608 = vmatprep.subr.mxu0 0.0
    %1609 = vmatpush2.msra.mxu0 0.0
    %1610 = vmatprep.subr.mxu0 0.0
    %1611 = vmatpush2.msra.mxu0 0.0
    %1612 = vmatprep.subr.mxu0 0.0
    %1613 = vmatpush2.msra.mxu0 0.0
    %1614 = vmatprep.subr.mxu0 0.0
    %1615 = vmatpush2.msra.mxu0 0.0
    %1616 = vmatprep.subr.mxu0 0.0
    %1617 = vmatpush2.msra.mxu0 0.0
    %1618 = vmatprep.subr.mxu0 0.0
    %1619 = vmatpush2.msra.mxu0 0.0
    %1620 = vmatprep.subr.mxu0 0.0
    %1621 = vmatpush2.msra.mxu0 0.0
    %1622 = vmatprep.subr.mxu0 0.0
    %1623 = vmatpush2.msra.mxu0 0.0
    %1624 = vmatprep.subr.mxu0 0.0
    %1625 = vmatpush2.msra.mxu0 0.0
    %1626 = vmatprep.subr.mxu0 0.0
    %1627 = vmatpush2.msra.mxu0 0.0
    %1628 = vmatprep.subr.mxu0 0.0
    %1629 = vmatpush2.msra.mxu0 0.0
    %1630 = vmatprep.subr.mxu0 0.0
    %1631 = vmatpush2.msra.mxu0 0.0
    %1632 = vmatprep.subr.mxu0 0.0
    %1633 = vmatpush2.msra.mxu0 0.0
    %1634 = vmatprep.mubr.f32.mxu0 0.0
    %1635 = vmatmul.mubr.f32.gmra.mxu0 %v1568
    %v1636 = vpop.f32.mrf.mxu0
    %v1637 = vadd.f32 0.0, %v1636
    %v1638 = vpop.f32.mrf.mxu0
    %1639 = vdwg.mxu0
    %1641 = vrot.lane.b32.xlu0 %v1307, 8
    %v1642 = vpop.permute.xlu0 %1641
    %1645 = vrot.lane.b32.xlu0 %v1472, 16
    %v1646 = vpop.permute.xlu0 %1645
    %1649 = vrot.lane.b32.xlu0 %v1637, 24
    %v1650 = vpop.permute.xlu0 %1649
    %v1652 = vsel %vm302, %v1142, %v1642
    %v1653 = vsel %vm972, %v1652, %v1646
    %v1654 = vsel %vm974, %v1653, %v1650
    %v1655 = vld [vmem:[%s4] sm:$0xff]
    %v1656 = vld [vmem:[%s4 + $0x8] sm:$0xff]
    %v1657 = vld [vmem:[%s4 + $0x10] sm:$0xff]
    %v1658 = vld [vmem:[%s4 + $0x18] sm:$0xff]
    %v1659 = vld [vmem:[%s8 + $0x4] sm:$0x1]
    %v1660 = vlaneseq
    %v1661 = vshrl.u32 %v1660, 7
    %v1662 = vsub.s32 0, %v1661
    %v1663 = vrot.slane %v1659, %v1662
    %v1665 = vsel %vm164, %v975, 0
    %v1668 = vsel %vm164, %v1654, 0
    %1670 = vmatprep.subr.mxu0 0.0
    %1671 = vmatpush1.msra.mxu0 0.0
    %1672 = vmatprep.subr.mxu0 0.0
    %1673 = vmatpush1.msra.mxu0 0.0
    %1674 = vmatprep.subr.mxu0 0.0
    %1675 = vmatpush1.msra.mxu0 0.0
    %1676 = vmatprep.subr.mxu0 0.0
    %1677 = vmatpush1.msra.mxu0 0.0
    %1678 = vmatprep.subr.mxu0 0.0
    %1679 = vmatpush1.msra.mxu0 0.0
    %1680 = vmatprep.subr.mxu0 0.0
    %1681 = vmatpush1.msra.mxu0 0.0
    %1682 = vmatprep.subr.mxu0 0.0
    %1683 = vmatpush1.msra.mxu0 0.0
    %1684 = vmatprep.subr.mxu0 0.0
    %1685 = vmatpush1.msra.mxu0 0.0
    %1686 = vmatprep.subr.mxu0 0.0
    %1687 = vmatpush1.msra.mxu0 0.0
    %1688 = vmatprep.subr.mxu0 0.0
    %1689 = vmatpush1.msra.mxu0 0.0
    %1690 = vmatprep.subr.mxu0 0.0
    %1691 = vmatpush1.msra.mxu0 0.0
    %1692 = vmatprep.subr.mxu0 0.0
    %1693 = vmatpush1.msra.mxu0 0.0
    %1694 = vmatprep.subr.mxu0 0.0
    %1695 = vmatpush1.msra.mxu0 %v1658
    %1696 = vmatprep.subr.mxu0 0.0
    %1697 = vmatpush1.msra.mxu0 %v1657
    %1698 = vmatprep.subr.mxu0 0.0
    %1699 = vmatpush1.msra.mxu0 %v1656
    %1700 = vmatprep.subr.mxu0 0.0
    %1701 = vmatpush1.msra.mxu0 %v1655
    %1702 = vmatprep.subr.mxu0 0.0
    %1703 = vmatpush2.msra.mxu0 0.0
    %1704 = vmatprep.subr.mxu0 0.0
    %1705 = vmatpush2.msra.mxu0 0.0
    %1706 = vmatprep.subr.mxu0 0.0
    %1707 = vmatpush2.msra.mxu0 0.0
    %1708 = vmatprep.subr.mxu0 0.0
    %1709 = vmatpush2.msra.mxu0 0.0
    %1710 = vmatprep.subr.mxu0 0.0
    %1711 = vmatpush2.msra.mxu0 0.0
    %1712 = vmatprep.subr.mxu0 0.0
    %1713 = vmatpush2.msra.mxu0 0.0
    %1714 = vmatprep.subr.mxu0 0.0
    %1715 = vmatpush2.msra.mxu0 0.0
    %1716 = vmatprep.subr.mxu0 0.0
    %1717 = vmatpush2.msra.mxu0 0.0
    %1718 = vmatprep.subr.mxu0 0.0
    %1719 = vmatpush2.msra.mxu0 0.0
    %1720 = vmatprep.subr.mxu0 0.0
    %1721 = vmatpush2.msra.mxu0 0.0
    %1722 = vmatprep.subr.mxu0 0.0
    %1723 = vmatpush2.msra.mxu0 0.0
    %1724 = vmatprep.subr.mxu0 0.0
    %1725 = vmatpush2.msra.mxu0 0.0
    %1726 = vmatprep.subr.mxu0 0.0
    %1727 = vmatpush2.msra.mxu0 0.0
    %1728 = vmatprep.subr.mxu0 0.0
    %1729 = vmatpush2.msra.mxu0 0.0
    %1730 = vmatprep.subr.mxu0 0.0
    %1731 = vmatpush2.msra.mxu0 0.0
    %1732 = vmatprep.subr.mxu0 0.0
    %1733 = vmatpush2.msra.mxu0 0.0
    %1734 = vmatprep.mubr.f32.mxu0 0.0
    %1735 = vmatmul.mubr.f32.gmra.mxu0 %v1665
    %v1736 = vpop.f32.mrf.mxu0
    %v1737 = vadd.f32 %v1663, %v1736
    %v1738 = vpop.f32.mrf.mxu0
    %1739 = vmatprep.mubr.f32.mxu0 0.0
    %1740 = vmatmul.mubr.f32.gmra.mxu0 %v1668
    %v1741 = vpop.f32.mrf.mxu0
    %v1742 = vadd.f32 %v1663, %v1741
    %v1743 = vpop.f32.mrf.mxu0
    %1744 = vdwg.mxu0
    %v1745 = vadd.f32 %v202, %v1737
    %v1746 = vadd.f32 %v203, %v1742
    %v1747 = vld [vmem:[%s8 + $0x5] sm:$0x1]
    %v1748 = vld [vmem:[%s8 + $0x6] sm:$0x1]
    %v1749 = vsel %vm164, %v1745, 0.0
    %1750 = vadd.xlane.f32.xlu0 %v1749
    %v1751 = vpop.xlane.xlu0 %1750
    %v1752 = vsel %vm164, %v1746, 0.0
    %1753 = vadd.xlane.f32.xlu0 %v1752
    %v1754 = vpop.xlane.xlu0 %1753
    %v1755 = vmul.f32 %v1751, %v171
    %v1756 = vmul.f32 %v1754, %v171
    %v1757 = vsub.f32 %v1745, %v1755
    %v1758 = vsub.f32 %v1746, %v1756
    %v1759 = vmul.f32 %v1757, %v1757
    %v1760 = vmul.f32 %v1758, %v1758
    %v1761 = vsel %vm164, %v1759, 0.0
    %1762 = vadd.xlane.f32.xlu0 %v1761
    %v1763 = vpop.xlane.xlu0 %1762
    %v1764 = vsel %vm164, %v1760, 0.0
    %1765 = vadd.xlane.f32.xlu0 %v1764
    %v1766 = vpop.xlane.xlu0 %1765
    %v1767 = vmul.f32 %v1763, %v171
    %v1768 = vmul.f32 %v1766, %v171
    %v1769 = vadd.f32 %v1767, 1e-12
    %v1770 = vadd.f32 %v1768, 1e-12
    %v1771 = vrsqrt.pop %v1769
    %v1772 = vrsqrt.pop %v1770
    %v1773 = vmul.f32 %v1757, %v1771
    %v1774 = vmul.f32 %v1758, %v1772
    %v1775 = vlaneseq
    %v1776 = vshrl.u32 %v1775, 7
    %v1777 = vsub.s32 0, %v1776
    %v1778 = vrot.slane %v1747, %v1777
    %v1779 = vmul.f32 %v1773, %v1778
    %v1780 = vmul.f32 %v1774, %v1778
    %v1781 = vlaneseq
    %v1782 = vshrl.u32 %v1781, 7
    %v1783 = vsub.s32 0, %v1782
    %v1784 = vrot.slane %v1748, %v1783
    %v1785 = vadd.f32 %v1779, %v1784
    %v1786 = vadd.f32 %v1780, %v1784
    %v1787 = vld [vmem:[%s5] sm:$0xff]
    %v1788 = vld [vmem:[%s5 + $0x8] sm:$0xff]
    %v1789 = vld [vmem:[%s5 + $0x10] sm:$0xff]
    %v1790 = vld [vmem:[%s5 + $0x18] sm:$0xff]
    %v1791 = vld [vmem:[%s8 + $0x7] sm:$0x1]
    %v1792 = vlaneseq
    %v1793 = vshrl.u32 %v1792, 7
    %v1794 = vsub.s32 0, %v1793
    %v1795 = vrot.slane %v1791, %v1794
    %v1797 = vsel %vm164, %v1785, 0
    %v1800 = vsel %vm164, %v1786, 0
    %1802 = vmatprep.subr.mxu0 0.0
    %1803 = vmatpush1.msra.mxu0 0.0
    %1804 = vmatprep.subr.mxu0 0.0
    %1805 = vmatpush1.msra.mxu0 0.0
    %1806 = vmatprep.subr.mxu0 0.0
    %1807 = vmatpush1.msra.mxu0 0.0
    %1808 = vmatprep.subr.mxu0 0.0
    %1809 = vmatpush1.msra.mxu0 0.0
    %1810 = vmatprep.subr.mxu0 0.0
    %1811 = vmatpush1.msra.mxu0 0.0
    %1812 = vmatprep.subr.mxu0 0.0
    %1813 = vmatpush1.msra.mxu0 0.0
    %1814 = vmatprep.subr.mxu0 0.0
    %1815 = vmatpush1.msra.mxu0 0.0
    %1816 = vmatprep.subr.mxu0 0.0
    %1817 = vmatpush1.msra.mxu0 0.0
    %1818 = vmatprep.subr.mxu0 0.0
    %1819 = vmatpush1.msra.mxu0 0.0
    %1820 = vmatprep.subr.mxu0 0.0
    %1821 = vmatpush1.msra.mxu0 0.0
    %1822 = vmatprep.subr.mxu0 0.0
    %1823 = vmatpush1.msra.mxu0 0.0
    %1824 = vmatprep.subr.mxu0 0.0
    %1825 = vmatpush1.msra.mxu0 0.0
    %1826 = vmatprep.subr.mxu0 0.0
    %1827 = vmatpush1.msra.mxu0 %v1790
    %1828 = vmatprep.subr.mxu0 0.0
    %1829 = vmatpush1.msra.mxu0 %v1789
    %1830 = vmatprep.subr.mxu0 0.0
    %1831 = vmatpush1.msra.mxu0 %v1788
    %1832 = vmatprep.subr.mxu0 0.0
    %1833 = vmatpush1.msra.mxu0 %v1787
    %1834 = vmatprep.subr.mxu0 0.0
    %1835 = vmatpush2.msra.mxu0 0.0
    %1836 = vmatprep.subr.mxu0 0.0
    %1837 = vmatpush2.msra.mxu0 0.0
    %1838 = vmatprep.subr.mxu0 0.0
    %1839 = vmatpush2.msra.mxu0 0.0
    %1840 = vmatprep.subr.mxu0 0.0
    %1841 = vmatpush2.msra.mxu0 0.0
    %1842 = vmatprep.subr.mxu0 0.0
    %1843 = vmatpush2.msra.mxu0 0.0
    %1844 = vmatprep.subr.mxu0 0.0
    %1845 = vmatpush2.msra.mxu0 0.0
    %1846 = vmatprep.subr.mxu0 0.0
    %1847 = vmatpush2.msra.mxu0 0.0
    %1848 = vmatprep.subr.mxu0 0.0
    %1849 = vmatpush2.msra.mxu0 0.0
    %1850 = vmatprep.subr.mxu0 0.0
    %1851 = vmatpush2.msra.mxu0 0.0
    %1852 = vmatprep.subr.mxu0 0.0
    %1853 = vmatpush2.msra.mxu0 0.0
    %1854 = vmatprep.subr.mxu0 0.0
    %1855 = vmatpush2.msra.mxu0 0.0
    %1856 = vmatprep.subr.mxu0 0.0
    %1857 = vmatpush2.msra.mxu0 0.0
    %1858 = vmatprep.subr.mxu0 0.0
    %1859 = vmatpush2.msra.mxu0 0.0
    %1860 = vmatprep.subr.mxu0 0.0
    %1861 = vmatpush2.msra.mxu0 0.0
    %1862 = vmatprep.subr.mxu0 0.0
    %1863 = vmatpush2.msra.mxu0 0.0
    %1864 = vmatprep.subr.mxu0 0.0
    %1865 = vmatpush2.msra.mxu0 0.0
    %1866 = vmatprep.mubr.f32.mxu0 0.0
    %1867 = vmatmul.mubr.f32.gmra.mxu0 %v1797
    %v1868 = vpop.f32.mrf.mxu0
    %v1869 = vadd.f32 %v1795, %v1868
    %v1870 = vpop.f32.mrf.mxu0
    %1871 = vmatprep.mubr.f32.mxu0 0.0
    %1872 = vmatmul.mubr.f32.gmra.mxu0 %v1800
    %v1873 = vpop.f32.mrf.mxu0
    %v1874 = vadd.f32 %v1795, %v1873
    %v1875 = vpop.f32.mrf.mxu0
    %1876 = vdwg.mxu0
    %v1877 = vmul.f32 %v1869, 0.5
    %v1878 = vmul.f32 %v1874, 0.5
    %v1879 = vmul.f32 %v1869, 0.70710677
    %v1880 = vmul.f32 %v1874, 0.70710677
    %v1881 = verf.f32.pop %v1879
    %v1882 = verf.f32.pop %v1880
    %v1883 = vadd.f32 %v1881, 1.0
    %v1884 = vadd.f32 %v1882, 1.0
    %v1885 = vmul.f32 %v1877, %v1883
    %v1886 = vmul.f32 %v1878, %v1884
    %v1887 = vld [vmem:[%s6] sm:$0xff]
    %v1888 = vld [vmem:[%s6 + $0x8] sm:$0xff]
    %v1889 = vld [vmem:[%s6 + $0x10] sm:$0xff]
    %v1890 = vld [vmem:[%s6 + $0x18] sm:$0xff]
    %v1891 = vld [vmem:[%s6 + $0x20] sm:$0xff]
    %v1892 = vld [vmem:[%s6 + $0x28] sm:$0xff]
    %v1893 = vld [vmem:[%s6 + $0x30] sm:$0xff]
    %v1894 = vld [vmem:[%s6 + $0x38] sm:$0xff]
    %v1895 = vld [vmem:[%s6 + $0x40] sm:$0xff]
    %v1896 = vld [vmem:[%s6 + $0x48] sm:$0xff]
    %v1897 = vld [vmem:[%s6 + $0x50] sm:$0xff]
    %v1898 = vld [vmem:[%s6 + $0x58] sm:$0xff]
    %v1899 = vld [vmem:[%s6 + $0x60] sm:$0xff]
    %v1900 = vld [vmem:[%s6 + $0x68] sm:$0xff]
    %v1901 = vld [vmem:[%s6 + $0x70] sm:$0xff]
    %v1902 = vld [vmem:[%s6 + $0x78] sm:$0xff]
    %v1903 = vld [vmem:[%s8 + $0x8] sm:$0x1]
    %v1904 = vlaneseq
    %v1905 = vshrl.u32 %v1904, 7
    %v1906 = vsub.s32 0, %v1905
    %v1907 = vrot.slane %v1903, %v1906
    %1908 = vmatprep.subr.mxu0 0.0
    %1909 = vmatpush1.msra.mxu0 %v1902
    %1910 = vmatprep.subr.mxu0 0.0
    %1911 = vmatpush1.msra.mxu0 %v1901
    %1912 = vmatprep.subr.mxu0 0.0
    %1913 = vmatpush1.msra.mxu0 %v1900
    %1914 = vmatprep.subr.mxu0 0.0
    %1915 = vmatpush1.msra.mxu0 %v1899
    %1916 = vmatprep.subr.mxu0 0.0
    %1917 = vmatpush1.msra.mxu0 %v1898
    %1918 = vmatprep.subr.mxu0 0.0
    %1919 = vmatpush1.msra.mxu0 %v1897
    %1920 = vmatprep.subr.mxu0 0.0
    %1921 = vmatpush1.msra.mxu0 %v1896
    %1922 = vmatprep.subr.mxu0 0.0
    %1923 = vmatpush1.msra.mxu0 %v1895
    %1924 = vmatprep.subr.mxu0 0.0
    %1925 = vmatpush1.msra.mxu0 %v1894
    %1926 = vmatprep.subr.mxu0 0.0
    %1927 = vmatpush1.msra.mxu0 %v1893
    %1928 = vmatprep.subr.mxu0 0.0
    %1929 = vmatpush1.msra.mxu0 %v1892
    %1930 = vmatprep.subr.mxu0 0.0
    %1931 = vmatpush1.msra.mxu0 %v1891
    %1932 = vmatprep.subr.mxu0 0.0
    %1933 = vmatpush1.msra.mxu0 %v1890
    %1934 = vmatprep.subr.mxu0 0.0
    %1935 = vmatpush1.msra.mxu0 %v1889
    %1936 = vmatprep.subr.mxu0 0.0
    %1937 = vmatpush1.msra.mxu0 %v1888
    %1938 = vmatprep.subr.mxu0 0.0
    %1939 = vmatpush1.msra.mxu0 %v1887
    %1940 = vmatprep.subr.mxu0 0.0
    %1941 = vmatpush2.msra.mxu0 0.0
    %1942 = vmatprep.subr.mxu0 0.0
    %1943 = vmatpush2.msra.mxu0 0.0
    %1944 = vmatprep.subr.mxu0 0.0
    %1945 = vmatpush2.msra.mxu0 0.0
    %1946 = vmatprep.subr.mxu0 0.0
    %1947 = vmatpush2.msra.mxu0 0.0
    %1948 = vmatprep.subr.mxu0 0.0
    %1949 = vmatpush2.msra.mxu0 0.0
    %1950 = vmatprep.subr.mxu0 0.0
    %1951 = vmatpush2.msra.mxu0 0.0
    %1952 = vmatprep.subr.mxu0 0.0
    %1953 = vmatpush2.msra.mxu0 0.0
    %1954 = vmatprep.subr.mxu0 0.0
    %1955 = vmatpush2.msra.mxu0 0.0
    %1956 = vmatprep.subr.mxu0 0.0
    %1957 = vmatpush2.msra.mxu0 0.0
    %1958 = vmatprep.subr.mxu0 0.0
    %1959 = vmatpush2.msra.mxu0 0.0
    %1960 = vmatprep.subr.mxu0 0.0
    %1961 = vmatpush2.msra.mxu0 0.0
    %1962 = vmatprep.subr.mxu0 0.0
    %1963 = vmatpush2.msra.mxu0 0.0
    %1964 = vmatprep.subr.mxu0 0.0
    %1965 = vmatpush2.msra.mxu0 0.0
    %1966 = vmatprep.subr.mxu0 0.0
    %1967 = vmatpush2.msra.mxu0 0.0
    %1968 = vmatprep.subr.mxu0 0.0
    %1969 = vmatpush2.msra.mxu0 0.0
    %1970 = vmatprep.subr.mxu0 0.0
    %1971 = vmatpush2.msra.mxu0 0.0
    %1972 = vmatprep.mubr.f32.mxu0 0.0
    %1973 = vmatmul.mubr.f32.gmra.mxu0 %v1885
    %v1974 = vpop.f32.mrf.mxu0
    %v1975 = vadd.f32 %v1907, %v1974
    %v1976 = vpop.f32.mrf.mxu0
    %1977 = vmatprep.mubr.f32.mxu0 0.0
    %1978 = vmatmul.mubr.f32.gmra.mxu0 %v1886
    %v1979 = vpop.f32.mrf.mxu0
    %v1980 = vadd.f32 %v1907, %v1979
    %v1981 = vpop.f32.mrf.mxu0
    %1982 = vdwg.mxu0
    %v1983 = vadd.f32 %v1785, %v1975
    %v1984 = vadd.f32 %v1786, %v1980
    %v1985 = vld [vmem:[%s8 + $0x9] sm:$0x1]
    %v1986 = vld [vmem:[%s8 + $0xa] sm:$0x1]
    %v1987 = vsel %vm164, %v1983, 0.0
    %1988 = vadd.xlane.f32.xlu0 %v1987
    %v1989 = vpop.xlane.xlu0 %1988
    %v1990 = vsel %vm164, %v1984, 0.0
    %1991 = vadd.xlane.f32.xlu0 %v1990
    %v1992 = vpop.xlane.xlu0 %1991
    %v1993 = vmul.f32 %v1989, %v171
    %v1994 = vmul.f32 %v1992, %v171
    %v1995 = vsub.f32 %v1983, %v1993
    %v1996 = vsub.f32 %v1984, %v1994
    %v1997 = vmul.f32 %v1995, %v1995
    %v1998 = vmul.f32 %v1996, %v1996
    %v1999 = vsel %vm164, %v1997, 0.0
    %2000 = vadd.xlane.f32.xlu0 %v1999
    %v2001 = vpop.xlane.xlu0 %2000
    %v2002 = vsel %vm164, %v1998, 0.0
    %2003 = vadd.xlane.f32.xlu0 %v2002
    %v2004 = vpop.xlane.xlu0 %2003
    %v2005 = vmul.f32 %v2001, %v171
    %v2006 = vmul.f32 %v2004, %v171
    %v2007 = vadd.f32 %v2005, 1e-12
    %v2008 = vadd.f32 %v2006, 1e-12
    %v2009 = vrsqrt.pop %v2007
    %v2010 = vrsqrt.pop %v2008
    %v2011 = vmul.f32 %v1995, %v2009
    %v2012 = vmul.f32 %v1996, %v2010
    %v2013 = vlaneseq
    %v2014 = vshrl.u32 %v2013, 7
    %v2015 = vsub.s32 0, %v2014
    %v2016 = vrot.slane %v1985, %v2015
    %v2017 = vmul.f32 %v2011, %v2016
    %v2018 = vmul.f32 %v2012, %v2016
    %v2019 = vlaneseq
    %v2020 = vshrl.u32 %v2019, 7
    %v2021 = vsub.s32 0, %v2020
    %v2022 = vrot.slane %v1986, %v2021
    %v2023 = vadd.f32 %v2017, %v2022
    %v2024 = vadd.f32 %v2018, %v2022
    %s2025 = scalar_lea.vmem %s3, 32
    %v2026 = vld [vmem:[%s2025] sm:$0xff]
    %v2027 = vld [vmem:[%s2025 + $0x8] sm:$0xff]
    %v2028 = vld [vmem:[%s2025 + $0x10] sm:$0xff]
    %v2029 = vld [vmem:[%s2025 + $0x18] sm:$0xff]
    %v2030 = vld [vmem:[%s8 + $0xb] sm:$0x1]
    %v2031 = vlaneseq
    %v2032 = vshrl.u32 %v2031, 7
    %v2033 = vsub.s32 0, %v2032
    %v2034 = vrot.slane %v2030, %v2033
    %v2036 = vsel %vm164, %v2023, 0
    %v2039 = vsel %vm164, %v2024, 0
    %2041 = vmatprep.subr.mxu0 0.0
    %2042 = vmatpush1.msra.mxu0 0.0
    %2043 = vmatprep.subr.mxu0 0.0
    %2044 = vmatpush1.msra.mxu0 0.0
    %2045 = vmatprep.subr.mxu0 0.0
    %2046 = vmatpush1.msra.mxu0 0.0
    %2047 = vmatprep.subr.mxu0 0.0
    %2048 = vmatpush1.msra.mxu0 0.0
    %2049 = vmatprep.subr.mxu0 0.0
    %2050 = vmatpush1.msra.mxu0 0.0
    %2051 = vmatprep.subr.mxu0 0.0
    %2052 = vmatpush1.msra.mxu0 0.0
    %2053 = vmatprep.subr.mxu0 0.0
    %2054 = vmatpush1.msra.mxu0 0.0
    %2055 = vmatprep.subr.mxu0 0.0
    %2056 = vmatpush1.msra.mxu0 0.0
    %2057 = vmatprep.subr.mxu0 0.0
    %2058 = vmatpush1.msra.mxu0 0.0
    %2059 = vmatprep.subr.mxu0 0.0
    %2060 = vmatpush1.msra.mxu0 0.0
    %2061 = vmatprep.subr.mxu0 0.0
    %2062 = vmatpush1.msra.mxu0 0.0
    %2063 = vmatprep.subr.mxu0 0.0
    %2064 = vmatpush1.msra.mxu0 0.0
    %2065 = vmatprep.subr.mxu0 0.0
    %2066 = vmatpush1.msra.mxu0 %v2029
    %2067 = vmatprep.subr.mxu0 0.0
    %2068 = vmatpush1.msra.mxu0 %v2028
    %2069 = vmatprep.subr.mxu0 0.0
    %2070 = vmatpush1.msra.mxu0 %v2027
    %2071 = vmatprep.subr.mxu0 0.0
    %2072 = vmatpush1.msra.mxu0 %v2026
    %2073 = vmatprep.subr.mxu0 0.0
    %2074 = vmatpush2.msra.mxu0 0.0
    %2075 = vmatprep.subr.mxu0 0.0
    %2076 = vmatpush2.msra.mxu0 0.0
    %2077 = vmatprep.subr.mxu0 0.0
    %2078 = vmatpush2.msra.mxu0 0.0
    %2079 = vmatprep.subr.mxu0 0.0
    %2080 = vmatpush2.msra.mxu0 0.0
    %2081 = vmatprep.subr.mxu0 0.0
    %2082 = vmatpush2.msra.mxu0 0.0
    %2083 = vmatprep.subr.mxu0 0.0
    %2084 = vmatpush2.msra.mxu0 0.0
    %2085 = vmatprep.subr.mxu0 0.0
    %2086 = vmatpush2.msra.mxu0 0.0
    %2087 = vmatprep.subr.mxu0 0.0
    %2088 = vmatpush2.msra.mxu0 0.0
    %2089 = vmatprep.subr.mxu0 0.0
    %2090 = vmatpush2.msra.mxu0 0.0
    %2091 = vmatprep.subr.mxu0 0.0
    %2092 = vmatpush2.msra.mxu0 0.0
    %2093 = vmatprep.subr.mxu0 0.0
    %2094 = vmatpush2.msra.mxu0 0.0
    %2095 = vmatprep.subr.mxu0 0.0
    %2096 = vmatpush2.msra.mxu0 0.0
    %2097 = vmatprep.subr.mxu0 0.0
    %2098 = vmatpush2.msra.mxu0 0.0
    %2099 = vmatprep.subr.mxu0 0.0
    %2100 = vmatpush2.msra.mxu0 0.0
    %2101 = vmatprep.subr.mxu0 0.0
    %2102 = vmatpush2.msra.mxu0 0.0
    %2103 = vmatprep.subr.mxu0 0.0
    %2104 = vmatpush2.msra.mxu0 0.0
    %2105 = vmatprep.mubr.f32.mxu0 0.0
    %2106 = vmatmul.mubr.f32.gmra.mxu0 %v2036
    %v2107 = vpop.f32.mrf.mxu0
    %v2108 = vadd.f32 %v2034, %v2107
    %v2109 = vpop.f32.mrf.mxu0
    %2110 = vmatprep.mubr.f32.mxu0 0.0
    %2111 = vmatmul.mubr.f32.gmra.mxu0 %v2039
    %v2112 = vpop.f32.mrf.mxu0
    %v2113 = vadd.f32 %v2034, %v2112
    %v2114 = vpop.f32.mrf.mxu0
    %2115 = vdwg.mxu0
    %2117 = vrot.lane.b32.xlu0 %v2108, 96
    %v2118 = vpop.permute.xlu0 %2117
    %v2119 = vsel %vm302, %v2108, 0
    %v2121 = vsel %vm302, %v2118, 0
    %2123 = vmatprep.subr.mxu0 0.0
    %2124 = vmatpush1.xpose.msra.mxu0 0.0
    %2125 = vmatprep.subr.mxu0 0.0
    %2126 = vmatpush1.xpose.msra.mxu0 0.0
    %2127 = vmatprep.subr.mxu0 0.0
    %2128 = vmatpush1.xpose.msra.mxu0 0.0
    %2129 = vmatprep.subr.mxu0 0.0
    %2130 = vmatpush1.xpose.msra.mxu0 0.0
    %2131 = vmatprep.subr.mxu0 0.0
    %2132 = vmatpush1.xpose.msra.mxu0 0.0
    %2133 = vmatprep.subr.mxu0 0.0
    %2134 = vmatpush1.xpose.msra.mxu0 0.0
    %2135 = vmatprep.subr.mxu0 0.0
    %2136 = vmatpush1.xpose.msra.mxu0 0.0
    %2137 = vmatprep.subr.mxu0 0.0
    %2138 = vmatpush1.xpose.msra.mxu0 0.0
    %2139 = vmatprep.subr.mxu0 0.0
    %2140 = vmatpush1.xpose.msra.mxu0 0.0
    %2141 = vmatprep.subr.mxu0 0.0
    %2142 = vmatpush1.xpose.msra.mxu0 0.0
    %2143 = vmatprep.subr.mxu0 0.0
    %2144 = vmatpush1.xpose.msra.mxu0 0.0
    %2145 = vmatprep.subr.mxu0 0.0
    %2146 = vmatpush1.xpose.msra.mxu0 0.0
    %2147 = vmatprep.subr.mxu0 0.0
    %2148 = vmatpush1.xpose.msra.mxu0 0.0
    %2149 = vmatprep.subr.mxu0 0.0
    %2150 = vmatpush1.xpose.msra.mxu0 0.0
    %2151 = vmatprep.subr.mxu0 0.0
    %2152 = vmatpush1.xpose.msra.mxu0 0.0
    %2153 = vmatprep.subr.mxu0 0.0
    %2154 = vmatpush1.xpose.msra.mxu0 %v2121
    %2155 = vmatprep.subr.mxu0 0.0
    %2156 = vmatpush2.xpose.msra.mxu0 0.0
    %2157 = vmatprep.subr.mxu0 0.0
    %2158 = vmatpush2.xpose.msra.mxu0 0.0
    %2159 = vmatprep.subr.mxu0 0.0
    %2160 = vmatpush2.xpose.msra.mxu0 0.0
    %2161 = vmatprep.subr.mxu0 0.0
    %2162 = vmatpush2.xpose.msra.mxu0 0.0
    %2163 = vmatprep.subr.mxu0 0.0
    %2164 = vmatpush2.xpose.msra.mxu0 0.0
    %2165 = vmatprep.subr.mxu0 0.0
    %2166 = vmatpush2.xpose.msra.mxu0 0.0
    %2167 = vmatprep.subr.mxu0 0.0
    %2168 = vmatpush2.xpose.msra.mxu0 0.0
    %2169 = vmatprep.subr.mxu0 0.0
    %2170 = vmatpush2.xpose.msra.mxu0 0.0
    %2171 = vmatprep.subr.mxu0 0.0
    %2172 = vmatpush2.xpose.msra.mxu0 0.0
    %2173 = vmatprep.subr.mxu0 0.0
    %2174 = vmatpush2.xpose.msra.mxu0 0.0
    %2175 = vmatprep.subr.mxu0 0.0
    %2176 = vmatpush2.xpose.msra.mxu0 0.0
    %2177 = vmatprep.subr.mxu0 0.0
    %2178 = vmatpush2.xpose.msra.mxu0 0.0
    %2179 = vmatprep.subr.mxu0 0.0
    %2180 = vmatpush2.xpose.msra.mxu0 0.0
    %2181 = vmatprep.subr.mxu0 0.0
    %2182 = vmatpush2.xpose.msra.mxu0 0.0
    %2183 = vmatprep.subr.mxu0 0.0
    %2184 = vmatpush2.xpose.msra.mxu0 0.0
    %2185 = vmatprep.subr.mxu0 0.0
    %2186 = vmatpush2.xpose.msra.mxu0 0.0
    %2187 = vmatprep.mubr.f32.mxu0 0.0
    %2188 = vmatmul.mubr.f32.gmra.mxu0 %v2119
    %v2189 = vpop.f32.mrf.mxu0
    %v2190 = vadd.f32 %v298, %v2189
    %v2191 = vpop.f32.mrf.mxu0
    %2192 = vdwg.mxu0
    %v2193 = vsel %vm302, %v2190, -inf
    %2194 = vmax.xlane.f32.xlu0 %v2193
    %v2195 = vpop.xlane.xlu0 %2194
    %v2196 = vsub.f32 %v2190, %v2195
    %v2197 = vmul.f32 %v2196, 1.442695
    %v2198 = vpow.pop %v2197
    %v2199 = vsel %vm302, %v2198, 0.0
    %2200 = vadd.xlane.f32.xlu0 %v2199
    %v2201 = vpop.xlane.xlu0 %2200
    %v2202 = vrcp.pop %v2201
    %v2203 = vmul.f32 %v2198, %v2202
    %2204 = vrot.lane.b32.xlu0 %v2108, 64
    %v2205 = vpop.permute.xlu0 %2204
    %v2208 = vsel %vm302, %v2203, 0
    %2210 = vmatprep.subr.mxu0 0.0
    %2211 = vmatpush1.msra.mxu0 0.0
    %2212 = vmatprep.subr.mxu0 0.0
    %2213 = vmatpush1.msra.mxu0 0.0
    %2214 = vmatprep.subr.mxu0 0.0
    %2215 = vmatpush1.msra.mxu0 0.0
    %2216 = vmatprep.subr.mxu0 0.0
    %2217 = vmatpush1.msra.mxu0 0.0
    %2218 = vmatprep.subr.mxu0 0.0
    %2219 = vmatpush1.msra.mxu0 0.0
    %2220 = vmatprep.subr.mxu0 0.0
    %2221 = vmatpush1.msra.mxu0 0.0
    %2222 = vmatprep.subr.mxu0 0.0
    %2223 = vmatpush1.msra.mxu0 0.0
    %2224 = vmatprep.subr.mxu0 0.0
    %2225 = vmatpush1.msra.mxu0 0.0
    %2226 = vmatprep.subr.mxu0 0.0
    %2227 = vmatpush1.msra.mxu0 0.0
    %2228 = vmatprep.subr.mxu0 0.0
    %2229 = vmatpush1.msra.mxu0 0.0
    %2230 = vmatprep.subr.mxu0 0.0
    %2231 = vmatpush1.msra.mxu0 0.0
    %2232 = vmatprep.subr.mxu0 0.0
    %2233 = vmatpush1.msra.mxu0 0.0
    %2234 = vmatprep.subr.mxu0 0.0
    %2235 = vmatpush1.msra.mxu0 0.0
    %2236 = vmatprep.subr.mxu0 0.0
    %2237 = vmatpush1.msra.mxu0 0.0
    %2238 = vmatprep.subr.mxu0 0.0
    %2239 = vmatpush1.msra.mxu0 0.0
    %2240 = vmatprep.subr.mxu0 0.0
    %2241 = vmatpush1.msra.mxu0 %v2205
    %2242 = vmatprep.subr.mxu0 0.0
    %2243 = vmatpush2.msra.mxu0 0.0
    %2244 = vmatprep.subr.mxu0 0.0
    %2245 = vmatpush2.msra.mxu0 0.0
    %2246 = vmatprep.subr.mxu0 0.0
    %2247 = vmatpush2.msra.mxu0 0.0
    %2248 = vmatprep.subr.mxu0 0.0
    %2249 = vmatpush2.msra.mxu0 0.0
    %2250 = vmatprep.subr.mxu0 0.0
    %2251 = vmatpush2.msra.mxu0 0.0
    %2252 = vmatprep.subr.mxu0 0.0
    %2253 = vmatpush2.msra.mxu0 0.0
    %2254 = vmatprep.subr.mxu0 0.0
    %2255 = vmatpush2.msra.mxu0 0.0
    %2256 = vmatprep.subr.mxu0 0.0
    %2257 = vmatpush2.msra.mxu0 0.0
    %2258 = vmatprep.subr.mxu0 0.0
    %2259 = vmatpush2.msra.mxu0 0.0
    %2260 = vmatprep.subr.mxu0 0.0
    %2261 = vmatpush2.msra.mxu0 0.0
    %2262 = vmatprep.subr.mxu0 0.0
    %2263 = vmatpush2.msra.mxu0 0.0
    %2264 = vmatprep.subr.mxu0 0.0
    %2265 = vmatpush2.msra.mxu0 0.0
    %2266 = vmatprep.subr.mxu0 0.0
    %2267 = vmatpush2.msra.mxu0 0.0
    %2268 = vmatprep.subr.mxu0 0.0
    %2269 = vmatpush2.msra.mxu0 0.0
    %2270 = vmatprep.subr.mxu0 0.0
    %2271 = vmatpush2.msra.mxu0 0.0
    %2272 = vmatprep.subr.mxu0 0.0
    %2273 = vmatpush2.msra.mxu0 0.0
    %2274 = vmatprep.mubr.f32.mxu0 0.0
    %2275 = vmatmul.mubr.f32.gmra.mxu0 %v2208
    %v2276 = vpop.f32.mrf.mxu0
    %v2277 = vadd.f32 0.0, %v2276
    %v2278 = vpop.f32.mrf.mxu0
    %2279 = vdwg.mxu0
    %2280 = vrot.lane.b32.xlu0 %v2108, 120
    %v2281 = vpop.permute.xlu0 %2280
    %2282 = vrot.lane.b32.xlu0 %v2108, 88
    %v2283 = vpop.permute.xlu0 %2282
    %v2284 = vsel %vm302, %v2281, 0
    %v2286 = vsel %vm302, %v2283, 0
    %2288 = vmatprep.subr.mxu0 0.0
    %2289 = vmatpush1.xpose.msra.mxu0 0.0
    %2290 = vmatprep.subr.mxu0 0.0
    %2291 = vmatpush1.xpose.msra.mxu0 0.0
    %2292 = vmatprep.subr.mxu0 0.0
    %2293 = vmatpush1.xpose.msra.mxu0 0.0
    %2294 = vmatprep.subr.mxu0 0.0
    %2295 = vmatpush1.xpose.msra.mxu0 0.0
    %2296 = vmatprep.subr.mxu0 0.0
    %2297 = vmatpush1.xpose.msra.mxu0 0.0
    %2298 = vmatprep.subr.mxu0 0.0
    %2299 = vmatpush1.xpose.msra.mxu0 0.0
    %2300 = vmatprep.subr.mxu0 0.0
    %2301 = vmatpush1.xpose.msra.mxu0 0.0
    %2302 = vmatprep.subr.mxu0 0.0
    %2303 = vmatpush1.xpose.msra.mxu0 0.0
    %2304 = vmatprep.subr.mxu0 0.0
    %2305 = vmatpush1.xpose.msra.mxu0 0.0
    %2306 = vmatprep.subr.mxu0 0.0
    %2307 = vmatpush1.xpose.msra.mxu0 0.0
    %2308 = vmatprep.subr.mxu0 0.0
    %2309 = vmatpush1.xpose.msra.mxu0 0.0
    %2310 = vmatprep.subr.mxu0 0.0
    %2311 = vmatpush1.xpose.msra.mxu0 0.0
    %2312 = vmatprep.subr.mxu0 0.0
    %2313 = vmatpush1.xpose.msra.mxu0 0.0
    %2314 = vmatprep.subr.mxu0 0.0
    %2315 = vmatpush1.xpose.msra.mxu0 0.0
    %2316 = vmatprep.subr.mxu0 0.0
    %2317 = vmatpush1.xpose.msra.mxu0 0.0
    %2318 = vmatprep.subr.mxu0 0.0
    %2319 = vmatpush1.xpose.msra.mxu0 %v2286
    %2320 = vmatprep.subr.mxu0 0.0
    %2321 = vmatpush2.xpose.msra.mxu0 0.0
    %2322 = vmatprep.subr.mxu0 0.0
    %2323 = vmatpush2.xpose.msra.mxu0 0.0
    %2324 = vmatprep.subr.mxu0 0.0
    %2325 = vmatpush2.xpose.msra.mxu0 0.0
    %2326 = vmatprep.subr.mxu0 0.0
    %2327 = vmatpush2.xpose.msra.mxu0 0.0
    %2328 = vmatprep.subr.mxu0 0.0
    %2329 = vmatpush2.xpose.msra.mxu0 0.0
    %2330 = vmatprep.subr.mxu0 0.0
    %2331 = vmatpush2.xpose.msra.mxu0 0.0
    %2332 = vmatprep.subr.mxu0 0.0
    %2333 = vmatpush2.xpose.msra.mxu0 0.0
    %2334 = vmatprep.subr.mxu0 0.0
    %2335 = vmatpush2.xpose.msra.mxu0 0.0
    %2336 = vmatprep.subr.mxu0 0.0
    %2337 = vmatpush2.xpose.msra.mxu0 0.0
    %2338 = vmatprep.subr.mxu0 0.0
    %2339 = vmatpush2.xpose.msra.mxu0 0.0
    %2340 = vmatprep.subr.mxu0 0.0
    %2341 = vmatpush2.xpose.msra.mxu0 0.0
    %2342 = vmatprep.subr.mxu0 0.0
    %2343 = vmatpush2.xpose.msra.mxu0 0.0
    %2344 = vmatprep.subr.mxu0 0.0
    %2345 = vmatpush2.xpose.msra.mxu0 0.0
    %2346 = vmatprep.subr.mxu0 0.0
    %2347 = vmatpush2.xpose.msra.mxu0 0.0
    %2348 = vmatprep.subr.mxu0 0.0
    %2349 = vmatpush2.xpose.msra.mxu0 0.0
    %2350 = vmatprep.subr.mxu0 0.0
    %2351 = vmatpush2.xpose.msra.mxu0 0.0
    %2352 = vmatprep.mubr.f32.mxu0 0.0
    %2353 = vmatmul.mubr.f32.gmra.mxu0 %v2284
    %v2354 = vpop.f32.mrf.mxu0
    %v2355 = vadd.f32 %v298, %v2354
    %v2356 = vpop.f32.mrf.mxu0
    %2357 = vdwg.mxu0
    %v2358 = vsel %vm302, %v2355, -inf
    %2359 = vmax.xlane.f32.xlu0 %v2358
    %v2360 = vpop.xlane.xlu0 %2359
    %v2361 = vsub.f32 %v2355, %v2360
    %v2362 = vmul.f32 %v2361, 1.442695
    %v2363 = vpow.pop %v2362
    %v2364 = vsel %vm302, %v2363, 0.0
    %2365 = vadd.xlane.f32.xlu0 %v2364
    %v2366 = vpop.xlane.xlu0 %2365
    %v2367 = vrcp.pop %v2366
    %v2368 = vmul.f32 %v2363, %v2367
    %2369 = vrot.lane.b32.xlu0 %v2108, 56
    %v2370 = vpop.permute.xlu0 %2369
    %v2373 = vsel %vm302, %v2368, 0
    %2375 = vmatprep.subr.mxu0 0.0
    %2376 = vmatpush1.msra.mxu0 0.0
    %2377 = vmatprep.subr.mxu0 0.0
    %2378 = vmatpush1.msra.mxu0 0.0
    %2379 = vmatprep.subr.mxu0 0.0
    %2380 = vmatpush1.msra.mxu0 0.0
    %2381 = vmatprep.subr.mxu0 0.0
    %2382 = vmatpush1.msra.mxu0 0.0
    %2383 = vmatprep.subr.mxu0 0.0
    %2384 = vmatpush1.msra.mxu0 0.0
    %2385 = vmatprep.subr.mxu0 0.0
    %2386 = vmatpush1.msra.mxu0 0.0
    %2387 = vmatprep.subr.mxu0 0.0
    %2388 = vmatpush1.msra.mxu0 0.0
    %2389 = vmatprep.subr.mxu0 0.0
    %2390 = vmatpush1.msra.mxu0 0.0
    %2391 = vmatprep.subr.mxu0 0.0
    %2392 = vmatpush1.msra.mxu0 0.0
    %2393 = vmatprep.subr.mxu0 0.0
    %2394 = vmatpush1.msra.mxu0 0.0
    %2395 = vmatprep.subr.mxu0 0.0
    %2396 = vmatpush1.msra.mxu0 0.0
    %2397 = vmatprep.subr.mxu0 0.0
    %2398 = vmatpush1.msra.mxu0 0.0
    %2399 = vmatprep.subr.mxu0 0.0
    %2400 = vmatpush1.msra.mxu0 0.0
    %2401 = vmatprep.subr.mxu0 0.0
    %2402 = vmatpush1.msra.mxu0 0.0
    %2403 = vmatprep.subr.mxu0 0.0
    %2404 = vmatpush1.msra.mxu0 0.0
    %2405 = vmatprep.subr.mxu0 0.0
    %2406 = vmatpush1.msra.mxu0 %v2370
    %2407 = vmatprep.subr.mxu0 0.0
    %2408 = vmatpush2.msra.mxu0 0.0
    %2409 = vmatprep.subr.mxu0 0.0
    %2410 = vmatpush2.msra.mxu0 0.0
    %2411 = vmatprep.subr.mxu0 0.0
    %2412 = vmatpush2.msra.mxu0 0.0
    %2413 = vmatprep.subr.mxu0 0.0
    %2414 = vmatpush2.msra.mxu0 0.0
    %2415 = vmatprep.subr.mxu0 0.0
    %2416 = vmatpush2.msra.mxu0 0.0
    %2417 = vmatprep.subr.mxu0 0.0
    %2418 = vmatpush2.msra.mxu0 0.0
    %2419 = vmatprep.subr.mxu0 0.0
    %2420 = vmatpush2.msra.mxu0 0.0
    %2421 = vmatprep.subr.mxu0 0.0
    %2422 = vmatpush2.msra.mxu0 0.0
    %2423 = vmatprep.subr.mxu0 0.0
    %2424 = vmatpush2.msra.mxu0 0.0
    %2425 = vmatprep.subr.mxu0 0.0
    %2426 = vmatpush2.msra.mxu0 0.0
    %2427 = vmatprep.subr.mxu0 0.0
    %2428 = vmatpush2.msra.mxu0 0.0
    %2429 = vmatprep.subr.mxu0 0.0
    %2430 = vmatpush2.msra.mxu0 0.0
    %2431 = vmatprep.subr.mxu0 0.0
    %2432 = vmatpush2.msra.mxu0 0.0
    %2433 = vmatprep.subr.mxu0 0.0
    %2434 = vmatpush2.msra.mxu0 0.0
    %2435 = vmatprep.subr.mxu0 0.0
    %2436 = vmatpush2.msra.mxu0 0.0
    %2437 = vmatprep.subr.mxu0 0.0
    %2438 = vmatpush2.msra.mxu0 0.0
    %2439 = vmatprep.mubr.f32.mxu0 0.0
    %2440 = vmatmul.mubr.f32.gmra.mxu0 %v2373
    %v2441 = vpop.f32.mrf.mxu0
    %v2442 = vadd.f32 0.0, %v2441
    %v2443 = vpop.f32.mrf.mxu0
    %2444 = vdwg.mxu0
    %2445 = vrot.lane.b32.xlu0 %v2108, 112
    %v2446 = vpop.permute.xlu0 %2445
    %2447 = vrot.lane.b32.xlu0 %v2108, 80
    %v2448 = vpop.permute.xlu0 %2447
    %v2449 = vsel %vm302, %v2446, 0
    %v2451 = vsel %vm302, %v2448, 0
    %2453 = vmatprep.subr.mxu0 0.0
    %2454 = vmatpush1.xpose.msra.mxu0 0.0
    %2455 = vmatprep.subr.mxu0 0.0
    %2456 = vmatpush1.xpose.msra.mxu0 0.0
    %2457 = vmatprep.subr.mxu0 0.0
    %2458 = vmatpush1.xpose.msra.mxu0 0.0
    %2459 = vmatprep.subr.mxu0 0.0
    %2460 = vmatpush1.xpose.msra.mxu0 0.0
    %2461 = vmatprep.subr.mxu0 0.0
    %2462 = vmatpush1.xpose.msra.mxu0 0.0
    %2463 = vmatprep.subr.mxu0 0.0
    %2464 = vmatpush1.xpose.msra.mxu0 0.0
    %2465 = vmatprep.subr.mxu0 0.0
    %2466 = vmatpush1.xpose.msra.mxu0 0.0
    %2467 = vmatprep.subr.mxu0 0.0
    %2468 = vmatpush1.xpose.msra.mxu0 0.0
    %2469 = vmatprep.subr.mxu0 0.0
    %2470 = vmatpush1.xpose.msra.mxu0 0.0
    %2471 = vmatprep.subr.mxu0 0.0
    %2472 = vmatpush1.xpose.msra.mxu0 0.0
    %2473 = vmatprep.subr.mxu0 0.0
    %2474 = vmatpush1.xpose.msra.mxu0 0.0
    %2475 = vmatprep.subr.mxu0 0.0
    %2476 = vmatpush1.xpose.msra.mxu0 0.0
    %2477 = vmatprep.subr.mxu0 0.0
    %2478 = vmatpush1.xpose.msra.mxu0 0.0
    %2479 = vmatprep.subr.mxu0 0.0
    %2480 = vmatpush1.xpose.msra.mxu0 0.0
    %2481 = vmatprep.subr.mxu0 0.0
    %2482 = vmatpush1.xpose.msra.mxu0 0.0
    %2483 = vmatprep.subr.mxu0 0.0
    %2484 = vmatpush1.xpose.msra.mxu0 %v2451
    %2485 = vmatprep.subr.mxu0 0.0
    %2486 = vmatpush2.xpose.msra.mxu0 0.0
    %2487 = vmatprep.subr.mxu0 0.0
    %2488 = vmatpush2.xpose.msra.mxu0 0.0
    %2489 = vmatprep.subr.mxu0 0.0
    %2490 = vmatpush2.xpose.msra.mxu0 0.0
    %2491 = vmatprep.subr.mxu0 0.0
    %2492 = vmatpush2.xpose.msra.mxu0 0.0
    %2493 = vmatprep.subr.mxu0 0.0
    %2494 = vmatpush2.xpose.msra.mxu0 0.0
    %2495 = vmatprep.subr.mxu0 0.0
    %2496 = vmatpush2.xpose.msra.mxu0 0.0
    %2497 = vmatprep.subr.mxu0 0.0
    %2498 = vmatpush2.xpose.msra.mxu0 0.0
    %2499 = vmatprep.subr.mxu0 0.0
    %2500 = vmatpush2.xpose.msra.mxu0 0.0
    %2501 = vmatprep.subr.mxu0 0.0
    %2502 = vmatpush2.xpose.msra.mxu0 0.0
    %2503 = vmatprep.subr.mxu0 0.0
    %2504 = vmatpush2.xpose.msra.mxu0 0.0
    %2505 = vmatprep.subr.mxu0 0.0
    %2506 = vmatpush2.xpose.msra.mxu0 0.0
    %2507 = vmatprep.subr.mxu0 0.0
    %2508 = vmatpush2.xpose.msra.mxu0 0.0
    %2509 = vmatprep.subr.mxu0 0.0
    %2510 = vmatpush2.xpose.msra.mxu0 0.0
    %2511 = vmatprep.subr.mxu0 0.0
    %2512 = vmatpush2.xpose.msra.mxu0 0.0
    %2513 = vmatprep.subr.mxu0 0.0
    %2514 = vmatpush2.xpose.msra.mxu0 0.0
    %2515 = vmatprep.subr.mxu0 0.0
    %2516 = vmatpush2.xpose.msra.mxu0 0.0
    %2517 = vmatprep.mubr.f32.mxu0 0.0
    %2518 = vmatmul.mubr.f32.gmra.mxu0 %v2449
    %v2519 = vpop.f32.mrf.mxu0
    %v2520 = vadd.f32 %v298, %v2519
    %v2521 = vpop.f32.mrf.mxu0
    %2522 = vdwg.mxu0
    %v2523 = vsel %vm302, %v2520, -inf
    %2524 = vmax.xlane.f32.xlu0 %v2523
    %v2525 = vpop.xlane.xlu0 %2524
    %v2526 = vsub.f32 %v2520, %v2525
    %v2527 = vmul.f32 %v2526, 1.442695
    %v2528 = vpow.pop %v2527
    %v2529 = vsel %vm302, %v2528, 0.0
    %2530 = vadd.xlane.f32.xlu0 %v2529
    %v2531 = vpop.xlane.xlu0 %2530
    %v2532 = vrcp.pop %v2531
    %v2533 = vmul.f32 %v2528, %v2532
    %2534 = vrot.lane.b32.xlu0 %v2108, 48
    %v2535 = vpop.permute.xlu0 %2534
    %v2538 = vsel %vm302, %v2533, 0
    %2540 = vmatprep.subr.mxu0 0.0
    %2541 = vmatpush1.msra.mxu0 0.0
    %2542 = vmatprep.subr.mxu0 0.0
    %2543 = vmatpush1.msra.mxu0 0.0
    %2544 = vmatprep.subr.mxu0 0.0
    %2545 = vmatpush1.msra.mxu0 0.0
    %2546 = vmatprep.subr.mxu0 0.0
    %2547 = vmatpush1.msra.mxu0 0.0
    %2548 = vmatprep.subr.mxu0 0.0
    %2549 = vmatpush1.msra.mxu0 0.0
    %2550 = vmatprep.subr.mxu0 0.0
    %2551 = vmatpush1.msra.mxu0 0.0
    %2552 = vmatprep.subr.mxu0 0.0
    %2553 = vmatpush1.msra.mxu0 0.0
    %2554 = vmatprep.subr.mxu0 0.0
    %2555 = vmatpush1.msra.mxu0 0.0
    %2556 = vmatprep.subr.mxu0 0.0
    %2557 = vmatpush1.msra.mxu0 0.0
    %2558 = vmatprep.subr.mxu0 0.0
    %2559 = vmatpush1.msra.mxu0 0.0
    %2560 = vmatprep.subr.mxu0 0.0
    %2561 = vmatpush1.msra.mxu0 0.0
    %2562 = vmatprep.subr.mxu0 0.0
    %2563 = vmatpush1.msra.mxu0 0.0
    %2564 = vmatprep.subr.mxu0 0.0
    %2565 = vmatpush1.msra.mxu0 0.0
    %2566 = vmatprep.subr.mxu0 0.0
    %2567 = vmatpush1.msra.mxu0 0.0
    %2568 = vmatprep.subr.mxu0 0.0
    %2569 = vmatpush1.msra.mxu0 0.0
    %2570 = vmatprep.subr.mxu0 0.0
    %2571 = vmatpush1.msra.mxu0 %v2535
    %2572 = vmatprep.subr.mxu0 0.0
    %2573 = vmatpush2.msra.mxu0 0.0
    %2574 = vmatprep.subr.mxu0 0.0
    %2575 = vmatpush2.msra.mxu0 0.0
    %2576 = vmatprep.subr.mxu0 0.0
    %2577 = vmatpush2.msra.mxu0 0.0
    %2578 = vmatprep.subr.mxu0 0.0
    %2579 = vmatpush2.msra.mxu0 0.0
    %2580 = vmatprep.subr.mxu0 0.0
    %2581 = vmatpush2.msra.mxu0 0.0
    %2582 = vmatprep.subr.mxu0 0.0
    %2583 = vmatpush2.msra.mxu0 0.0
    %2584 = vmatprep.subr.mxu0 0.0
    %2585 = vmatpush2.msra.mxu0 0.0
    %2586 = vmatprep.subr.mxu0 0.0
    %2587 = vmatpush2.msra.mxu0 0.0
    %2588 = vmatprep.subr.mxu0 0.0
    %2589 = vmatpush2.msra.mxu0 0.0
    %2590 = vmatprep.subr.mxu0 0.0
    %2591 = vmatpush2.msra.mxu0 0.0
    %2592 = vmatprep.subr.mxu0 0.0
    %2593 = vmatpush2.msra.mxu0 0.0
    %2594 = vmatprep.subr.mxu0 0.0
    %2595 = vmatpush2.msra.mxu0 0.0
    %2596 = vmatprep.subr.mxu0 0.0
    %2597 = vmatpush2.msra.mxu0 0.0
    %2598 = vmatprep.subr.mxu0 0.0
    %2599 = vmatpush2.msra.mxu0 0.0
    %2600 = vmatprep.subr.mxu0 0.0
    %2601 = vmatpush2.msra.mxu0 0.0
    %2602 = vmatprep.subr.mxu0 0.0
    %2603 = vmatpush2.msra.mxu0 0.0
    %2604 = vmatprep.mubr.f32.mxu0 0.0
    %2605 = vmatmul.mubr.f32.gmra.mxu0 %v2538
    %v2606 = vpop.f32.mrf.mxu0
    %v2607 = vadd.f32 0.0, %v2606
    %v2608 = vpop.f32.mrf.mxu0
    %2609 = vdwg.mxu0
    %2610 = vrot.lane.b32.xlu0 %v2108, 104
    %v2611 = vpop.permute.xlu0 %2610
    %2612 = vrot.lane.b32.xlu0 %v2108, 72
    %v2613 = vpop.permute.xlu0 %2612
    %v2614 = vsel %vm302, %v2611, 0
    %v2616 = vsel %vm302, %v2613, 0
    %2618 = vmatprep.subr.mxu0 0.0
    %2619 = vmatpush1.xpose.msra.mxu0 0.0
    %2620 = vmatprep.subr.mxu0 0.0
    %2621 = vmatpush1.xpose.msra.mxu0 0.0
    %2622 = vmatprep.subr.mxu0 0.0
    %2623 = vmatpush1.xpose.msra.mxu0 0.0
    %2624 = vmatprep.subr.mxu0 0.0
    %2625 = vmatpush1.xpose.msra.mxu0 0.0
    %2626 = vmatprep.subr.mxu0 0.0
    %2627 = vmatpush1.xpose.msra.mxu0 0.0
    %2628 = vmatprep.subr.mxu0 0.0
    %2629 = vmatpush1.xpose.msra.mxu0 0.0
    %2630 = vmatprep.subr.mxu0 0.0
    %2631 = vmatpush1.xpose.msra.mxu0 0.0
    %2632 = vmatprep.subr.mxu0 0.0
    %2633 = vmatpush1.xpose.msra.mxu0 0.0
    %2634 = vmatprep.subr.mxu0 0.0
    %2635 = vmatpush1.xpose.msra.mxu0 0.0
    %2636 = vmatprep.subr.mxu0 0.0
    %2637 = vmatpush1.xpose.msra.mxu0 0.0
    %2638 = vmatprep.subr.mxu0 0.0
    %2639 = vmatpush1.xpose.msra.mxu0 0.0
    %2640 = vmatprep.subr.mxu0 0.0
    %2641 = vmatpush1.xpose.msra.mxu0 0.0
    %2642 = vmatprep.subr.mxu0 0.0
    %2643 = vmatpush1.xpose.msra.mxu0 0.0
    %2644 = vmatprep.subr.mxu0 0.0
    %2645 = vmatpush1.xpose.msra.mxu0 0.0
    %2646 = vmatprep.subr.mxu0 0.0
    %2647 = vmatpush1.xpose.msra.mxu0 0.0
    %2648 = vmatprep.subr.mxu0 0.0
    %2649 = vmatpush1.xpose.msra.mxu0 %v2616
    %2650 = vmatprep.subr.mxu0 0.0
    %2651 = vmatpush2.xpose.msra.mxu0 0.0
    %2652 = vmatprep.subr.mxu0 0.0
    %2653 = vmatpush2.xpose.msra.mxu0 0.0
    %2654 = vmatprep.subr.mxu0 0.0
    %2655 = vmatpush2.xpose.msra.mxu0 0.0
    %2656 = vmatprep.subr.mxu0 0.0
    %2657 = vmatpush2.xpose.msra.mxu0 0.0
    %2658 = vmatprep.subr.mxu0 0.0
    %2659 = vmatpush2.xpose.msra.mxu0 0.0
    %2660 = vmatprep.subr.mxu0 0.0
    %2661 = vmatpush2.xpose.msra.mxu0 0.0
    %2662 = vmatprep.subr.mxu0 0.0
    %2663 = vmatpush2.xpose.msra.mxu0 0.0
    %2664 = vmatprep.subr.mxu0 0.0
    %2665 = vmatpush2.xpose.msra.mxu0 0.0
    %2666 = vmatprep.subr.mxu0 0.0
    %2667 = vmatpush2.xpose.msra.mxu0 0.0
    %2668 = vmatprep.subr.mxu0 0.0
    %2669 = vmatpush2.xpose.msra.mxu0 0.0
    %2670 = vmatprep.subr.mxu0 0.0
    %2671 = vmatpush2.xpose.msra.mxu0 0.0
    %2672 = vmatprep.subr.mxu0 0.0
    %2673 = vmatpush2.xpose.msra.mxu0 0.0
    %2674 = vmatprep.subr.mxu0 0.0
    %2675 = vmatpush2.xpose.msra.mxu0 0.0
    %2676 = vmatprep.subr.mxu0 0.0
    %2677 = vmatpush2.xpose.msra.mxu0 0.0
    %2678 = vmatprep.subr.mxu0 0.0
    %2679 = vmatpush2.xpose.msra.mxu0 0.0
    %2680 = vmatprep.subr.mxu0 0.0
    %2681 = vmatpush2.xpose.msra.mxu0 0.0
    %2682 = vmatprep.mubr.f32.mxu0 0.0
    %2683 = vmatmul.mubr.f32.gmra.mxu0 %v2614
    %v2684 = vpop.f32.mrf.mxu0
    %v2685 = vadd.f32 %v298, %v2684
    %v2686 = vpop.f32.mrf.mxu0
    %2687 = vdwg.mxu0
    %v2688 = vsel %vm302, %v2685, -inf
    %2689 = vmax.xlane.f32.xlu0 %v2688
    %v2690 = vpop.xlane.xlu0 %2689
    %v2691 = vsub.f32 %v2685, %v2690
    %v2692 = vmul.f32 %v2691, 1.442695
    %v2693 = vpow.pop %v2692
    %v2694 = vsel %vm302, %v2693, 0.0
    %2695 = vadd.xlane.f32.xlu0 %v2694
    %v2696 = vpop.xlane.xlu0 %2695
    %v2697 = vrcp.pop %v2696
    %v2698 = vmul.f32 %v2693, %v2697
    %2699 = vrot.lane.b32.xlu0 %v2108, 40
    %v2700 = vpop.permute.xlu0 %2699
    %v2703 = vsel %vm302, %v2698, 0
    %2705 = vmatprep.subr.mxu0 0.0
    %2706 = vmatpush1.msra.mxu0 0.0
    %2707 = vmatprep.subr.mxu0 0.0
    %2708 = vmatpush1.msra.mxu0 0.0
    %2709 = vmatprep.subr.mxu0 0.0
    %2710 = vmatpush1.msra.mxu0 0.0
    %2711 = vmatprep.subr.mxu0 0.0
    %2712 = vmatpush1.msra.mxu0 0.0
    %2713 = vmatprep.subr.mxu0 0.0
    %2714 = vmatpush1.msra.mxu0 0.0
    %2715 = vmatprep.subr.mxu0 0.0
    %2716 = vmatpush1.msra.mxu0 0.0
    %2717 = vmatprep.subr.mxu0 0.0
    %2718 = vmatpush1.msra.mxu0 0.0
    %2719 = vmatprep.subr.mxu0 0.0
    %2720 = vmatpush1.msra.mxu0 0.0
    %2721 = vmatprep.subr.mxu0 0.0
    %2722 = vmatpush1.msra.mxu0 0.0
    %2723 = vmatprep.subr.mxu0 0.0
    %2724 = vmatpush1.msra.mxu0 0.0
    %2725 = vmatprep.subr.mxu0 0.0
    %2726 = vmatpush1.msra.mxu0 0.0
    %2727 = vmatprep.subr.mxu0 0.0
    %2728 = vmatpush1.msra.mxu0 0.0
    %2729 = vmatprep.subr.mxu0 0.0
    %2730 = vmatpush1.msra.mxu0 0.0
    %2731 = vmatprep.subr.mxu0 0.0
    %2732 = vmatpush1.msra.mxu0 0.0
    %2733 = vmatprep.subr.mxu0 0.0
    %2734 = vmatpush1.msra.mxu0 0.0
    %2735 = vmatprep.subr.mxu0 0.0
    %2736 = vmatpush1.msra.mxu0 %v2700
    %2737 = vmatprep.subr.mxu0 0.0
    %2738 = vmatpush2.msra.mxu0 0.0
    %2739 = vmatprep.subr.mxu0 0.0
    %2740 = vmatpush2.msra.mxu0 0.0
    %2741 = vmatprep.subr.mxu0 0.0
    %2742 = vmatpush2.msra.mxu0 0.0
    %2743 = vmatprep.subr.mxu0 0.0
    %2744 = vmatpush2.msra.mxu0 0.0
    %2745 = vmatprep.subr.mxu0 0.0
    %2746 = vmatpush2.msra.mxu0 0.0
    %2747 = vmatprep.subr.mxu0 0.0
    %2748 = vmatpush2.msra.mxu0 0.0
    %2749 = vmatprep.subr.mxu0 0.0
    %2750 = vmatpush2.msra.mxu0 0.0
    %2751 = vmatprep.subr.mxu0 0.0
    %2752 = vmatpush2.msra.mxu0 0.0
    %2753 = vmatprep.subr.mxu0 0.0
    %2754 = vmatpush2.msra.mxu0 0.0
    %2755 = vmatprep.subr.mxu0 0.0
    %2756 = vmatpush2.msra.mxu0 0.0
    %2757 = vmatprep.subr.mxu0 0.0
    %2758 = vmatpush2.msra.mxu0 0.0
    %2759 = vmatprep.subr.mxu0 0.0
    %2760 = vmatpush2.msra.mxu0 0.0
    %2761 = vmatprep.subr.mxu0 0.0
    %2762 = vmatpush2.msra.mxu0 0.0
    %2763 = vmatprep.subr.mxu0 0.0
    %2764 = vmatpush2.msra.mxu0 0.0
    %2765 = vmatprep.subr.mxu0 0.0
    %2766 = vmatpush2.msra.mxu0 0.0
    %2767 = vmatprep.subr.mxu0 0.0
    %2768 = vmatpush2.msra.mxu0 0.0
    %2769 = vmatprep.mubr.f32.mxu0 0.0
    %2770 = vmatmul.mubr.f32.gmra.mxu0 %v2703
    %v2771 = vpop.f32.mrf.mxu0
    %v2772 = vadd.f32 0.0, %v2771
    %v2773 = vpop.f32.mrf.mxu0
    %2774 = vdwg.mxu0
    %2776 = vrot.lane.b32.xlu0 %v2442, 8
    %v2777 = vpop.permute.xlu0 %2776
    %2780 = vrot.lane.b32.xlu0 %v2607, 16
    %v2781 = vpop.permute.xlu0 %2780
    %2784 = vrot.lane.b32.xlu0 %v2772, 24
    %v2785 = vpop.permute.xlu0 %2784
    %v2787 = vsel %vm302, %v2277, %v2777
    %v2788 = vsel %vm972, %v2787, %v2781
    %v2789 = vsel %vm974, %v2788, %v2785
    %2791 = vrot.lane.b32.xlu0 %v2113, 96
    %v2792 = vpop.permute.xlu0 %2791
    %v2793 = vsel %vm302, %v2113, 0
    %v2795 = vsel %vm302, %v2792, 0
    %2797 = vmatprep.subr.mxu0 0.0
    %2798 = vmatpush1.xpose.msra.mxu0 0.0
    %2799 = vmatprep.subr.mxu0 0.0
    %2800 = vmatpush1.xpose.msra.mxu0 0.0
    %2801 = vmatprep.subr.mxu0 0.0
    %2802 = vmatpush1.xpose.msra.mxu0 0.0
    %2803 = vmatprep.subr.mxu0 0.0
    %2804 = vmatpush1.xpose.msra.mxu0 0.0
    %2805 = vmatprep.subr.mxu0 0.0
    %2806 = vmatpush1.xpose.msra.mxu0 0.0
    %2807 = vmatprep.subr.mxu0 0.0
    %2808 = vmatpush1.xpose.msra.mxu0 0.0
    %2809 = vmatprep.subr.mxu0 0.0
    %2810 = vmatpush1.xpose.msra.mxu0 0.0
    %2811 = vmatprep.subr.mxu0 0.0
    %2812 = vmatpush1.xpose.msra.mxu0 0.0
    %2813 = vmatprep.subr.mxu0 0.0
    %2814 = vmatpush1.xpose.msra.mxu0 0.0
    %2815 = vmatprep.subr.mxu0 0.0
    %2816 = vmatpush1.xpose.msra.mxu0 0.0
    %2817 = vmatprep.subr.mxu0 0.0
    %2818 = vmatpush1.xpose.msra.mxu0 0.0
    %2819 = vmatprep.subr.mxu0 0.0
    %2820 = vmatpush1.xpose.msra.mxu0 0.0
    %2821 = vmatprep.subr.mxu0 0.0
    %2822 = vmatpush1.xpose.msra.mxu0 0.0
    %2823 = vmatprep.subr.mxu0 0.0
    %2824 = vmatpush1.xpose.msra.mxu0 0.0
    %2825 = vmatprep.subr.mxu0 0.0
    %2826 = vmatpush1.xpose.msra.mxu0 0.0
    %2827 = vmatprep.subr.mxu0 0.0
    %2828 = vmatpush1.xpose.msra.mxu0 %v2795
    %2829 = vmatprep.subr.mxu0 0.0
    %2830 = vmatpush2.xpose.msra.mxu0 0.0
    %2831 = vmatprep.subr.mxu0 0.0
    %2832 = vmatpush2.xpose.msra.mxu0 0.0
    %2833 = vmatprep.subr.mxu0 0.0
    %2834 = vmatpush2.xpose.msra.mxu0 0.0
    %2835 = vmatprep.subr.mxu0 0.0
    %2836 = vmatpush2.xpose.msra.mxu0 0.0
    %2837 = vmatprep.subr.mxu0 0.0
    %2838 = vmatpush2.xpose.msra.mxu0 0.0
    %2839 = vmatprep.subr.mxu0 0.0
    %2840 = vmatpush2.xpose.msra.mxu0 0.0
    %2841 = vmatprep.subr.mxu0 0.0
    %2842 = vmatpush2.xpose.msra.mxu0 0.0
    %2843 = vmatprep.subr.mxu0 0.0
    %2844 = vmatpush2.xpose.msra.mxu0 0.0
    %2845 = vmatprep.subr.mxu0 0.0
    %2846 = vmatpush2.xpose.msra.mxu0 0.0
    %2847 = vmatprep.subr.mxu0 0.0
    %2848 = vmatpush2.xpose.msra.mxu0 0.0
    %2849 = vmatprep.subr.mxu0 0.0
    %2850 = vmatpush2.xpose.msra.mxu0 0.0
    %2851 = vmatprep.subr.mxu0 0.0
    %2852 = vmatpush2.xpose.msra.mxu0 0.0
    %2853 = vmatprep.subr.mxu0 0.0
    %2854 = vmatpush2.xpose.msra.mxu0 0.0
    %2855 = vmatprep.subr.mxu0 0.0
    %2856 = vmatpush2.xpose.msra.mxu0 0.0
    %2857 = vmatprep.subr.mxu0 0.0
    %2858 = vmatpush2.xpose.msra.mxu0 0.0
    %2859 = vmatprep.subr.mxu0 0.0
    %2860 = vmatpush2.xpose.msra.mxu0 0.0
    %2861 = vmatprep.mubr.f32.mxu0 0.0
    %2862 = vmatmul.mubr.f32.gmra.mxu0 %v2793
    %v2863 = vpop.f32.mrf.mxu0
    %v2864 = vadd.f32 %v980, %v2863
    %v2865 = vpop.f32.mrf.mxu0
    %2866 = vdwg.mxu0
    %v2867 = vsel %vm302, %v2864, -inf
    %2868 = vmax.xlane.f32.xlu0 %v2867
    %v2869 = vpop.xlane.xlu0 %2868
    %v2870 = vsub.f32 %v2864, %v2869
    %v2871 = vmul.f32 %v2870, 1.442695
    %v2872 = vpow.pop %v2871
    %v2873 = vsel %vm302, %v2872, 0.0
    %2874 = vadd.xlane.f32.xlu0 %v2873
    %v2875 = vpop.xlane.xlu0 %2874
    %v2876 = vrcp.pop %v2875
    %v2877 = vmul.f32 %v2872, %v2876
    %2878 = vrot.lane.b32.xlu0 %v2113, 64
    %v2879 = vpop.permute.xlu0 %2878
    %v2882 = vsel %vm302, %v2877, 0
    %2884 = vmatprep.subr.mxu0 0.0
    %2885 = vmatpush1.msra.mxu0 0.0
    %2886 = vmatprep.subr.mxu0 0.0
    %2887 = vmatpush1.msra.mxu0 0.0
    %2888 = vmatprep.subr.mxu0 0.0
    %2889 = vmatpush1.msra.mxu0 0.0
    %2890 = vmatprep.subr.mxu0 0.0
    %2891 = vmatpush1.msra.mxu0 0.0
    %2892 = vmatprep.subr.mxu0 0.0
    %2893 = vmatpush1.msra.mxu0 0.0
    %2894 = vmatprep.subr.mxu0 0.0
    %2895 = vmatpush1.msra.mxu0 0.0
    %2896 = vmatprep.subr.mxu0 0.0
    %2897 = vmatpush1.msra.mxu0 0.0
    %2898 = vmatprep.subr.mxu0 0.0
    %2899 = vmatpush1.msra.mxu0 0.0
    %2900 = vmatprep.subr.mxu0 0.0
    %2901 = vmatpush1.msra.mxu0 0.0
    %2902 = vmatprep.subr.mxu0 0.0
    %2903 = vmatpush1.msra.mxu0 0.0
    %2904 = vmatprep.subr.mxu0 0.0
    %2905 = vmatpush1.msra.mxu0 0.0
    %2906 = vmatprep.subr.mxu0 0.0
    %2907 = vmatpush1.msra.mxu0 0.0
    %2908 = vmatprep.subr.mxu0 0.0
    %2909 = vmatpush1.msra.mxu0 0.0
    %2910 = vmatprep.subr.mxu0 0.0
    %2911 = vmatpush1.msra.mxu0 0.0
    %2912 = vmatprep.subr.mxu0 0.0
    %2913 = vmatpush1.msra.mxu0 0.0
    %2914 = vmatprep.subr.mxu0 0.0
    %2915 = vmatpush1.msra.mxu0 %v2879
    %2916 = vmatprep.subr.mxu0 0.0
    %2917 = vmatpush2.msra.mxu0 0.0
    %2918 = vmatprep.subr.mxu0 0.0
    %2919 = vmatpush2.msra.mxu0 0.0
    %2920 = vmatprep.subr.mxu0 0.0
    %2921 = vmatpush2.msra.mxu0 0.0
    %2922 = vmatprep.subr.mxu0 0.0
    %2923 = vmatpush2.msra.mxu0 0.0
    %2924 = vmatprep.subr.mxu0 0.0
    %2925 = vmatpush2.msra.mxu0 0.0
    %2926 = vmatprep.subr.mxu0 0.0
    %2927 = vmatpush2.msra.mxu0 0.0
    %2928 = vmatprep.subr.mxu0 0.0
    %2929 = vmatpush2.msra.mxu0 0.0
    %2930 = vmatprep.subr.mxu0 0.0
    %2931 = vmatpush2.msra.mxu0 0.0
    %2932 = vmatprep.subr.mxu0 0.0
    %2933 = vmatpush2.msra.mxu0 0.0
    %2934 = vmatprep.subr.mxu0 0.0
    %2935 = vmatpush2.msra.mxu0 0.0
    %2936 = vmatprep.subr.mxu0 0.0
    %2937 = vmatpush2.msra.mxu0 0.0
    %2938 = vmatprep.subr.mxu0 0.0
    %2939 = vmatpush2.msra.mxu0 0.0
    %2940 = vmatprep.subr.mxu0 0.0
    %2941 = vmatpush2.msra.mxu0 0.0
    %2942 = vmatprep.subr.mxu0 0.0
    %2943 = vmatpush2.msra.mxu0 0.0
    %2944 = vmatprep.subr.mxu0 0.0
    %2945 = vmatpush2.msra.mxu0 0.0
    %2946 = vmatprep.subr.mxu0 0.0
    %2947 = vmatpush2.msra.mxu0 0.0
    %2948 = vmatprep.mubr.f32.mxu0 0.0
    %2949 = vmatmul.mubr.f32.gmra.mxu0 %v2882
    %v2950 = vpop.f32.mrf.mxu0
    %v2951 = vadd.f32 0.0, %v2950
    %v2952 = vpop.f32.mrf.mxu0
    %2953 = vdwg.mxu0
    %2954 = vrot.lane.b32.xlu0 %v2113, 120
    %v2955 = vpop.permute.xlu0 %2954
    %2956 = vrot.lane.b32.xlu0 %v2113, 88
    %v2957 = vpop.permute.xlu0 %2956
    %v2958 = vsel %vm302, %v2955, 0
    %v2960 = vsel %vm302, %v2957, 0
    %2962 = vmatprep.subr.mxu0 0.0
    %2963 = vmatpush1.xpose.msra.mxu0 0.0
    %2964 = vmatprep.subr.mxu0 0.0
    %2965 = vmatpush1.xpose.msra.mxu0 0.0
    %2966 = vmatprep.subr.mxu0 0.0
    %2967 = vmatpush1.xpose.msra.mxu0 0.0
    %2968 = vmatprep.subr.mxu0 0.0
    %2969 = vmatpush1.xpose.msra.mxu0 0.0
    %2970 = vmatprep.subr.mxu0 0.0
    %2971 = vmatpush1.xpose.msra.mxu0 0.0
    %2972 = vmatprep.subr.mxu0 0.0
    %2973 = vmatpush1.xpose.msra.mxu0 0.0
    %2974 = vmatprep.subr.mxu0 0.0
    %2975 = vmatpush1.xpose.msra.mxu0 0.0
    %2976 = vmatprep.subr.mxu0 0.0
    %2977 = vmatpush1.xpose.msra.mxu0 0.0
    %2978 = vmatprep.subr.mxu0 0.0
    %2979 = vmatpush1.xpose.msra.mxu0 0.0
    %2980 = vmatprep.subr.mxu0 0.0
    %2981 = vmatpush1.xpose.msra.mxu0 0.0
    %2982 = vmatprep.subr.mxu0 0.0
    %2983 = vmatpush1.xpose.msra.mxu0 0.0
    %2984 = vmatprep.subr.mxu0 0.0
    %2985 = vmatpush1.xpose.msra.mxu0 0.0
    %2986 = vmatprep.subr.mxu0 0.0
    %2987 = vmatpush1.xpose.msra.mxu0 0.0
    %2988 = vmatprep.subr.mxu0 0.0
    %2989 = vmatpush1.xpose.msra.mxu0 0.0
    %2990 = vmatprep.subr.mxu0 0.0
    %2991 = vmatpush1.xpose.msra.mxu0 0.0
    %2992 = vmatprep.subr.mxu0 0.0
    %2993 = vmatpush1.xpose.msra.mxu0 %v2960
    %2994 = vmatprep.subr.mxu0 0.0
    %2995 = vmatpush2.xpose.msra.mxu0 0.0
    %2996 = vmatprep.subr.mxu0 0.0
    %2997 = vmatpush2.xpose.msra.mxu0 0.0
    %2998 = vmatprep.subr.mxu0 0.0
    %2999 = vmatpush2.xpose.msra.mxu0 0.0
    %3000 = vmatprep.subr.mxu0 0.0
    %3001 = vmatpush2.xpose.msra.mxu0 0.0
    %3002 = vmatprep.subr.mxu0 0.0
    %3003 = vmatpush2.xpose.msra.mxu0 0.0
    %3004 = vmatprep.subr.mxu0 0.0
    %3005 = vmatpush2.xpose.msra.mxu0 0.0
    %3006 = vmatprep.subr.mxu0 0.0
    %3007 = vmatpush2.xpose.msra.mxu0 0.0
    %3008 = vmatprep.subr.mxu0 0.0
    %3009 = vmatpush2.xpose.msra.mxu0 0.0
    %3010 = vmatprep.subr.mxu0 0.0
    %3011 = vmatpush2.xpose.msra.mxu0 0.0
    %3012 = vmatprep.subr.mxu0 0.0
    %3013 = vmatpush2.xpose.msra.mxu0 0.0
    %3014 = vmatprep.subr.mxu0 0.0
    %3015 = vmatpush2.xpose.msra.mxu0 0.0
    %3016 = vmatprep.subr.mxu0 0.0
    %3017 = vmatpush2.xpose.msra.mxu0 0.0
    %3018 = vmatprep.subr.mxu0 0.0
    %3019 = vmatpush2.xpose.msra.mxu0 0.0
    %3020 = vmatprep.subr.mxu0 0.0
    %3021 = vmatpush2.xpose.msra.mxu0 0.0
    %3022 = vmatprep.subr.mxu0 0.0
    %3023 = vmatpush2.xpose.msra.mxu0 0.0
    %3024 = vmatprep.subr.mxu0 0.0
    %3025 = vmatpush2.xpose.msra.mxu0 0.0
    %3026 = vmatprep.mubr.f32.mxu0 0.0
    %3027 = vmatmul.mubr.f32.gmra.mxu0 %v2958
    %v3028 = vpop.f32.mrf.mxu0
    %v3029 = vadd.f32 %v980, %v3028
    %v3030 = vpop.f32.mrf.mxu0
    %3031 = vdwg.mxu0
    %v3032 = vsel %vm302, %v3029, -inf
    %3033 = vmax.xlane.f32.xlu0 %v3032
    %v3034 = vpop.xlane.xlu0 %3033
    %v3035 = vsub.f32 %v3029, %v3034
    %v3036 = vmul.f32 %v3035, 1.442695
    %v3037 = vpow.pop %v3036
    %v3038 = vsel %vm302, %v3037, 0.0
    %3039 = vadd.xlane.f32.xlu0 %v3038
    %v3040 = vpop.xlane.xlu0 %3039
    %v3041 = vrcp.pop %v3040
    %v3042 = vmul.f32 %v3037, %v3041
    %3043 = vrot.lane.b32.xlu0 %v2113, 56
    %v3044 = vpop.permute.xlu0 %3043
    %v3047 = vsel %vm302, %v3042, 0
    %3049 = vmatprep.subr.mxu0 0.0
    %3050 = vmatpush1.msra.mxu0 0.0
    %3051 = vmatprep.subr.mxu0 0.0
    %3052 = vmatpush1.msra.mxu0 0.0
    %3053 = vmatprep.subr.mxu0 0.0
    %3054 = vmatpush1.msra.mxu0 0.0
    %3055 = vmatprep.subr.mxu0 0.0
    %3056 = vmatpush1.msra.mxu0 0.0
    %3057 = vmatprep.subr.mxu0 0.0
    %3058 = vmatpush1.msra.mxu0 0.0
    %3059 = vmatprep.subr.mxu0 0.0
    %3060 = vmatpush1.msra.mxu0 0.0
    %3061 = vmatprep.subr.mxu0 0.0
    %3062 = vmatpush1.msra.mxu0 0.0
    %3063 = vmatprep.subr.mxu0 0.0
    %3064 = vmatpush1.msra.mxu0 0.0
    %3065 = vmatprep.subr.mxu0 0.0
    %3066 = vmatpush1.msra.mxu0 0.0
    %3067 = vmatprep.subr.mxu0 0.0
    %3068 = vmatpush1.msra.mxu0 0.0
    %3069 = vmatprep.subr.mxu0 0.0
    %3070 = vmatpush1.msra.mxu0 0.0
    %3071 = vmatprep.subr.mxu0 0.0
    %3072 = vmatpush1.msra.mxu0 0.0
    %3073 = vmatprep.subr.mxu0 0.0
    %3074 = vmatpush1.msra.mxu0 0.0
    %3075 = vmatprep.subr.mxu0 0.0
    %3076 = vmatpush1.msra.mxu0 0.0
    %3077 = vmatprep.subr.mxu0 0.0
    %3078 = vmatpush1.msra.mxu0 0.0
    %3079 = vmatprep.subr.mxu0 0.0
    %3080 = vmatpush1.msra.mxu0 %v3044
    %3081 = vmatprep.subr.mxu0 0.0
    %3082 = vmatpush2.msra.mxu0 0.0
    %3083 = vmatprep.subr.mxu0 0.0
    %3084 = vmatpush2.msra.mxu0 0.0
    %3085 = vmatprep.subr.mxu0 0.0
    %3086 = vmatpush2.msra.mxu0 0.0
    %3087 = vmatprep.subr.mxu0 0.0
    %3088 = vmatpush2.msra.mxu0 0.0
    %3089 = vmatprep.subr.mxu0 0.0
    %3090 = vmatpush2.msra.mxu0 0.0
    %3091 = vmatprep.subr.mxu0 0.0
    %3092 = vmatpush2.msra.mxu0 0.0
    %3093 = vmatprep.subr.mxu0 0.0
    %3094 = vmatpush2.msra.mxu0 0.0
    %3095 = vmatprep.subr.mxu0 0.0
    %3096 = vmatpush2.msra.mxu0 0.0
    %3097 = vmatprep.subr.mxu0 0.0
    %3098 = vmatpush2.msra.mxu0 0.0
    %3099 = vmatprep.subr.mxu0 0.0
    %3100 = vmatpush2.msra.mxu0 0.0
    %3101 = vmatprep.subr.mxu0 0.0
    %3102 = vmatpush2.msra.mxu0 0.0
    %3103 = vmatprep.subr.mxu0 0.0
    %3104 = vmatpush2.msra.mxu0 0.0
    %3105 = vmatprep.subr.mxu0 0.0
    %3106 = vmatpush2.msra.mxu0 0.0
    %3107 = vmatprep.subr.mxu0 0.0
    %3108 = vmatpush2.msra.mxu0 0.0
    %3109 = vmatprep.subr.mxu0 0.0
    %3110 = vmatpush2.msra.mxu0 0.0
    %3111 = vmatprep.subr.mxu0 0.0
    %3112 = vmatpush2.msra.mxu0 0.0
    %3113 = vmatprep.mubr.f32.mxu0 0.0
    %3114 = vmatmul.mubr.f32.gmra.mxu0 %v3047
    %v3115 = vpop.f32.mrf.mxu0
    %v3116 = vadd.f32 0.0, %v3115
    %v3117 = vpop.f32.mrf.mxu0
    %3118 = vdwg.mxu0
    %3119 = vrot.lane.b32.xlu0 %v2113, 112
    %v3120 = vpop.permute.xlu0 %3119
    %3121 = vrot.lane.b32.xlu0 %v2113, 80
    %v3122 = vpop.permute.xlu0 %3121
    %v3123 = vsel %vm302, %v3120, 0
    %v3125 = vsel %vm302, %v3122, 0
    %3127 = vmatprep.subr.mxu0 0.0
    %3128 = vmatpush1.xpose.msra.mxu0 0.0
    %3129 = vmatprep.subr.mxu0 0.0
    %3130 = vmatpush1.xpose.msra.mxu0 0.0
    %3131 = vmatprep.subr.mxu0 0.0
    %3132 = vmatpush1.xpose.msra.mxu0 0.0
    %3133 = vmatprep.subr.mxu0 0.0
    %3134 = vmatpush1.xpose.msra.mxu0 0.0
    %3135 = vmatprep.subr.mxu0 0.0
    %3136 = vmatpush1.xpose.msra.mxu0 0.0
    %3137 = vmatprep.subr.mxu0 0.0
    %3138 = vmatpush1.xpose.msra.mxu0 0.0
    %3139 = vmatprep.subr.mxu0 0.0
    %3140 = vmatpush1.xpose.msra.mxu0 0.0
    %3141 = vmatprep.subr.mxu0 0.0
    %3142 = vmatpush1.xpose.msra.mxu0 0.0
    %3143 = vmatprep.subr.mxu0 0.0
    %3144 = vmatpush1.xpose.msra.mxu0 0.0
    %3145 = vmatprep.subr.mxu0 0.0
    %3146 = vmatpush1.xpose.msra.mxu0 0.0
    %3147 = vmatprep.subr.mxu0 0.0
    %3148 = vmatpush1.xpose.msra.mxu0 0.0
    %3149 = vmatprep.subr.mxu0 0.0
    %3150 = vmatpush1.xpose.msra.mxu0 0.0
    %3151 = vmatprep.subr.mxu0 0.0
    %3152 = vmatpush1.xpose.msra.mxu0 0.0
    %3153 = vmatprep.subr.mxu0 0.0
    %3154 = vmatpush1.xpose.msra.mxu0 0.0
    %3155 = vmatprep.subr.mxu0 0.0
    %3156 = vmatpush1.xpose.msra.mxu0 0.0
    %3157 = vmatprep.subr.mxu0 0.0
    %3158 = vmatpush1.xpose.msra.mxu0 %v3125
    %3159 = vmatprep.subr.mxu0 0.0
    %3160 = vmatpush2.xpose.msra.mxu0 0.0
    %3161 = vmatprep.subr.mxu0 0.0
    %3162 = vmatpush2.xpose.msra.mxu0 0.0
    %3163 = vmatprep.subr.mxu0 0.0
    %3164 = vmatpush2.xpose.msra.mxu0 0.0
    %3165 = vmatprep.subr.mxu0 0.0
    %3166 = vmatpush2.xpose.msra.mxu0 0.0
    %3167 = vmatprep.subr.mxu0 0.0
    %3168 = vmatpush2.xpose.msra.mxu0 0.0
    %3169 = vmatprep.subr.mxu0 0.0
    %3170 = vmatpush2.xpose.msra.mxu0 0.0
    %3171 = vmatprep.subr.mxu0 0.0
    %3172 = vmatpush2.xpose.msra.mxu0 0.0
    %3173 = vmatprep.subr.mxu0 0.0
    %3174 = vmatpush2.xpose.msra.mxu0 0.0
    %3175 = vmatprep.subr.mxu0 0.0
    %3176 = vmatpush2.xpose.msra.mxu0 0.0
    %3177 = vmatprep.subr.mxu0 0.0
    %3178 = vmatpush2.xpose.msra.mxu0 0.0
    %3179 = vmatprep.subr.mxu0 0.0
    %3180 = vmatpush2.xpose.msra.mxu0 0.0
    %3181 = vmatprep.subr.mxu0 0.0
    %3182 = vmatpush2.xpose.msra.mxu0 0.0
    %3183 = vmatprep.subr.mxu0 0.0
    %3184 = vmatpush2.xpose.msra.mxu0 0.0
    %3185 = vmatprep.subr.mxu0 0.0
    %3186 = vmatpush2.xpose.msra.mxu0 0.0
    %3187 = vmatprep.subr.mxu0 0.0
    %3188 = vmatpush2.xpose.msra.mxu0 0.0
    %3189 = vmatprep.subr.mxu0 0.0
    %3190 = vmatpush2.xpose.msra.mxu0 0.0
    %3191 = vmatprep.mubr.f32.mxu0 0.0
    %3192 = vmatmul.mubr.f32.gmra.mxu0 %v3123
    %v3193 = vpop.f32.mrf.mxu0
    %v3194 = vadd.f32 %v980, %v3193
    %v3195 = vpop.f32.mrf.mxu0
    %3196 = vdwg.mxu0
    %v3197 = vsel %vm302, %v3194, -inf
    %3198 = vmax.xlane.f32.xlu0 %v3197
    %v3199 = vpop.xlane.xlu0 %3198
    %v3200 = vsub.f32 %v3194, %v3199
    %v3201 = vmul.f32 %v3200, 1.442695
    %v3202 = vpow.pop %v3201
    %v3203 = vsel %vm302, %v3202, 0.0
    %3204 = vadd.xlane.f32.xlu0 %v3203
    %v3205 = vpop.xlane.xlu0 %3204
    %v3206 = vrcp.pop %v3205
    %v3207 = vmul.f32 %v3202, %v3206
    %3208 = vrot.lane.b32.xlu0 %v2113, 48
    %v3209 = vpop.permute.xlu0 %3208
    %v3212 = vsel %vm302, %v3207, 0
    %3214 = vmatprep.subr.mxu0 0.0
    %3215 = vmatpush1.msra.mxu0 0.0
    %3216 = vmatprep.subr.mxu0 0.0
    %3217 = vmatpush1.msra.mxu0 0.0
    %3218 = vmatprep.subr.mxu0 0.0
    %3219 = vmatpush1.msra.mxu0 0.0
    %3220 = vmatprep.subr.mxu0 0.0
    %3221 = vmatpush1.msra.mxu0 0.0
    %3222 = vmatprep.subr.mxu0 0.0
    %3223 = vmatpush1.msra.mxu0 0.0
    %3224 = vmatprep.subr.mxu0 0.0
    %3225 = vmatpush1.msra.mxu0 0.0
    %3226 = vmatprep.subr.mxu0 0.0
    %3227 = vmatpush1.msra.mxu0 0.0
    %3228 = vmatprep.subr.mxu0 0.0
    %3229 = vmatpush1.msra.mxu0 0.0
    %3230 = vmatprep.subr.mxu0 0.0
    %3231 = vmatpush1.msra.mxu0 0.0
    %3232 = vmatprep.subr.mxu0 0.0
    %3233 = vmatpush1.msra.mxu0 0.0
    %3234 = vmatprep.subr.mxu0 0.0
    %3235 = vmatpush1.msra.mxu0 0.0
    %3236 = vmatprep.subr.mxu0 0.0
    %3237 = vmatpush1.msra.mxu0 0.0
    %3238 = vmatprep.subr.mxu0 0.0
    %3239 = vmatpush1.msra.mxu0 0.0
    %3240 = vmatprep.subr.mxu0 0.0
    %3241 = vmatpush1.msra.mxu0 0.0
    %3242 = vmatprep.subr.mxu0 0.0
    %3243 = vmatpush1.msra.mxu0 0.0
    %3244 = vmatprep.subr.mxu0 0.0
    %3245 = vmatpush1.msra.mxu0 %v3209
    %3246 = vmatprep.subr.mxu0 0.0
    %3247 = vmatpush2.msra.mxu0 0.0
    %3248 = vmatprep.subr.mxu0 0.0
    %3249 = vmatpush2.msra.mxu0 0.0
    %3250 = vmatprep.subr.mxu0 0.0
    %3251 = vmatpush2.msra.mxu0 0.0
    %3252 = vmatprep.subr.mxu0 0.0
    %3253 = vmatpush2.msra.mxu0 0.0
    %3254 = vmatprep.subr.mxu0 0.0
    %3255 = vmatpush2.msra.mxu0 0.0
    %3256 = vmatprep.subr.mxu0 0.0
    %3257 = vmatpush2.msra.mxu0 0.0
    %3258 = vmatprep.subr.mxu0 0.0
    %3259 = vmatpush2.msra.mxu0 0.0
    %3260 = vmatprep.subr.mxu0 0.0
    %3261 = vmatpush2.msra.mxu0 0.0
    %3262 = vmatprep.subr.mxu0 0.0
    %3263 = vmatpush2.msra.mxu0 0.0
    %3264 = vmatprep.subr.mxu0 0.0
    %3265 = vmatpush2.msra.mxu0 0.0
    %3266 = vmatprep.subr.mxu0 0.0
    %3267 = vmatpush2.msra.mxu0 0.0
    %3268 = vmatprep.subr.mxu0 0.0
    %3269 = vmatpush2.msra.mxu0 0.0
    %3270 = vmatprep.subr.mxu0 0.0
    %3271 = vmatpush2.msra.mxu0 0.0
    %3272 = vmatprep.subr.mxu0 0.0
    %3273 = vmatpush2.msra.mxu0 0.0
    %3274 = vmatprep.subr.mxu0 0.0
    %3275 = vmatpush2.msra.mxu0 0.0
    %3276 = vmatprep.subr.mxu0 0.0
    %3277 = vmatpush2.msra.mxu0 0.0
    %3278 = vmatprep.mubr.f32.mxu0 0.0
    %3279 = vmatmul.mubr.f32.gmra.mxu0 %v3212
    %v3280 = vpop.f32.mrf.mxu0
    %v3281 = vadd.f32 0.0, %v3280
    %v3282 = vpop.f32.mrf.mxu0
    %3283 = vdwg.mxu0
    %3284 = vrot.lane.b32.xlu0 %v2113, 104
    %v3285 = vpop.permute.xlu0 %3284
    %3286 = vrot.lane.b32.xlu0 %v2113, 72
    %v3287 = vpop.permute.xlu0 %3286
    %v3288 = vsel %vm302, %v3285, 0
    %v3290 = vsel %vm302, %v3287, 0
    %3292 = vmatprep.subr.mxu0 0.0
    %3293 = vmatpush1.xpose.msra.mxu0 0.0
    %3294 = vmatprep.subr.mxu0 0.0
    %3295 = vmatpush1.xpose.msra.mxu0 0.0
    %3296 = vmatprep.subr.mxu0 0.0
    %3297 = vmatpush1.xpose.msra.mxu0 0.0
    %3298 = vmatprep.subr.mxu0 0.0
    %3299 = vmatpush1.xpose.msra.mxu0 0.0
    %3300 = vmatprep.subr.mxu0 0.0
    %3301 = vmatpush1.xpose.msra.mxu0 0.0
    %3302 = vmatprep.subr.mxu0 0.0
    %3303 = vmatpush1.xpose.msra.mxu0 0.0
    %3304 = vmatprep.subr.mxu0 0.0
    %3305 = vmatpush1.xpose.msra.mxu0 0.0
    %3306 = vmatprep.subr.mxu0 0.0
    %3307 = vmatpush1.xpose.msra.mxu0 0.0
    %3308 = vmatprep.subr.mxu0 0.0
    %3309 = vmatpush1.xpose.msra.mxu0 0.0
    %3310 = vmatprep.subr.mxu0 0.0
    %3311 = vmatpush1.xpose.msra.mxu0 0.0
    %3312 = vmatprep.subr.mxu0 0.0
    %3313 = vmatpush1.xpose.msra.mxu0 0.0
    %3314 = vmatprep.subr.mxu0 0.0
    %3315 = vmatpush1.xpose.msra.mxu0 0.0
    %3316 = vmatprep.subr.mxu0 0.0
    %3317 = vmatpush1.xpose.msra.mxu0 0.0
    %3318 = vmatprep.subr.mxu0 0.0
    %3319 = vmatpush1.xpose.msra.mxu0 0.0
    %3320 = vmatprep.subr.mxu0 0.0
    %3321 = vmatpush1.xpose.msra.mxu0 0.0
    %3322 = vmatprep.subr.mxu0 0.0
    %3323 = vmatpush1.xpose.msra.mxu0 %v3290
    %3324 = vmatprep.subr.mxu0 0.0
    %3325 = vmatpush2.xpose.msra.mxu0 0.0
    %3326 = vmatprep.subr.mxu0 0.0
    %3327 = vmatpush2.xpose.msra.mxu0 0.0
    %3328 = vmatprep.subr.mxu0 0.0
    %3329 = vmatpush2.xpose.msra.mxu0 0.0
    %3330 = vmatprep.subr.mxu0 0.0
    %3331 = vmatpush2.xpose.msra.mxu0 0.0
    %3332 = vmatprep.subr.mxu0 0.0
    %3333 = vmatpush2.xpose.msra.mxu0 0.0
    %3334 = vmatprep.subr.mxu0 0.0
    %3335 = vmatpush2.xpose.msra.mxu0 0.0
    %3336 = vmatprep.subr.mxu0 0.0
    %3337 = vmatpush2.xpose.msra.mxu0 0.0
    %3338 = vmatprep.subr.mxu0 0.0
    %3339 = vmatpush2.xpose.msra.mxu0 0.0
    %3340 = vmatprep.subr.mxu0 0.0
    %3341 = vmatpush2.xpose.msra.mxu0 0.0
    %3342 = vmatprep.subr.mxu0 0.0
    %3343 = vmatpush2.xpose.msra.mxu0 0.0
    %3344 = vmatprep.subr.mxu0 0.0
    %3345 = vmatpush2.xpose.msra.mxu0 0.0
    %3346 = vmatprep.subr.mxu0 0.0
    %3347 = vmatpush2.xpose.msra.mxu0 0.0
    %3348 = vmatprep.subr.mxu0 0.0
    %3349 = vmatpush2.xpose.msra.mxu0 0.0
    %3350 = vmatprep.subr.mxu0 0.0
    %3351 = vmatpush2.xpose.msra.mxu0 0.0
    %3352 = vmatprep.subr.mxu0 0.0
    %3353 = vmatpush2.xpose.msra.mxu0 0.0
    %3354 = vmatprep.subr.mxu0 0.0
    %3355 = vmatpush2.xpose.msra.mxu0 0.0
    %3356 = vmatprep.mubr.f32.mxu0 0.0
    %3357 = vmatmul.mubr.f32.gmra.mxu0 %v3288
    %v3358 = vpop.f32.mrf.mxu0
    %v3359 = vadd.f32 %v980, %v3358
    %v3360 = vpop.f32.mrf.mxu0
    %3361 = vdwg.mxu0
    %v3362 = vsel %vm302, %v3359, -inf
    %3363 = vmax.xlane.f32.xlu0 %v3362
    %v3364 = vpop.xlane.xlu0 %3363
    %v3365 = vsub.f32 %v3359, %v3364
    %v3366 = vmul.f32 %v3365, 1.442695
    %v3367 = vpow.pop %v3366
    %v3368 = vsel %vm302, %v3367, 0.0
    %3369 = vadd.xlane.f32.xlu0 %v3368
    %v3370 = vpop.xlane.xlu0 %3369
    %v3371 = vrcp.pop %v3370
    %v3372 = vmul.f32 %v3367, %v3371
    %3373 = vrot.lane.b32.xlu0 %v2113, 40
    %v3374 = vpop.permute.xlu0 %3373
    %v3377 = vsel %vm302, %v3372, 0
    %3379 = vmatprep.subr.mxu0 0.0
    %3380 = vmatpush1.msra.mxu0 0.0
    %3381 = vmatprep.subr.mxu0 0.0
    %3382 = vmatpush1.msra.mxu0 0.0
    %3383 = vmatprep.subr.mxu0 0.0
    %3384 = vmatpush1.msra.mxu0 0.0
    %3385 = vmatprep.subr.mxu0 0.0
    %3386 = vmatpush1.msra.mxu0 0.0
    %3387 = vmatprep.subr.mxu0 0.0
    %3388 = vmatpush1.msra.mxu0 0.0
    %3389 = vmatprep.subr.mxu0 0.0
    %3390 = vmatpush1.msra.mxu0 0.0
    %3391 = vmatprep.subr.mxu0 0.0
    %3392 = vmatpush1.msra.mxu0 0.0
    %3393 = vmatprep.subr.mxu0 0.0
    %3394 = vmatpush1.msra.mxu0 0.0
    %3395 = vmatprep.subr.mxu0 0.0
    %3396 = vmatpush1.msra.mxu0 0.0
    %3397 = vmatprep.subr.mxu0 0.0
    %3398 = vmatpush1.msra.mxu0 0.0
    %3399 = vmatprep.subr.mxu0 0.0
    %3400 = vmatpush1.msra.mxu0 0.0
    %3401 = vmatprep.subr.mxu0 0.0
    %3402 = vmatpush1.msra.mxu0 0.0
    %3403 = vmatprep.subr.mxu0 0.0
    %3404 = vmatpush1.msra.mxu0 0.0
    %3405 = vmatprep.subr.mxu0 0.0
    %3406 = vmatpush1.msra.mxu0 0.0
    %3407 = vmatprep.subr.mxu0 0.0
    %3408 = vmatpush1.msra.mxu0 0.0
    %3409 = vmatprep.subr.mxu0 0.0
    %3410 = vmatpush1.msra.mxu0 %v3374
    %3411 = vmatprep.subr.mxu0 0.0
    %3412 = vmatpush2.msra.mxu0 0.0
    %3413 = vmatprep.subr.mxu0 0.0
    %3414 = vmatpush2.msra.mxu0 0.0
    %3415 = vmatprep.subr.mxu0 0.0
    %3416 = vmatpush2.msra.mxu0 0.0
    %3417 = vmatprep.subr.mxu0 0.0
    %3418 = vmatpush2.msra.mxu0 0.0
    %3419 = vmatprep.subr.mxu0 0.0
    %3420 = vmatpush2.msra.mxu0 0.0
    %3421 = vmatprep.subr.mxu0 0.0
    %3422 = vmatpush2.msra.mxu0 0.0
    %3423 = vmatprep.subr.mxu0 0.0
    %3424 = vmatpush2.msra.mxu0 0.0
    %3425 = vmatprep.subr.mxu0 0.0
    %3426 = vmatpush2.msra.mxu0 0.0
    %3427 = vmatprep.subr.mxu0 0.0
    %3428 = vmatpush2.msra.mxu0 0.0
    %3429 = vmatprep.subr.mxu0 0.0
    %3430 = vmatpush2.msra.mxu0 0.0
    %3431 = vmatprep.subr.mxu0 0.0
    %3432 = vmatpush2.msra.mxu0 0.0
    %3433 = vmatprep.subr.mxu0 0.0
    %3434 = vmatpush2.msra.mxu0 0.0
    %3435 = vmatprep.subr.mxu0 0.0
    %3436 = vmatpush2.msra.mxu0 0.0
    %3437 = vmatprep.subr.mxu0 0.0
    %3438 = vmatpush2.msra.mxu0 0.0
    %3439 = vmatprep.subr.mxu0 0.0
    %3440 = vmatpush2.msra.mxu0 0.0
    %3441 = vmatprep.subr.mxu0 0.0
    %3442 = vmatpush2.msra.mxu0 0.0
    %3443 = vmatprep.mubr.f32.mxu0 0.0
    %3444 = vmatmul.mubr.f32.gmra.mxu0 %v3377
    %v3445 = vpop.f32.mrf.mxu0
    %v3446 = vadd.f32 0.0, %v3445
    %v3447 = vpop.f32.mrf.mxu0
    %3448 = vdwg.mxu0
    %3450 = vrot.lane.b32.xlu0 %v3116, 8
    %v3451 = vpop.permute.xlu0 %3450
    %3454 = vrot.lane.b32.xlu0 %v3281, 16
    %v3455 = vpop.permute.xlu0 %3454
    %3458 = vrot.lane.b32.xlu0 %v3446, 24
    %v3459 = vpop.permute.xlu0 %3458
    %v3461 = vsel %vm302, %v2951, %v3451
    %v3462 = vsel %vm972, %v3461, %v3455
    %v3463 = vsel %vm974, %v3462, %v3459
    %s3464 = scalar_lea.vmem %s4, 32
    %v3465 = vld [vmem:[%s3464] sm:$0xff]
    %v3466 = vld [vmem:[%s3464 + $0x8] sm:$0xff]
    %v3467 = vld [vmem:[%s3464 + $0x10] sm:$0xff]
    %v3468 = vld [vmem:[%s3464 + $0x18] sm:$0xff]
    %v3469 = vld [vmem:[%s8 + $0xc] sm:$0x1]
    %v3470 = vlaneseq
    %v3471 = vshrl.u32 %v3470, 7
    %v3472 = vsub.s32 0, %v3471
    %v3473 = vrot.slane %v3469, %v3472
    %v3475 = vsel %vm164, %v2789, 0
    %v3478 = vsel %vm164, %v3463, 0
    %3480 = vmatprep.subr.mxu0 0.0
    %3481 = vmatpush1.msra.mxu0 0.0
    %3482 = vmatprep.subr.mxu0 0.0
    %3483 = vmatpush1.msra.mxu0 0.0
    %3484 = vmatprep.subr.mxu0 0.0
    %3485 = vmatpush1.msra.mxu0 0.0
    %3486 = vmatprep.subr.mxu0 0.0
    %3487 = vmatpush1.msra.mxu0 0.0
    %3488 = vmatprep.subr.mxu0 0.0
    %3489 = vmatpush1.msra.mxu0 0.0
    %3490 = vmatprep.subr.mxu0 0.0
    %3491 = vmatpush1.msra.mxu0 0.0
    %3492 = vmatprep.subr.mxu0 0.0
    %3493 = vmatpush1.msra.mxu0 0.0
    %3494 = vmatprep.subr.mxu0 0.0
    %3495 = vmatpush1.msra.mxu0 0.0
    %3496 = vmatprep.subr.mxu0 0.0
    %3497 = vmatpush1.msra.mxu0 0.0
    %3498 = vmatprep.subr.mxu0 0.0
    %3499 = vmatpush1.msra.mxu0 0.0
    %3500 = vmatprep.subr.mxu0 0.0
    %3501 = vmatpush1.msra.mxu0 0.0
    %3502 = vmatprep.subr.mxu0 0.0
    %3503 = vmatpush1.msra.mxu0 0.0
    %3504 = vmatprep.subr.mxu0 0.0
    %3505 = vmatpush1.msra.mxu0 %v3468
    %3506 = vmatprep.subr.mxu0 0.0
    %3507 = vmatpush1.msra.mxu0 %v3467
    %3508 = vmatprep.subr.mxu0 0.0
    %3509 = vmatpush1.msra.mxu0 %v3466
    %3510 = vmatprep.subr.mxu0 0.0
    %3511 = vmatpush1.msra.mxu0 %v3465
    %3512 = vmatprep.subr.mxu0 0.0
    %3513 = vmatpush2.msra.mxu0 0.0
    %3514 = vmatprep.subr.mxu0 0.0
    %3515 = vmatpush2.msra.mxu0 0.0
    %3516 = vmatprep.subr.mxu0 0.0
    %3517 = vmatpush2.msra.mxu0 0.0
    %3518 = vmatprep.subr.mxu0 0.0
    %3519 = vmatpush2.msra.mxu0 0.0
    %3520 = vmatprep.subr.mxu0 0.0
    %3521 = vmatpush2.msra.mxu0 0.0
    %3522 = vmatprep.subr.mxu0 0.0
    %3523 = vmatpush2.msra.mxu0 0.0
    %3524 = vmatprep.subr.mxu0 0.0
    %3525 = vmatpush2.msra.mxu0 0.0
    %3526 = vmatprep.subr.mxu0 0.0
    %3527 = vmatpush2.msra.mxu0 0.0
    %3528 = vmatprep.subr.mxu0 0.0
    %3529 = vmatpush2.msra.mxu0 0.0
    %3530 = vmatprep.subr.mxu0 0.0
    %3531 = vmatpush2.msra.mxu0 0.0
    %3532 = vmatprep.subr.mxu0 0.0
    %3533 = vmatpush2.msra.mxu0 0.0
    %3534 = vmatprep.subr.mxu0 0.0
    %3535 = vmatpush2.msra.mxu0 0.0
    %3536 = vmatprep.subr.mxu0 0.0
    %3537 = vmatpush2.msra.mxu0 0.0
    %3538 = vmatprep.subr.mxu0 0.0
    %3539 = vmatpush2.msra.mxu0 0.0
    %3540 = vmatprep.subr.mxu0 0.0
    %3541 = vmatpush2.msra.mxu0 0.0
    %3542 = vmatprep.subr.mxu0 0.0
    %3543 = vmatpush2.msra.mxu0 0.0
    %3544 = vmatprep.mubr.f32.mxu0 0.0
    %3545 = vmatmul.mubr.f32.gmra.mxu0 %v3475
    %v3546 = vpop.f32.mrf.mxu0
    %v3547 = vadd.f32 %v3473, %v3546
    %v3548 = vpop.f32.mrf.mxu0
    %3549 = vmatprep.mubr.f32.mxu0 0.0
    %3550 = vmatmul.mubr.f32.gmra.mxu0 %v3478
    %v3551 = vpop.f32.mrf.mxu0
    %v3552 = vadd.f32 %v3473, %v3551
    %v3553 = vpop.f32.mrf.mxu0
    %3554 = vdwg.mxu0
    %v3555 = vadd.f32 %v2023, %v3547
    %v3556 = vadd.f32 %v2024, %v3552
    %v3557 = vld [vmem:[%s8 + $0xd] sm:$0x1]
    %v3558 = vld [vmem:[%s8 + $0xe] sm:$0x1]
    %v3559 = vsel %vm164, %v3555, 0.0
    %3560 = vadd.xlane.f32.xlu0 %v3559
    %v3561 = vpop.xlane.xlu0 %3560
    %v3562 = vsel %vm164, %v3556, 0.0
    %3563 = vadd.xlane.f32.xlu0 %v3562
    %v3564 = vpop.xlane.xlu0 %3563
    %v3565 = vmul.f32 %v3561, %v171
    %v3566 = vmul.f32 %v3564, %v171
    %v3567 = vsub.f32 %v3555, %v3565
    %v3568 = vsub.f32 %v3556, %v3566
    %v3569 = vmul.f32 %v3567, %v3567
    %v3570 = vmul.f32 %v3568, %v3568
    %v3571 = vsel %vm164, %v3569, 0.0
    %3572 = vadd.xlane.f32.xlu0 %v3571
    %v3573 = vpop.xlane.xlu0 %3572
    %v3574 = vsel %vm164, %v3570, 0.0
    %3575 = vadd.xlane.f32.xlu0 %v3574
    %v3576 = vpop.xlane.xlu0 %3575
    %v3577 = vmul.f32 %v3573, %v171
    %v3578 = vmul.f32 %v3576, %v171
    %v3579 = vadd.f32 %v3577, 1e-12
    %v3580 = vadd.f32 %v3578, 1e-12
    %v3581 = vrsqrt.pop %v3579
    %v3582 = vrsqrt.pop %v3580
    %v3583 = vmul.f32 %v3567, %v3581
    %v3584 = vmul.f32 %v3568, %v3582
    %v3585 = vlaneseq
    %v3586 = vshrl.u32 %v3585, 7
    %v3587 = vsub.s32 0, %v3586
    %v3588 = vrot.slane %v3557, %v3587
    %v3589 = vmul.f32 %v3583, %v3588
    %v3590 = vmul.f32 %v3584, %v3588
    %v3591 = vlaneseq
    %v3592 = vshrl.u32 %v3591, 7
    %v3593 = vsub.s32 0, %v3592
    %v3594 = vrot.slane %v3558, %v3593
    %v3595 = vadd.f32 %v3589, %v3594
    %v3596 = vadd.f32 %v3590, %v3594
    %s3597 = scalar_lea.vmem %s5, 32
    %v3598 = vld [vmem:[%s3597] sm:$0xff]
    %v3599 = vld [vmem:[%s3597 + $0x8] sm:$0xff]
    %v3600 = vld [vmem:[%s3597 + $0x10] sm:$0xff]
    %v3601 = vld [vmem:[%s3597 + $0x18] sm:$0xff]
    %v3602 = vld [vmem:[%s8 + $0xf] sm:$0x1]
    %v3603 = vlaneseq
    %v3604 = vshrl.u32 %v3603, 7
    %v3605 = vsub.s32 0, %v3604
    %v3606 = vrot.slane %v3602, %v3605
    %v3608 = vsel %vm164, %v3595, 0
    %v3611 = vsel %vm164, %v3596, 0
    %3613 = vmatprep.subr.mxu0 0.0
    %3614 = vmatpush1.msra.mxu0 0.0
    %3615 = vmatprep.subr.mxu0 0.0
    %3616 = vmatpush1.msra.mxu0 0.0
    %3617 = vmatprep.subr.mxu0 0.0
    %3618 = vmatpush1.msra.mxu0 0.0
    %3619 = vmatprep.subr.mxu0 0.0
    %3620 = vmatpush1.msra.mxu0 0.0
    %3621 = vmatprep.subr.mxu0 0.0
    %3622 = vmatpush1.msra.mxu0 0.0
    %3623 = vmatprep.subr.mxu0 0.0
    %3624 = vmatpush1.msra.mxu0 0.0
    %3625 = vmatprep.subr.mxu0 0.0
    %3626 = vmatpush1.msra.mxu0 0.0
    %3627 = vmatprep.subr.mxu0 0.0
    %3628 = vmatpush1.msra.mxu0 0.0
    %3629 = vmatprep.subr.mxu0 0.0
    %3630 = vmatpush1.msra.mxu0 0.0
    %3631 = vmatprep.subr.mxu0 0.0
    %3632 = vmatpush1.msra.mxu0 0.0
    %3633 = vmatprep.subr.mxu0 0.0
    %3634 = vmatpush1.msra.mxu0 0.0
    %3635 = vmatprep.subr.mxu0 0.0
    %3636 = vmatpush1.msra.mxu0 0.0
    %3637 = vmatprep.subr.mxu0 0.0
    %3638 = vmatpush1.msra.mxu0 %v3601
    %3639 = vmatprep.subr.mxu0 0.0
    %3640 = vmatpush1.msra.mxu0 %v3600
    %3641 = vmatprep.subr.mxu0 0.0
    %3642 = vmatpush1.msra.mxu0 %v3599
    %3643 = vmatprep.subr.mxu0 0.0
    %3644 = vmatpush1.msra.mxu0 %v3598
    %3645 = vmatprep.subr.mxu0 0.0
    %3646 = vmatpush2.msra.mxu0 0.0
    %3647 = vmatprep.subr.mxu0 0.0
    %3648 = vmatpush2.msra.mxu0 0.0
    %3649 = vmatprep.subr.mxu0 0.0
    %3650 = vmatpush2.msra.mxu0 0.0
    %3651 = vmatprep.subr.mxu0 0.0
    %3652 = vmatpush2.msra.mxu0 0.0
    %3653 = vmatprep.subr.mxu0 0.0
    %3654 = vmatpush2.msra.mxu0 0.0
    %3655 = vmatprep.subr.mxu0 0.0
    %3656 = vmatpush2.msra.mxu0 0.0
    %3657 = vmatprep.subr.mxu0 0.0
    %3658 = vmatpush2.msra.mxu0 0.0
    %3659 = vmatprep.subr.mxu0 0.0
    %3660 = vmatpush2.msra.mxu0 0.0
    %3661 = vmatprep.subr.mxu0 0.0
    %3662 = vmatpush2.msra.mxu0 0.0
    %3663 = vmatprep.subr.mxu0 0.0
    %3664 = vmatpush2.msra.mxu0 0.0
    %3665 = vmatprep.subr.mxu0 0.0
    %3666 = vmatpush2.msra.mxu0 0.0
    %3667 = vmatprep.subr.mxu0 0.0
    %3668 = vmatpush2.msra.mxu0 0.0
    %3669 = vmatprep.subr.mxu0 0.0
    %3670 = vmatpush2.msra.mxu0 0.0
    %3671 = vmatprep.subr.mxu0 0.0
    %3672 = vmatpush2.msra.mxu0 0.0
    %3673 = vmatprep.subr.mxu0 0.0
    %3674 = vmatpush2.msra.mxu0 0.0
    %3675 = vmatprep.subr.mxu0 0.0
    %3676 = vmatpush2.msra.mxu0 0.0
    %3677 = vmatprep.mubr.f32.mxu0 0.0
    %3678 = vmatmul.mubr.f32.gmra.mxu0 %v3608
    %v3679 = vpop.f32.mrf.mxu0
    %v3680 = vadd.f32 %v3606, %v3679
    %v3681 = vpop.f32.mrf.mxu0
    %3682 = vmatprep.mubr.f32.mxu0 0.0
    %3683 = vmatmul.mubr.f32.gmra.mxu0 %v3611
    %v3684 = vpop.f32.mrf.mxu0
    %v3685 = vadd.f32 %v3606, %v3684
    %v3686 = vpop.f32.mrf.mxu0
    %3687 = vdwg.mxu0
    %v3688 = vmul.f32 %v3680, 0.5
    %v3689 = vmul.f32 %v3685, 0.5
    %v3690 = vmul.f32 %v3680, 0.70710677
    %v3691 = vmul.f32 %v3685, 0.70710677
    %v3692 = verf.f32.pop %v3690
    %v3693 = verf.f32.pop %v3691
    %v3694 = vadd.f32 %v3692, 1.0
    %v3695 = vadd.f32 %v3693, 1.0
    %v3696 = vmul.f32 %v3688, %v3694
    %v3697 = vmul.f32 %v3689, %v3695
    %s3698 = scalar_lea.vmem %s6, 128
    %v3699 = vld [vmem:[%s3698] sm:$0xff]
    %v3700 = vld [vmem:[%s3698 + $0x8] sm:$0xff]
    %v3701 = vld [vmem:[%s3698 + $0x10] sm:$0xff]
    %v3702 = vld [vmem:[%s3698 + $0x18] sm:$0xff]
    %v3703 = vld [vmem:[%s3698 + $0x20] sm:$0xff]
    %v3704 = vld [vmem:[%s3698 + $0x28] sm:$0xff]
    %v3705 = vld [vmem:[%s3698 + $0x30] sm:$0xff]
    %v3706 = vld [vmem:[%s3698 + $0x38] sm:$0xff]
    %v3707 = vld [vmem:[%s3698 + $0x40] sm:$0xff]
    %v3708 = vld [vmem:[%s3698 + $0x48] sm:$0xff]
    %v3709 = vld [vmem:[%s3698 + $0x50] sm:$0xff]
    %v3710 = vld [vmem:[%s3698 + $0x58] sm:$0xff]
    %v3711 = vld [vmem:[%s3698 + $0x60] sm:$0xff]
    %v3712 = vld [vmem:[%s3698 + $0x68] sm:$0xff]
    %v3713 = vld [vmem:[%s3698 + $0x70] sm:$0xff]
    %v3714 = vld [vmem:[%s3698 + $0x78] sm:$0xff]
    %v3715 = vld [vmem:[%s8 + $0x10] sm:$0x1]
    %v3716 = vlaneseq
    %v3717 = vshrl.u32 %v3716, 7
    %v3718 = vsub.s32 0, %v3717
    %v3719 = vrot.slane %v3715, %v3718
    %3720 = vmatprep.subr.mxu0 0.0
    %3721 = vmatpush1.msra.mxu0 %v3714
    %3722 = vmatprep.subr.mxu0 0.0
    %3723 = vmatpush1.msra.mxu0 %v3713
    %3724 = vmatprep.subr.mxu0 0.0
    %3725 = vmatpush1.msra.mxu0 %v3712
    %3726 = vmatprep.subr.mxu0 0.0
    %3727 = vmatpush1.msra.mxu0 %v3711
    %3728 = vmatprep.subr.mxu0 0.0
    %3729 = vmatpush1.msra.mxu0 %v3710
    %3730 = vmatprep.subr.mxu0 0.0
    %3731 = vmatpush1.msra.mxu0 %v3709
    %3732 = vmatprep.subr.mxu0 0.0
    %3733 = vmatpush1.msra.mxu0 %v3708
    %3734 = vmatprep.subr.mxu0 0.0
    %3735 = vmatpush1.msra.mxu0 %v3707
    %3736 = vmatprep.subr.mxu0 0.0
    %3737 = vmatpush1.msra.mxu0 %v3706
    %3738 = vmatprep.subr.mxu0 0.0
    %3739 = vmatpush1.msra.mxu0 %v3705
    %3740 = vmatprep.subr.mxu0 0.0
    %3741 = vmatpush1.msra.mxu0 %v3704
    %3742 = vmatprep.subr.mxu0 0.0
    %3743 = vmatpush1.msra.mxu0 %v3703
    %3744 = vmatprep.subr.mxu0 0.0
    %3745 = vmatpush1.msra.mxu0 %v3702
    %3746 = vmatprep.subr.mxu0 0.0
    %3747 = vmatpush1.msra.mxu0 %v3701
    %3748 = vmatprep.subr.mxu0 0.0
    %3749 = vmatpush1.msra.mxu0 %v3700
    %3750 = vmatprep.subr.mxu0 0.0
    %3751 = vmatpush1.msra.mxu0 %v3699
    %3752 = vmatprep.subr.mxu0 0.0
    %3753 = vmatpush2.msra.mxu0 0.0
    %3754 = vmatprep.subr.mxu0 0.0
    %3755 = vmatpush2.msra.mxu0 0.0
    %3756 = vmatprep.subr.mxu0 0.0
    %3757 = vmatpush2.msra.mxu0 0.0
    %3758 = vmatprep.subr.mxu0 0.0
    %3759 = vmatpush2.msra.mxu0 0.0
    %3760 = vmatprep.subr.mxu0 0.0
    %3761 = vmatpush2.msra.mxu0 0.0
    %3762 = vmatprep.subr.mxu0 0.0
    %3763 = vmatpush2.msra.mxu0 0.0
    %3764 = vmatprep.subr.mxu0 0.0
    %3765 = vmatpush2.msra.mxu0 0.0
    %3766 = vmatprep.subr.mxu0 0.0
    %3767 = vmatpush2.msra.mxu0 0.0
    %3768 = vmatprep.subr.mxu0 0.0
    %3769 = vmatpush2.msra.mxu0 0.0
    %3770 = vmatprep.subr.mxu0 0.0
    %3771 = vmatpush2.msra.mxu0 0.0
    %3772 = vmatprep.subr.mxu0 0.0
    %3773 = vmatpush2.msra.mxu0 0.0
    %3774 = vmatprep.subr.mxu0 0.0
    %3775 = vmatpush2.msra.mxu0 0.0
    %3776 = vmatprep.subr.mxu0 0.0
    %3777 = vmatpush2.msra.mxu0 0.0
    %3778 = vmatprep.subr.mxu0 0.0
    %3779 = vmatpush2.msra.mxu0 0.0
    %3780 = vmatprep.subr.mxu0 0.0
    %3781 = vmatpush2.msra.mxu0 0.0
    %3782 = vmatprep.subr.mxu0 0.0
    %3783 = vmatpush2.msra.mxu0 0.0
    %3784 = vmatprep.mubr.f32.mxu0 0.0
    %3785 = vmatmul.mubr.f32.gmra.mxu0 %v3696
    %v3786 = vpop.f32.mrf.mxu0
    %v3787 = vadd.f32 %v3719, %v3786
    %v3788 = vpop.f32.mrf.mxu0
    %3789 = vmatprep.mubr.f32.mxu0 0.0
    %3790 = vmatmul.mubr.f32.gmra.mxu0 %v3697
    %v3791 = vpop.f32.mrf.mxu0
    %v3792 = vadd.f32 %v3719, %v3791
    %v3793 = vpop.f32.mrf.mxu0
    %3794 = vdwg.mxu0
    %v3795 = vadd.f32 %v3595, %v3787
    %v3796 = vadd.f32 %v3596, %v3792
    %v3797 = vld [vmem:[%s8 + $0x11] sm:$0x1]
    %v3798 = vld [vmem:[%s8 + $0x12] sm:$0x1]
    %v3799 = vsel %vm164, %v3795, 0.0
    %3800 = vadd.xlane.f32.xlu0 %v3799
    %v3801 = vpop.xlane.xlu0 %3800
    %v3802 = vsel %vm164, %v3796, 0.0
    %3803 = vadd.xlane.f32.xlu0 %v3802
    %v3804 = vpop.xlane.xlu0 %3803
    %v3805 = vmul.f32 %v3801, %v171
    %v3806 = vmul.f32 %v3804, %v171
    %v3807 = vsub.f32 %v3795, %v3805
    %v3808 = vsub.f32 %v3796, %v3806
    %v3809 = vmul.f32 %v3807, %v3807
    %v3810 = vmul.f32 %v3808, %v3808
    %v3811 = vsel %vm164, %v3809, 0.0
    %3812 = vadd.xlane.f32.xlu0 %v3811
    %v3813 = vpop.xlane.xlu0 %3812
    %v3814 = vsel %vm164, %v3810, 0.0
    %3815 = vadd.xlane.f32.xlu0 %v3814
    %v3816 = vpop.xlane.xlu0 %3815
    %v3817 = vmul.f32 %v3813, %v171
    %v3818 = vmul.f32 %v3816, %v171
    %v3819 = vadd.f32 %v3817, 1e-12
    %v3820 = vadd.f32 %v3818, 1e-12
    %v3821 = vrsqrt.pop %v3819
    %v3822 = vrsqrt.pop %v3820
    %v3823 = vmul.f32 %v3807, %v3821
    %v3824 = vmul.f32 %v3808, %v3822
    %v3825 = vlaneseq
    %v3826 = vshrl.u32 %v3825, 7
    %v3827 = vsub.s32 0, %v3826
    %v3828 = vrot.slane %v3797, %v3827
    %v3829 = vmul.f32 %v3823, %v3828
    %v3830 = vmul.f32 %v3824, %v3828
    %v3831 = vlaneseq
    %v3832 = vshrl.u32 %v3831, 7
    %v3833 = vsub.s32 0, %v3832
    %v3834 = vrot.slane %v3798, %v3833
    %v3835 = vadd.f32 %v3829, %v3834
    %v3836 = vadd.f32 %v3830, %v3834
    %v3837 = vlaneseq
    %v3838 = vshrl.u32 %v3837, 7
    %v3839 = vmul.u32 %v3838, 8
    %vm3840 = vcmp.eq.s32.totalorder %v34, %v3839
    %v3841 = vsel %vm3840, 1.0, 0.0
    %v3843 = vsel %vm972, %v3841, 0
    %3845 = vmatprep.subr.mxu0 0.0
    %3846 = vmatpush1.msra.mxu0 0.0
    %3847 = vmatprep.subr.mxu0 0.0
    %3848 = vmatpush1.msra.mxu0 0.0
    %3849 = vmatprep.subr.mxu0 0.0
    %3850 = vmatpush1.msra.mxu0 0.0
    %3851 = vmatprep.subr.mxu0 0.0
    %3852 = vmatpush1.msra.mxu0 0.0
    %3853 = vmatprep.subr.mxu0 0.0
    %3854 = vmatpush1.msra.mxu0 0.0
    %3855 = vmatprep.subr.mxu0 0.0
    %3856 = vmatpush1.msra.mxu0 0.0
    %3857 = vmatprep.subr.mxu0 0.0
    %3858 = vmatpush1.msra.mxu0 0.0
    %3859 = vmatprep.subr.mxu0 0.0
    %3860 = vmatpush1.msra.mxu0 0.0
    %3861 = vmatprep.subr.mxu0 0.0
    %3862 = vmatpush1.msra.mxu0 0.0
    %3863 = vmatprep.subr.mxu0 0.0
    %3864 = vmatpush1.msra.mxu0 0.0
    %3865 = vmatprep.subr.mxu0 0.0
    %3866 = vmatpush1.msra.mxu0 0.0
    %3867 = vmatprep.subr.mxu0 0.0
    %3868 = vmatpush1.msra.mxu0 0.0
    %3869 = vmatprep.subr.mxu0 0.0
    %3870 = vmatpush1.msra.mxu0 0.0
    %3871 = vmatprep.subr.mxu0 0.0
    %3872 = vmatpush1.msra.mxu0 0.0
    %3873 = vmatprep.subr.mxu0 0.0
    %3874 = vmatpush1.msra.mxu0 %v3836
    %3875 = vmatprep.subr.mxu0 0.0
    %3876 = vmatpush1.msra.mxu0 %v3835
    %3877 = vmatprep.subr.mxu0 0.0
    %3878 = vmatpush2.msra.mxu0 0.0
    %3879 = vmatprep.subr.mxu0 0.0
    %3880 = vmatpush2.msra.mxu0 0.0
    %3881 = vmatprep.subr.mxu0 0.0
    %3882 = vmatpush2.msra.mxu0 0.0
    %3883 = vmatprep.subr.mxu0 0.0
    %3884 = vmatpush2.msra.mxu0 0.0
    %3885 = vmatprep.subr.mxu0 0.0
    %3886 = vmatpush2.msra.mxu0 0.0
    %3887 = vmatprep.subr.mxu0 0.0
    %3888 = vmatpush2.msra.mxu0 0.0
    %3889 = vmatprep.subr.mxu0 0.0
    %3890 = vmatpush2.msra.mxu0 0.0
    %3891 = vmatprep.subr.mxu0 0.0
    %3892 = vmatpush2.msra.mxu0 0.0
    %3893 = vmatprep.subr.mxu0 0.0
    %3894 = vmatpush2.msra.mxu0 0.0
    %3895 = vmatprep.subr.mxu0 0.0
    %3896 = vmatpush2.msra.mxu0 0.0
    %3897 = vmatprep.subr.mxu0 0.0
    %3898 = vmatpush2.msra.mxu0 0.0
    %3899 = vmatprep.subr.mxu0 0.0
    %3900 = vmatpush2.msra.mxu0 0.0
    %3901 = vmatprep.subr.mxu0 0.0
    %3902 = vmatpush2.msra.mxu0 0.0
    %3903 = vmatprep.subr.mxu0 0.0
    %3904 = vmatpush2.msra.mxu0 0.0
    %3905 = vmatprep.subr.mxu0 0.0
    %3906 = vmatpush2.msra.mxu0 0.0
    %3907 = vmatprep.subr.mxu0 0.0
    %3908 = vmatpush2.msra.mxu0 0.0
    %3909 = vmatprep.mubr.f32.mxu0 0.0
    %3910 = vmatmul.mubr.f32.gmra.mxu0 %v3843
    %v3911 = vpop.f32.mrf.mxu0
    %v3912 = vadd.f32 0.0, %v3911
    %v3913 = vpop.f32.mrf.mxu0
    %3914 = vdwg.mxu0
    %v3915 = vld [vmem:[%s7] sm:$0xff]
    %v3916 = vld [vmem:[%s7 + $0x8] sm:$0xff]
    %v3917 = vld [vmem:[%s7 + $0x10] sm:$0xff]
    %v3918 = vld [vmem:[%s7 + $0x18] sm:$0xff]
    %v3919 = vld [vmem:[%s8 + $0x2] sm:$0x1]
    %v3920 = vlaneseq
    %v3921 = vshrl.u32 %v3920, 7
    %v3922 = vsub.s32 0, %v3921
    %v3923 = vrot.slane %v3919, %v3922
    %v3925 = vsel %vm164, %v3912, 0
    %3927 = vmatprep.subr.mxu0 0.0
    %3928 = vmatpush1.msra.mxu0 0.0
    %3929 = vmatprep.subr.mxu0 0.0
    %3930 = vmatpush1.msra.mxu0 0.0
    %3931 = vmatprep.subr.mxu0 0.0
    %3932 = vmatpush1.msra.mxu0 0.0
    %3933 = vmatprep.subr.mxu0 0.0
    %3934 = vmatpush1.msra.mxu0 0.0
    %3935 = vmatprep.subr.mxu0 0.0
    %3936 = vmatpush1.msra.mxu0 0.0
    %3937 = vmatprep.subr.mxu0 0.0
    %3938 = vmatpush1.msra.mxu0 0.0
    %3939 = vmatprep.subr.mxu0 0.0
    %3940 = vmatpush1.msra.mxu0 0.0
    %3941 = vmatprep.subr.mxu0 0.0
    %3942 = vmatpush1.msra.mxu0 0.0
    %3943 = vmatprep.subr.mxu0 0.0
    %3944 = vmatpush1.msra.mxu0 0.0
    %3945 = vmatprep.subr.mxu0 0.0
    %3946 = vmatpush1.msra.mxu0 0.0
    %3947 = vmatprep.subr.mxu0 0.0
    %3948 = vmatpush1.msra.mxu0 0.0
    %3949 = vmatprep.subr.mxu0 0.0
    %3950 = vmatpush1.msra.mxu0 0.0
    %3951 = vmatprep.subr.mxu0 0.0
    %3952 = vmatpush1.msra.mxu0 %v3918
    %3953 = vmatprep.subr.mxu0 0.0
    %3954 = vmatpush1.msra.mxu0 %v3917
    %3955 = vmatprep.subr.mxu0 0.0
    %3956 = vmatpush1.msra.mxu0 %v3916
    %3957 = vmatprep.subr.mxu0 0.0
    %3958 = vmatpush1.msra.mxu0 %v3915
    %3959 = vmatprep.subr.mxu0 0.0
    %3960 = vmatpush2.msra.mxu0 0.0
    %3961 = vmatprep.subr.mxu0 0.0
    %3962 = vmatpush2.msra.mxu0 0.0
    %3963 = vmatprep.subr.mxu0 0.0
    %3964 = vmatpush2.msra.mxu0 0.0
    %3965 = vmatprep.subr.mxu0 0.0
    %3966 = vmatpush2.msra.mxu0 0.0
    %3967 = vmatprep.subr.mxu0 0.0
    %3968 = vmatpush2.msra.mxu0 0.0
    %3969 = vmatprep.subr.mxu0 0.0
    %3970 = vmatpush2.msra.mxu0 0.0
    %3971 = vmatprep.subr.mxu0 0.0
    %3972 = vmatpush2.msra.mxu0 0.0
    %3973 = vmatprep.subr.mxu0 0.0
    %3974 = vmatpush2.msra.mxu0 0.0
    %3975 = vmatprep.subr.mxu0 0.0
    %3976 = vmatpush2.msra.mxu0 0.0
    %3977 = vmatprep.subr.mxu0 0.0
    %3978 = vmatpush2.msra.mxu0 0.0
    %3979 = vmatprep.subr.mxu0 0.0
    %3980 = vmatpush2.msra.mxu0 0.0
    %3981 = vmatprep.subr.mxu0 0.0
    %3982 = vmatpush2.msra.mxu0 0.0
    %3983 = vmatprep.subr.mxu0 0.0
    %3984 = vmatpush2.msra.mxu0 0.0
    %3985 = vmatprep.subr.mxu0 0.0
    %3986 = vmatpush2.msra.mxu0 0.0
    %3987 = vmatprep.subr.mxu0 0.0
    %3988 = vmatpush2.msra.mxu0 0.0
    %3989 = vmatprep.subr.mxu0 0.0
    %3990 = vmatpush2.msra.mxu0 0.0
    %3991 = vmatprep.mubr.f32.mxu0 0.0
    %3992 = vmatmul.mubr.f32.gmra.mxu0 %v3925
    %v3993 = vpop.f32.mrf.mxu0
    %v3994 = vadd.f32 %v3923, %v3993
    %v3995 = vpop.f32.mrf.mxu0
    %3996 = vdwg.mxu0
    %v3997 = vtanh.pop %v3994
    %vm3998 = vcmask 254976
    %3999 = vst.msk [vmem:[#allocation2] sm:$0x3] %vm3998, %v3997
    // Predicated region
    $region38: #{model_with_pooler.1} parent=1 // pred_check
      _
    $region39: #{model_with_pooler.1} parent=1 // pred_check_branch
      %4001 = sbr.rel (0) target = $region41
    $region40: #{model_with_pooler.1} parent=1 // pred_region
      %s4003 = ssub.s32 32, 32
      %4004 = vsyncadd [#allocation3], %s4003
      %s4006 = sshll.u32 [#allocation2], 4
      %s4007 = int_to_ptr.vmem [resolvable:$true] %s4006
      %4009 = dma.vmem_to_hbm [thread:$0]  %s4007, 32, %s9, [#allocation3]
    $region41: #{model_with_pooler.1} parent=1 // pred_fallthru
      _
    // Predicated region
    $region42: #{model_with_pooler.1} parent=1 // pred_check
      _
    $region43: #{model_with_pooler.1} parent=1 // pred_check_branch
      %4011 = sbr.rel (0) target = $region45
    $region44: #{model_with_pooler.1} parent=1 // pred_region
      %4012 = dma.done [#allocation3], 32
    $region45: #{model_with_pooler.1} parent=1 // pred_fallthru
      _
    %4013 = vsyncpa [#allocation3], 1

</llo_original>
